<compile_context>
chip_gen: v7x
topology: tpu7x:2x2x1
jax: 0.10.0
libtpu: 0.0.40
codegen_flags: <defaults>
</compile_context>

<pallas_src>
import functools

import jax
import jax.numpy as jnp
from jax.experimental import pallas as pl
from jax.experimental.pallas import tpu as pltpu


def _round_up(x, m):
    return (x + m - 1) // m * m


try:
    _VMEM_LIMIT = int(pltpu.get_tpu_info().vmem_capacity_bytes * 3 // 4)
except Exception:  # pragma: no cover - fall back to compiler default
    _VMEM_LIMIT = None


def _mosaic_params(sem):
    if _VMEM_LIMIT is None:
        return pltpu.CompilerParams(dimension_semantics=sem)
    return pltpu.CompilerParams(dimension_semantics=sem,
                                vmem_limit_bytes=_VMEM_LIMIT)


# ----------------------------------------------------------------------------
# Pallas kernels
# ----------------------------------------------------------------------------

def _conv_tap_kernel(x_ref, w_ref, b_ref, o_ref, *, taps, cin, q, group, act):
    """Implicit-GEMM conv for one sample / one 128-lane Cout block.

    x_ref: (1, Lx, Cin)      bf16 flattened zero-padded image (row-major, C last)
    w_ref: (T*Cin, 128)      bf16 per-tap weight rows (tap t -> rows [t*Cin,(t+1)*Cin))
    b_ref: (1, 128)          f32
    o_ref: (1, Q, 128)       bf16 (Q = Ho * Wp over-computed rows; cols cropped in XLA)

    out[r] = act( sum_t x[r + taps[t]] @ W[t] + b ), f32 accumulation on the MXU.
    Taps are packed `group` at a time along K (aligned lane concat) so the MXU
    contraction depth reaches 256 for 128-channel layers (v6e/v7x).
    """
    coutb = o_ref.shape[-1]
    acc = jnp.zeros((q, coutb), jnp.float32)
    t, nt = 0, len(taps)
    while t < nt:                                     # static unroll (<= 9 taps)
        g = min(group, nt - t)
        if g == 1:
            slab = x_ref[0, pl.ds(taps[t], q), :]
        else:
            slab = jnp.concatenate(
                [x_ref[0, pl.ds(taps[t + i], q), :] for i in range(g)], axis=-1)
        w = w_ref[pl.ds(t * cin, g * cin), :]
        acc = acc + jnp.dot(slab, w, preferred_element_type=jnp.float32)
        t += g
    y = acc + b_ref[...]
    if act == "relu":
        y = jnp.maximum(y, 0.0)
    elif act == "lrelu":
        y = jnp.where(y > 0, y, 0.2 * y)
    elif act == "tanh":
        y = jnp.tanh(y)
    o_ref[0] = y.astype(o_ref.dtype)


def _linear_kernel(a_ref, w_ref, b_ref, o_ref, *, act):
    y = jnp.dot(a_ref[...], w_ref[...], preferred_element_type=jnp.float32)
    y = y + b_ref[...]
    if act == "relu":
        y = jnp.maximum(y, 0.0)
    elif act == "lrelu":
        y = jnp.where(y > 0, y, 0.2 * y)
    o_ref[...] = y.astype(o_ref.dtype)


def _spade_in_kernel(x_ref, gb_ref, o_ref, *, c, hw_inv, slope, eps):
    """Fused per-sample InstanceNorm + SPADE modulation + leaky-ReLU.

    x_ref : (1, HW, C)   bf16
    gb_ref: (1, HW, GBP) bf16 -- gamma in lanes [0,C), beta in lanes [C,2C)
    Single-pass (sum, sumsq) stats in f32; biased var + eps as in InstanceNorm2d.
    """
    x = x_ref[0].astype(jnp.float32)
    s = jnp.sum(x, axis=0, keepdims=True)
    ss = jnp.sum(x * x, axis=0, keepdims=True)
    mean = s * hw_inv
    var = ss * hw_inv - mean * mean
    xn = (x - mean) * jax.lax.rsqrt(var + eps)
    gb = gb_ref[0].astype(jnp.float32)
    gamma = gb[:, :c]                 # unaligned lane slice for C<128 (accepted)
    beta = gb[:, c:2 * c]
    y = xn * (1.0 + gamma) + beta
    if slope != 1.0:
        y = jnp.where(y > 0, y, slope * y)
    o_ref[0] = y.astype(o_ref.dtype)


def _in_lrelu_kernel(x_ref, o_ref, *, hw_inv, slope, eps):
    """Plain per-sample InstanceNorm + leaky-ReLU (encoder path), single-pass stats."""
    x = x_ref[0].astype(jnp.float32)
    s = jnp.sum(x, axis=0, keepdims=True)
    ss = jnp.sum(x * x, axis=0, keepdims=True)
    mean = s * hw_inv
    var = ss * hw_inv - mean * mean
    xn = (x - mean) * jax.lax.rsqrt(var + eps)
    o_ref[0] = jnp.where(xn > 0, xn, slope * xn).astype(o_ref.dtype)


# ----------------------------------------------------------------------------
# Wrappers (pallas_call plumbing)
# ----------------------------------------------------------------------------

def pad_flatten(x, pad):
    """NHWC -> flat zero-padded (N, (H+2p+1)*(W+2p), C) bf16 slab + dims."""
    N, H, W, C = x.shape
    Wp = W + 2 * pad
    xp = jnp.pad(x, ((0, 0), (pad, pad + 1), (pad, pad), (0, 0)))
    return xp.reshape(N, (H + 2 * pad + 1) * Wp, C), (H, W, pad)


def conv2d_flat(xflat, dims, p, act=None, out_dtype=jnp.bfloat16, return_padded=False):
    N, Lx, Cin = xflat.shape
    H, W, pad = dims
    kh, kw, cout = p["kh"], p["kw"], p["cout"]
    assert Cin == p["cin"], (Cin, p["cin"])
    coutp = p["w"].shape[-1]

    Wp = W + 2 * pad
    Ho1 = H + 2 * pad - kh + 1
    Wo1 = W + 2 * pad - kw + 1
    Q = Ho1 * Wp
    taps = tuple(i * Wp + j for i in range(kh) for j in range(kw))
    group = 2 if (Cin % 128 == 0 and Cin <= 128) else 1
    ktot = kh * kw * Cin
    ncb = coutp // 128

    y = pl.pallas_call(
        functools.partial(_conv_tap_kernel, taps=taps, cin=Cin, q=Q,
                          group=group, act=act),
        out_shape=jax.ShapeDtypeStruct((N, Q, coutp), out_dtype),
        grid=(N, ncb),
        in_specs=[
            pl.BlockSpec((1, Lx, Cin), lambda n, j: (n, 0, 0)),
            pl.BlockSpec((ktot, 128), lambda n, j: (0, j)),
            pl.BlockSpec((1, 128), lambda n, j: (0, j)),
        ],
        out_specs=pl.BlockSpec((1, Q, 128), lambda n, j: (n, 0, j)),
        compiler_params=_mosaic_params(("parallel", "parallel")),
    )(xflat, p["w"], p["b"])

    y = y.reshape(N, Ho1, Wp, coutp)
    if return_padded:
        return y[:, :, :Wo1, :]          # keep lane padding (compact gamma|beta)
    return y[:, :, :Wo1, :cout]


def conv2d(x, p, pad=1, act=None, out_dtype=jnp.bfloat16, return_padded=False):
    if x.dtype != jnp.bfloat16:
        x = x.astype(jnp.bfloat16)
    xflat, dims = pad_flatten(x, pad)
    return conv2d_flat(xflat, dims, p, act=act, out_dtype=out_dtype,
                       return_padded=return_padded)


def linear(x, p, act=None, out_dtype=jnp.bfloat16):
    B, K = x.shape
    NP = p["w"].shape[1]
    nout = p["nout"]
    y = pl.pallas_call(
        functools.partial(_linear_kernel, act=act),
        out_shape=jax.ShapeDtypeStruct((B, NP), out_dtype),
        grid=(1,),
        in_specs=[
            pl.BlockSpec((B, K), lambda i: (0, 0)),
            pl.BlockSpec((K, NP), lambda i: (0, 0)),
            pl.BlockSpec((1, NP), lambda i: (0, 0)),
        ],
        out_specs=pl.BlockSpec((B, NP), lambda i: (0, 0)),
        compiler_params=_mosaic_params(("arbitrary",)),
    )(x.astype(jnp.bfloat16), p["w"], p["b"])
    return y if nout == NP else y[:, :nout]


def spade_instance_norm(x, gb, slope, eps=1e-5):
    """x: (N,H,W,C) bf16; gb: (N,H,W,GBP) bf16 fused gamma|beta (compactly padded)."""
    N, H, W, C = x.shape
    HW = H * W
    GBP = gb.shape[-1]
    out = pl.pallas_call(
        functools.partial(_spade_in_kernel, c=C, hw_inv=1.0 / HW,
                          slope=slope, eps=eps),
        out_shape=jax.ShapeDtypeStruct((N, HW, C), jnp.bfloat16),
        grid=(N,),
        in_specs=[
            pl.BlockSpec((1, HW, C), lambda i: (i, 0, 0)),
            pl.BlockSpec((1, HW, GBP), lambda i: (i, 0, 0)),
        ],
        out_specs=pl.BlockSpec((1, HW, C), lambda i: (i, 0, 0)),
        compiler_params=_mosaic_params(("parallel",)),
    )(x.reshape(N, HW, C), gb.reshape(N, HW, GBP))
    return out.reshape(N, H, W, C)


def instance_norm_lrelu(x, slope=0.2, eps=1e-5):
    N, H, W, C = x.shape
    HW = H * W
    out = pl.pallas_call(
        functools.partial(_in_lrelu_kernel, hw_inv=1.0 / HW, slope=slope, eps=eps),
        out_shape=jax.ShapeDtypeStruct((N, HW, C), jnp.bfloat16),
        grid=(N,),
        in_specs=[pl.BlockSpec((1, HW, C), lambda i: (i, 0, 0))],
        out_specs=pl.BlockSpec((1, HW, C), lambda i: (i, 0, 0)),
        compiler_params=_mosaic_params(("parallel",)),
    )(x.reshape(N, HW, C))
    return out.reshape(N, H, W, C)


def space_to_depth2(x):
    """(N,H,W,C) -> (N,H/2,W/2,4C), sub-pixel order (row parity, col parity, c)."""
    N, H, W, C = x.shape
    assert H % 2 == 0 and W % 2 == 0
    x = x.reshape(N, H // 2, 2, W // 2, 2, C)
    return x.transpose(0, 1, 3, 2, 4, 5).reshape(N, H // 2, W // 2, 4 * C)


def upsample2_nearest(x):
    return jnp.repeat(jnp.repeat(x, 2, axis=1), 2, axis=2)


def leaky_relu(x, slope=0.2):
    return jnp.where(x > 0, x, slope * x)


# ----------------------------------------------------------------------------
# Deterministic parameter construction (synthetic weights, pre-packed)
# ----------------------------------------------------------------------------

class KeyGen:
    def __init__(self, seed):
        self.key = jax.random.PRNGKey(seed)

    def __call__(self):
        self.key, k = jax.random.split(self.key)
        return k


def _pack_conv(w, b, kh, kw, cin, cout):
    coutp = _round_up(cout, 128)
    wq = jnp.pad(w, ((0, 0), (0, 0), (0, 0), (0, coutp - cout)))
    wq = wq.reshape(kh * kw * cin, coutp).astype(jnp.bfloat16)
    bq = jnp.pad(b, (0, coutp - cout)).reshape(1, coutp).astype(jnp.float32)
    return {"w": wq, "b": bq, "kh": kh, "kw": kw, "cin": cin, "cout": cout}


def prep_conv(kg, kh, kw, cin, cout, gain=0.02):
    w = gain * jax.random.normal(kg(), (kh, kw, cin, cout), jnp.float32)
    b = jnp.zeros((cout,), jnp.float32)
    return _pack_conv(w, b, kh, kw, cin, cout)


def prep_conv_s2d(kg, cin, cout, gain=0.02):
    """3x3 stride-2 pad-1 conv repacked as a 2x2 stride-1 conv on the 2x2
    space-to-depth of the (pre-padded) input -- same math, no over-compute."""
    w3 = gain * jax.random.normal(kg(), (3, 3, cin, cout), jnp.float32)
    w2 = jnp.zeros((2, 2, 4 * cin, cout), jnp.float32)
    for a in range(3):
        pa, ua = (0, a) if a < 2 else (1, 0)
        for bb in range(3):
            pb, vb = (0, bb) if bb < 2 else (1, 0)
            off = (ua * 2 + vb) * cin
            w2 = w2.at[pa, pb, off:off + cin, :].set(w3[a, bb])
    bias = jnp.zeros((cout,), jnp.float32)
    return _pack_conv(w2, bias, 2, 2, 4 * cin, cout)


def _pack_linear(w, b):
    cin, cout = w.shape
    coutp = _round_up(cout, 128)
    wq = jnp.pad(w, ((0, 0), (0, coutp - cout))).astype(jnp.bfloat16)
    bq = jnp.pad(b, (0, coutp - cout)).reshape(1, coutp).astype(jnp.float32)
    return {"w": wq, "b": bq, "nout": cout}


def prep_linear(kg, cin, cout, gain=0.02):
    w = gain * jax.random.normal(kg(), (cin, cout), jnp.float32)
    b = jnp.zeros((cout,), jnp.float32)
    return _pack_linear(w, b)


def prep_spade(kg, norm_nc, label_nc, nhidden, gain=0.02):
    """SPADE params: gamma/beta convs fused into one compactly-packed matmul."""
    shared = prep_conv(kg, 3, 3, label_nc, nhidden, gain)
    wg = gain * jax.random.normal(kg(), (3, 3, nhidden, norm_nc), jnp.float32)
    wb = gain * jax.random.normal(kg(), (3, 3, nhidden, norm_nc), jnp.float32)
    w_gb = jnp.concatenate([wg, wb], axis=-1)          # gamma in [0,C), beta in [C,2C)
    b_gb = jnp.zeros((2 * norm_nc,), jnp.float32)
    gammabeta = _pack_conv(w_gb, b_gb, 3, 3, nhidden, 2 * norm_nc)
    return {"shared": shared, "gammabeta": gammabeta, "norm_nc": norm_nc}


def resblock_params(kg, fin, fout, label_nc, nhidden):
    fmid = min(fin, fout)
    p = {
        "spade0": prep_spade(kg, fin, label_nc, nhidden),
        "conv0": prep_conv(kg, 3, 3, fin, fmid),
        "spade1": prep_spade(kg, fmid, label_nc, nhidden),
        "conv1": prep_conv(kg, 3, 3, fmid, fout),
    }
    if fin != fout:
        p["spade_s"] = prep_spade(kg, fin, label_nc, nhidden)
        p["conv_s"] = prep_conv(kg, 1, 1, fin, fout)   # shortcut (bias kept at 0)
    return p


def make_encoder_params(kg, in_ch, ndf, z_dim, img_size, gain=0.02):
    # TODO(synk): full-depth ConvEncoder (6 layers, 256x256 input) of the reference.
    chans = [in_ch, ndf, 2 * ndf, 4 * ndf]
    convs = [prep_conv_s2d(kg, chans[i], chans[i + 1], gain) for i in range(3)]
    s = img_size // 8
    feat = chans[-1] * s * s
    wm = gain * jax.random.normal(kg(), (feat, z_dim), jnp.float32)
    wv = gain * jax.random.normal(kg(), (feat, z_dim), jnp.float32)
    fc = _pack_linear(jnp.concatenate([wm, wv], axis=1),
                      jnp.zeros((2 * z_dim,), jnp.float32))
    return {"convs": convs, "fc_muvar": fc, "z_dim": z_dim}


def make_generator_params(kg, label_nc, z_dim, nf, sh, sw, nhidden):
    c_head = 16 * nf
    return {
        "sh": sh, "sw": sw, "c_head": c_head,
        "fc": prep_linear(kg, z_dim, c_head * sh * sw),
        "head": resblock_params(kg, c_head, c_head, label_nc, nhidden),
        "up0": resblock_params(kg, c_head, c_head // 2, label_nc, nhidden),
        "up1": resblock_params(kg, c_head // 2, c_head // 4, label_nc, nhidden),
        "conv_img": prep_conv(kg, 3, 3, c_head // 4, 3),
    }


# ----------------------------------------------------------------------------
# SPADE building blocks / networks (forward)
# ----------------------------------------------------------------------------

def spade(x, segflat, segdims, p, slope):
    actv = conv2d_flat(segflat, segdims, p["shared"], act="relu")
    gb = conv2d(actv, p["gammabeta"], pad=1, return_padded=True)   # compact gamma|beta, bf16
    return spade_instance_norm(x, gb, slope=slope)


def spade_resblock(x, seg, p):
    # Downsample + pad/flatten the segmentation map once per resolution and
    # reuse it for all SPADE modules of this block.
    f = seg.shape[1] // x.shape[1]
    seg_ds = seg[:, ::f, ::f, :] if f > 1 else seg
    segflat, segdims = pad_flatten(seg_ds.astype(jnp.bfloat16), 1)

    dx = conv2d(spade(x, segflat, segdims, p["spade0"], 0.2), p["conv0"], pad=1)
    dx = conv2d(spade(dx, segflat, segdims, p["spade1"], 0.2), p["conv1"], pad=1)
    if "conv_s" in p:
        xs = conv2d(spade(x, segflat, segdims, p["spade_s"], 1.0), p["conv_s"], pad=0)
    else:
        xs = x
    return xs + dx


def encode(x_nhwc, p):
    h = x_nhwc.astype(jnp.bfloat16)
    for cp in p["convs"]:
        hpad = jnp.pad(h, ((0, 0), (1, 1), (1, 1), (0, 0)))   # pad before s2d
        h = conv2d(space_to_depth2(hpad), cp, pad=0)           # exact 3x3/s2 conv
        h = instance_norm_lrelu(h, slope=0.2)
    # NCHW-order flatten (matches the PyTorch Linear head layout).
    flat = jnp.transpose(h, (0, 3, 1, 2)).reshape(h.shape[0], -1)
    mv = linear(flat, p["fc_muvar"], out_dtype=jnp.float32)    # fused mu|logvar head
    z = p["z_dim"]
    return mv[:, :z], mv[:, z:2 * z]


def generate(seg_nhwc, z, p):
    seg = seg_nhwc.astype(jnp.bfloat16)
    n = seg.shape[0]
    sh, sw, c_head = p["sh"], p["sw"], p["c_head"]
    h = linear(z, p["fc"])                                     # bf16
    h = h.reshape(n, c_head, sh, sw).transpose(0, 2, 3, 1)     # PyTorch view order
    h = spade_resblock(h, seg, p["head"])                      # 4x4
    h = upsample2_nearest(h)                                   # 8x8 (bf16)
    h = spade_resblock(h, seg, p["up0"])
    h = upsample2_nearest(h)                                   # 16x16
    h = spade_resblock(h, seg, p["up1"])
    h = leaky_relu(h, 0.2)
    fake = conv2d(h, p["conv_img"], pad=1, act="tanh")         # tanh fused in epilogue
    return fake.astype(jnp.float32)


# ----------------------------------------------------------------------------
# GauganModel (forward only, inference / encode_only modes)
# ----------------------------------------------------------------------------

class GauganModelPallas:
    def __init__(self, opt, seed=42):
        self.opt = opt
        kg = KeyGen(seed)
        self.enc = make_encoder_params(kg, in_ch=opt["image_nc"], ndf=opt["ndf"],
                                       z_dim=opt["z_dim"], img_size=opt["img_size"])
        self.gen = make_generator_params(kg, label_nc=opt["label_nc"], z_dim=opt["z_dim"],
                                         nf=opt["ngf"], sh=opt["sh"], sw=opt["sw"],
                                         nhidden=opt["spade_hidden"])
        self._eps_key = jax.random.PRNGKey(seed + 1)
        self._noise_step = 0
        enc_p, gen_p = self.enc, self.gen
        self._encode = jax.jit(lambda img: encode(img, enc_p))
        self._generate = jax.jit(lambda seg, z: generate(seg, z, gen_p))

    def _next_key(self):
        self._noise_step += 1
        return jax.random.fold_in(self._eps_key, self._noise_step)

    def reparameterize(self, mu, logvar):
        std = jnp.exp(0.5 * logvar)
        eps = jax.random.normal(self._next_key(), std.shape, std.dtype)
        return eps * std + mu

    def forward(self, data, mode, z=None, style_image=None):
        label = jnp.transpose(data["label"].astype(jnp.float32), (0, 2, 3, 1))  # NCHW->NHWC
        image = jnp.transpose(data["image"].astype(jnp.float32), (0, 2, 3, 1))

        if mode == "encode_only":
            mu, logvar = self._encode(image)
            return mu, logvar

        if mode == "inference":
            if self.opt["infer_byz"]:
                if z is None:
                    z = jax.random.normal(self._next_key(),
                                          (label.shape[0], self.opt["z_dim"]), jnp.float32)
            else:
                src = image if style_image is None else jnp.transpose(
                    style_image.astype(jnp.float32), (0, 2, 3, 1))
                mu, logvar = self._encode(src)
                z = self.reparameterize(mu, logvar)
            fake = self._generate(label, z)
            return jnp.transpose(fake, (0, 3, 1, 2))  # back to NCHW

        # TODO(synk): 'generator' / 'discriminator' training modes (netD, GAN losses).
        raise ValueError("|mode| is invalid or not supported in this Pallas port")


# ----------------------------------------------------------------------------
# Demo
# ----------------------------------------------------------------------------

if __name__ == "__main__":
    opt = dict(
        use_vae=True, infer_byz=False, is_train=False,
        label_nc=4, image_nc=3, img_size=16,
        z_dim=32, ndf=16, ngf=8, sh=4, sw=4, spade_hidden=32,
    )

    key = jax.random.PRNGKey(0)
    k_lbl, k_img = jax.random.split(key)

    batch, H, W = 2, opt["img_size"], opt["img_size"]
    # One-hot semantic map (NCHW) and a real image (NCHW), PyTorch conventions.
    cls = jax.random.randint(k_lbl, (batch, H, W), 0, opt["label_nc"])
    label = jnp.transpose(jax.nn.one_hot(cls, opt["label_nc"], dtype=jnp.float32),
                          (0, 3, 1, 2))                                            # (2, 4, 16, 16)
    image = jax.random.normal(k_img, (batch, opt["image_nc"], H, W), jnp.float32)  # (2, 3, 16, 16)

    model = GauganModelPallas(opt, seed=42)
    data = {"label": label, "image": image}

    fake = model.forward(data, mode="inference")
    mu, logvar = model.forward(data, mode="encode_only")

    jax.block_until_ready(fake)
    jax.block_until_ready(mu)
    jax.block_until_ready(logvar)

    assert fake.shape == (batch, 3, H, W) and fake.dtype == jnp.float32
    assert mu.shape == (batch, opt["z_dim"]) and logvar.shape == (batch, opt["z_dim"])
    assert bool(jnp.all(jnp.isfinite(fake))) and bool(jnp.all(jnp.isfinite(mu)))

    print("KERNEL_OK")
</pallas_src>

<mosaic_0001>
module attributes {stable_mosaic.version = 11 : i64} {
  func.func @_conv_tap_kernel(%arg0: i32, %arg1: i32, %arg2: memref<1x90x12xbf16, #tpu.memory_space<vmem>>, %arg3: memref<48x128xbf16, #tpu.memory_space<vmem>>, %arg4: memref<1x128xf32, #tpu.memory_space<vmem>>, %arg5: memref<1x72x128xbf16, #tpu.memory_space<vmem>>) attributes {dimension_semantics = [#tpu.dimension_semantics<parallel>, #tpu.dimension_semantics<parallel>], iteration_bounds = array<i64: 2, 1>, scalar_prefetch = 0 : i64, scratch_operands = 0 : i64, tpu.core_type = #tpu.core_type<tc>, window_params = [{transform_indices = @transform_0, window_bounds = array<i64: 1, 90, 12>}, {transform_indices = @transform_1, window_bounds = array<i64: 48, 128>}, {transform_indices = @transform_2, window_bounds = array<i64: 1, 128>}, {transform_indices = @transform_3, window_bounds = array<i64: 1, 72, 128>}]} {
    %cst = arith.constant 0.000000e+00 : f32
    %0 = vector.broadcast %cst : f32 to vector<72x128xf32>
    %c0 = arith.constant 0 : index
    %c0_0 = arith.constant 0 : index
    %c0_1 = arith.constant 0 : index
    %1 = vector.load %arg2[%c0, %c0_0, %c0_1] : memref<1x90x12xbf16, #tpu.memory_space<vmem>>, vector<1x72x12xbf16>
    %2 = vector.shape_cast %1 : vector<1x72x12xbf16> to vector<72x12xbf16>
    %c0_2 = arith.constant 0 : index
    %c0_3 = arith.constant 0 : index
    %3 = vector.load %arg3[%c0_2, %c0_3] : memref<48x128xbf16, #tpu.memory_space<vmem>>, vector<12x128xbf16>
    %cst_4 = arith.constant dense<0.000000e+00> : vector<72x128xf32>
    %4 = tpu.matmul %2, %3, %cst_4 {dimension_numbers = #tpu.dot_dimension_numbers<[1], [0], [0], [1], [0, 0, 1, 1], [], []>} : vector<72x12xbf16>, vector<12x128xbf16>, vector<72x128xf32> -> vector<72x128xf32>
    %5 = arith.addf %0, %4 : vector<72x128xf32>
    %c0_5 = arith.constant 0 : index
    %c1 = arith.constant 1 : index
    %c0_6 = arith.constant 0 : index
    %6 = vector.load %arg2[%c0_5, %c1, %c0_6] : memref<1x90x12xbf16, #tpu.memory_space<vmem>>, vector<1x72x12xbf16>
    %7 = vector.shape_cast %6 : vector<1x72x12xbf16> to vector<72x12xbf16>
    %c12 = arith.constant 12 : index
    %c0_7 = arith.constant 0 : index
    %8 = vector.load %arg3[%c12, %c0_7] : memref<48x128xbf16, #tpu.memory_space<vmem>>, vector<12x128xbf16>
    %cst_8 = arith.constant dense<0.000000e+00> : vector<72x128xf32>
    %9 = tpu.matmul %7, %8, %cst_8 {dimension_numbers = #tpu.dot_dimension_numbers<[1], [0], [0], [1], [0, 0, 1, 1], [], []>} : vector<72x12xbf16>, vector<12x128xbf16>, vector<72x128xf32> -> vector<72x128xf32>
    %10 = arith.addf %5, %9 : vector<72x128xf32>
    %c0_9 = arith.constant 0 : index
    %c9 = arith.constant 9 : index
    %c0_10 = arith.constant 0 : index
    %11 = vector.load %arg2[%c0_9, %c9, %c0_10] : memref<1x90x12xbf16, #tpu.memory_space<vmem>>, vector<1x72x12xbf16>
    %12 = vector.shape_cast %11 : vector<1x72x12xbf16> to vector<72x12xbf16>
    %c24 = arith.constant 24 : index
    %c0_11 = arith.constant 0 : index
    %13 = vector.load %arg3[%c24, %c0_11] : memref<48x128xbf16, #tpu.memory_space<vmem>>, vector<12x128xbf16>
    %cst_12 = arith.constant dense<0.000000e+00> : vector<72x128xf32>
    %14 = tpu.matmul %12, %13, %cst_12 {dimension_numbers = #tpu.dot_dimension_numbers<[1], [0], [0], [1], [0, 0, 1, 1], [], []>} : vector<72x12xbf16>, vector<12x128xbf16>, vector<72x128xf32> -> vector<72x128xf32>
    %15 = arith.addf %10, %14 : vector<72x128xf32>
    %c0_13 = arith.constant 0 : index
    %c10 = arith.constant 10 : index
    %c0_14 = arith.constant 0 : index
    %16 = vector.load %arg2[%c0_13, %c10, %c0_14] : memref<1x90x12xbf16, #tpu.memory_space<vmem>>, vector<1x72x12xbf16>
    %17 = vector.shape_cast %16 : vector<1x72x12xbf16> to vector<72x12xbf16>
    %c36 = arith.constant 36 : index
    %c0_15 = arith.constant 0 : index
    %18 = vector.load %arg3[%c36, %c0_15] : memref<48x128xbf16, #tpu.memory_space<vmem>>, vector<12x128xbf16>
    %cst_16 = arith.constant dense<0.000000e+00> : vector<72x128xf32>
    %19 = tpu.matmul %17, %18, %cst_16 {dimension_numbers = #tpu.dot_dimension_numbers<[1], [0], [0], [1], [0, 0, 1, 1], [], []>} : vector<72x12xbf16>, vector<12x128xbf16>, vector<72x128xf32> -> vector<72x128xf32>
    %20 = arith.addf %15, %19 : vector<72x128xf32>
    %c0_17 = arith.constant 0 : index
    %c0_18 = arith.constant 0 : index
    %21 = vector.load %arg4[%c0_17, %c0_18] : memref<1x128xf32, #tpu.memory_space<vmem>>, vector<1x128xf32>
    %22 = vector.broadcast %21 : vector<1x128xf32> to vector<72x128xf32>
    %23 = arith.addf %20, %22 : vector<72x128xf32>
    %24 = arith.truncf %23 : vector<72x128xf32> to vector<72x128xbf16>
    %c0_19 = arith.constant 0 : index
    %c0_20 = arith.constant 0 : index
    %c0_21 = arith.constant 0 : index
    %25 = vector.load %arg5[%c0_19, %c0_20, %c0_21] : memref<1x72x128xbf16, #tpu.memory_space<vmem>>, vector<1x72x128xbf16>
    %26 = vector.shape_cast %25 : vector<1x72x128xbf16> to vector<72x128xbf16>
    %27 = vector.shape_cast %24 : vector<72x128xbf16> to vector<1x72x128xbf16>
    tpu.vector_store %arg5[%c0_19, %c0_20, %c0_21], %27 {strides = array<i32>} : memref<1x72x128xbf16, #tpu.memory_space<vmem>>, vector<1x72x128xbf16>,
    return
  }
  func.func @transform_0(%arg0: i32, %arg1: i32) -> (i32, i32, i32) {
    %c0_i32 = arith.constant 0 : i32
    %c0_i32_0 = arith.constant 0 : i32
    %c0_i32_1 = arith.constant 0 : i32
    return %arg0, %c0_i32, %c0_i32_0 : i32, i32, i32
  }
  func.func @transform_1(%arg0: i32, %arg1: i32) -> (i32, i32) {
    %c0_i32 = arith.constant 0 : i32
    %c0_i32_0 = arith.constant 0 : i32
    return %c0_i32, %arg1 : i32, i32
  }
  func.func @transform_2(%arg0: i32, %arg1: i32) -> (i32, i32) {
    %c0_i32 = arith.constant 0 : i32
    %c0_i32_0 = arith.constant 0 : i32
    return %c0_i32, %arg1 : i32, i32
  }
  func.func @transform_3(%arg0: i32, %arg1: i32) -> (i32, i32, i32) {
    %c0_i32 = arith.constant 0 : i32
    %c0_i32_0 = arith.constant 0 : i32
    return %arg0, %c0_i32, %arg1 : i32, i32, i32
  }
}

module attributes {stable_mosaic.version = 11 : i64} {
  func.func @_in_lrelu_kernel(%arg0: i32, %arg1: memref<1x64x16xbf16, #tpu.memory_space<vmem>>, %arg2: memref<1x64x16xbf16, #tpu.memory_space<vmem>>) attributes {dimension_semantics = [#tpu.dimension_semantics<parallel>], iteration_bounds = array<i64: 2>, scalar_prefetch = 0 : i64, scratch_operands = 0 : i64, tpu.core_type = #tpu.core_type<tc>, window_params = [{transform_indices = @transform_0, window_bounds = array<i64: 1, 64, 16>}, {transform_indices = @transform_1, window_bounds = array<i64: 1, 64, 16>}]} {
    %c0 = arith.constant 0 : index
    %c0_0 = arith.constant 0 : index
    %c0_1 = arith.constant 0 : index
    %0 = vector.load %arg1[%c0, %c0_0, %c0_1] : memref<1x64x16xbf16, #tpu.memory_space<vmem>>, vector<1x64x16xbf16>
    %1 = vector.shape_cast %0 : vector<1x64x16xbf16> to vector<64x16xbf16>
    %2 = arith.extf %1 : vector<64x16xbf16> to vector<64x16xf32>
    %cst = arith.constant dense<0.000000e+00> : vector<16xf32>
    %3 = vector.multi_reduction <add>, %2, %cst [0] : vector<64x16xf32> to vector<16xf32>
    %4 = vector.shape_cast %3 : vector<16xf32> to vector<1x16xf32>
    %5 = arith.mulf %2, %2 : vector<64x16xf32>
    %cst_2 = arith.constant dense<0.000000e+00> : vector<16xf32>
    %6 = vector.multi_reduction <add>, %5, %cst_2 [0] : vector<64x16xf32> to vector<16xf32>
    %7 = vector.shape_cast %6 : vector<16xf32> to vector<1x16xf32>
    %cst_3 = arith.constant 1.562500e-02 : f32
    %8 = vector.broadcast %cst_3 : f32 to vector<1x16xf32>
    %9 = arith.mulf %4, %8 : vector<1x16xf32>
    %cst_4 = arith.constant 1.562500e-02 : f32
    %10 = vector.broadcast %cst_4 : f32 to vector<1x16xf32>
    %11 = arith.mulf %7, %10 : vector<1x16xf32>
    %12 = arith.mulf %9, %9 : vector<1x16xf32>
    %13 = arith.subf %11, %12 : vector<1x16xf32>
    %14 = vector.broadcast %9 : vector<1x16xf32> to vector<64x16xf32>
    %15 = arith.subf %2, %14 : vector<64x16xf32>
    %cst_5 = arith.constant 9.99999974E-6 : f32
    %16 = vector.broadcast %cst_5 : f32 to vector<1x16xf32>
    %17 = arith.addf %13, %16 : vector<1x16xf32>
    %18 = math.rsqrt %17 : vector<1x16xf32>
    %19 = vector.broadcast %18 : vector<1x16xf32> to vector<64x16xf32>
    %20 = arith.mulf %15, %19 : vector<64x16xf32>
    %cst_6 = arith.constant 0.000000e+00 : f32
    %21 = vector.broadcast %cst_6 : f32 to vector<64x16xf32>
    %22 = arith.cmpf ogt, %20, %21 : vector<64x16xf32>
    %cst_7 = arith.constant 2.000000e-01 : f32
    %23 = vector.broadcast %cst_7 : f32 to vector<64x16xf32>
    %24 = arith.mulf %23, %20 : vector<64x16xf32>
    %25 = arith.select %22, %20, %24 : vector<64x16xi1>, vector<64x16xf32>
    %26 = arith.truncf %25 : vector<64x16xf32> to vector<64x16xbf16>
    %c0_8 = arith.constant 0 : index
    %c0_9 = arith.constant 0 : index
    %c0_10 = arith.constant 0 : index
    %27 = vector.load %arg2[%c0_8, %c0_9, %c0_10] : memref<1x64x16xbf16, #tpu.memory_space<vmem>>, vector<1x64x16xbf16>
    %28 = vector.shape_cast %27 : vector<1x64x16xbf16> to vector<64x16xbf16>
    %29 = vector.shape_cast %26 : vector<64x16xbf16> to vector<1x64x16xbf16>
    tpu.vector_store %arg2[%c0_8, %c0_9, %c0_10], %29 {strides = array<i32>} : memref<1x64x16xbf16, #tpu.memory_space<vmem>>, vector<1x64x16xbf16>,
    return
  }
  func.func @transform_0(%arg0: i32) -> (i32, i32, i32) {
    %c0_i32 = arith.constant 0 : i32
    %c0_i32_0 = arith.constant 0 : i32
    %c0_i32_1 = arith.constant 0 : i32
    return %arg0, %c0_i32, %c0_i32_0 : i32, i32, i32
  }
  func.func @transform_1(%arg0: i32) -> (i32, i32, i32) {
    %c0_i32 = arith.constant 0 : i32
    %c0_i32_0 = arith.constant 0 : i32
    %c0_i32_1 = arith.constant 0 : i32
    return %arg0, %c0_i32, %c0_i32_0 : i32, i32, i32
  }
}

module attributes {stable_mosaic.version = 11 : i64} {
  func.func @_conv_tap_kernel(%arg0: i32, %arg1: i32, %arg2: memref<1x30x64xbf16, #tpu.memory_space<vmem>>, %arg3: memref<256x128xbf16, #tpu.memory_space<vmem>>, %arg4: memref<1x128xf32, #tpu.memory_space<vmem>>, %arg5: memref<1x20x128xbf16, #tpu.memory_space<vmem>>) attributes {dimension_semantics = [#tpu.dimension_semantics<parallel>, #tpu.dimension_semantics<parallel>], iteration_bounds = array<i64: 2, 1>, scalar_prefetch = 0 : i64, scratch_operands = 0 : i64, tpu.core_type = #tpu.core_type<tc>, window_params = [{transform_indices = @transform_0, window_bounds = array<i64: 1, 30, 64>}, {transform_indices = @transform_1, window_bounds = array<i64: 256, 128>}, {transform_indices = @transform_2, window_bounds = array<i64: 1, 128>}, {transform_indices = @transform_3, window_bounds = array<i64: 1, 20, 128>}]} {
    %cst = arith.constant 0.000000e+00 : f32
    %0 = vector.broadcast %cst : f32 to vector<20x128xf32>
    %c0 = arith.constant 0 : index
    %c0_0 = arith.constant 0 : index
    %c0_1 = arith.constant 0 : index
    %1 = vector.load %arg2[%c0, %c0_0, %c0_1] : memref<1x30x64xbf16, #tpu.memory_space<vmem>>, vector<1x20x64xbf16>
    %2 = vector.shape_cast %1 : vector<1x20x64xbf16> to vector<20x64xbf16>
    %c0_2 = arith.constant 0 : index
    %c0_3 = arith.constant 0 : index
    %3 = vector.load %arg3[%c0_2, %c0_3] : memref<256x128xbf16, #tpu.memory_space<vmem>>, vector<64x128xbf16>
    %cst_4 = arith.constant dense<0.000000e+00> : vector<20x128xf32>
    %4 = tpu.matmul %2, %3, %cst_4 {dimension_numbers = #tpu.dot_dimension_numbers<[1], [0], [0], [1], [0, 0, 1, 1], [], []>} : vector<20x64xbf16>, vector<64x128xbf16>, vector<20x128xf32> -> vector<20x128xf32>
    %5 = arith.addf %0, %4 : vector<20x128xf32>
    %c0_5 = arith.constant 0 : index
    %c1 = arith.constant 1 : index
    %c0_6 = arith.constant 0 : index
    %6 = vector.load %arg2[%c0_5, %c1, %c0_6] : memref<1x30x64xbf16, #tpu.memory_space<vmem>>, vector<1x20x64xbf16>
    %7 = vector.shape_cast %6 : vector<1x20x64xbf16> to vector<20x64xbf16>
    %c64 = arith.constant 64 : index
    %c0_7 = arith.constant 0 : index
    %8 = vector.load %arg3[%c64, %c0_7] : memref<256x128xbf16, #tpu.memory_space<vmem>>, vector<64x128xbf16>
    %cst_8 = arith.constant dense<0.000000e+00> : vector<20x128xf32>
    %9 = tpu.matmul %7, %8, %cst_8 {dimension_numbers = #tpu.dot_dimension_numbers<[1], [0], [0], [1], [0, 0, 1, 1], [], []>} : vector<20x64xbf16>, vector<64x128xbf16>, vector<20x128xf32> -> vector<20x128xf32>
    %10 = arith.addf %5, %9 : vector<20x128xf32>
    %c0_9 = arith.constant 0 : index
    %c5 = arith.constant 5 : index
    %c0_10 = arith.constant 0 : index
    %11 = vector.load %arg2[%c0_9, %c5, %c0_10] : memref<1x30x64xbf16, #tpu.memory_space<vmem>>, vector<1x20x64xbf16>
    %12 = vector.shape_cast %11 : vector<1x20x64xbf16> to vector<20x64xbf16>
    %c128 = arith.constant 128 : index
    %c0_11 = arith.constant 0 : index
    %13 = vector.load %arg3[%c128, %c0_11] : memref<256x128xbf16, #tpu.memory_space<vmem>>, vector<64x128xbf16>
    %cst_12 = arith.constant dense<0.000000e+00> : vector<20x128xf32>
    %14 = tpu.matmul %12, %13, %cst_12 {dimension_numbers = #tpu.dot_dimension_numbers<[1], [0], [0], [1], [0, 0, 1, 1], [], []>} : vector<20x64xbf16>, vector<64x128xbf16>, vector<20x128xf32> -> vector<20x128xf32>
    %15 = arith.addf %10, %14 : vector<20x128xf32>
    %c0_13 = arith.constant 0 : index
    %c6 = arith.constant 6 : index
    %c0_14 = arith.constant 0 : index
    %16 = vector.load %arg2[%c0_13, %c6, %c0_14] : memref<1x30x64xbf16, #tpu.memory_space<vmem>>, vector<1x20x64xbf16>
    %17 = vector.shape_cast %16 : vector<1x20x64xbf16> to vector<20x64xbf16>
    %c192 = arith.constant 192 : index
    %c0_15 = arith.constant 0 : index
    %18 = vector.load %arg3[%c192, %c0_15] : memref<256x128xbf16, #tpu.memory_space<vmem>>, vector<64x128xbf16>
    %cst_16 = arith.constant dense<0.000000e+00> : vector<20x128xf32>
    %19 = tpu.matmul %17, %18, %cst_16 {dimension_numbers = #tpu.dot_dimension_numbers<[1], [0], [0], [1], [0, 0, 1, 1], [], []>} : vector<20x64xbf16>, vector<64x128xbf16>, vector<20x128xf32> -> vector<20x128xf32>
    %20 = arith.addf %15, %19 : vector<20x128xf32>
    %c0_17 = arith.constant 0 : index
    %c0_18 = arith.constant 0 : index
    %21 = vector.load %arg4[%c0_17, %c0_18] : memref<1x128xf32, #tpu.memory_space<vmem>>, vector<1x128xf32>
    %22 = vector.broadcast %21 : vector<1x128xf32> to vector<20x128xf32>
    %23 = arith.addf %20, %22 : vector<20x128xf32>
    %24 = arith.truncf %23 : vector<20x128xf32> to vector<20x128xbf16>
    %c0_19 = arith.constant 0 : index
    %c0_20 = arith.constant 0 : index
    %c0_21 = arith.constant 0 : index
    %25 = vector.load %arg5[%c0_19, %c0_20, %c0_21] : memref<1x20x128xbf16, #tpu.memory_space<vmem>>, vector<1x20x128xbf16>
    %26 = vector.shape_cast %25 : vector<1x20x128xbf16> to vector<20x128xbf16>
    %27 = vector.shape_cast %24 : vector<20x128xbf16> to vector<1x20x128xbf16>
    tpu.vector_store %arg5[%c0_19, %c0_20, %c0_21], %27 {strides = array<i32>} : memref<1x20x128xbf16, #tpu.memory_space<vmem>>, vector<1x20x128xbf16>,
    return
  }
  func.func @transform_0(%arg0: i32, %arg1: i32) -> (i32, i32, i32) {
    %c0_i32 = arith.constant 0 : i32
    %c0_i32_0 = arith.constant 0 : i32
    %c0_i32_1 = arith.constant 0 : i32
    return %arg0, %c0_i32, %c0_i32_0 : i32, i32, i32
  }
  func.func @transform_1(%arg0: i32, %arg1: i32) -> (i32, i32) {
    %c0_i32 = arith.constant 0 : i32
    %c0_i32_0 = arith.constant 0 : i32
    return %c0_i32, %arg1 : i32, i32
  }
  func.func @transform_2(%arg0: i32, %arg1: i32) -> (i32, i32) {
    %c0_i32 = arith.constant 0 : i32
    %c0_i32_0 = arith.constant 0 : i32
    return %c0_i32, %arg1 : i32, i32
  }
  func.func @transform_3(%arg0: i32, %arg1: i32) -> (i32, i32, i32) {
    %c0_i32 = arith.constant 0 : i32
    %c0_i32_0 = arith.constant 0 : i32
    return %arg0, %c0_i32, %arg1 : i32, i32, i32
  }
}

module attributes {stable_mosaic.version = 11 : i64} {
  func.func @_in_lrelu_kernel(%arg0: i32, %arg1: memref<1x16x32xbf16, #tpu.memory_space<vmem>>, %arg2: memref<1x16x32xbf16, #tpu.memory_space<vmem>>) attributes {dimension_semantics = [#tpu.dimension_semantics<parallel>], iteration_bounds = array<i64: 2>, scalar_prefetch = 0 : i64, scratch_operands = 0 : i64, tpu.core_type = #tpu.core_type<tc>, window_params = [{transform_indices = @transform_0, window_bounds = array<i64: 1, 16, 32>}, {transform_indices = @transform_1, window_bounds = array<i64: 1, 16, 32>}]} {
    %c0 = arith.constant 0 : index
    %c0_0 = arith.constant 0 : index
    %c0_1 = arith.constant 0 : index
    %0 = vector.load %arg1[%c0, %c0_0, %c0_1] : memref<1x16x32xbf16, #tpu.memory_space<vmem>>, vector<1x16x32xbf16>
    %1 = vector.shape_cast %0 : vector<1x16x32xbf16> to vector<16x32xbf16>
    %2 = arith.extf %1 : vector<16x32xbf16> to vector<16x32xf32>
    %cst = arith.constant dense<0.000000e+00> : vector<32xf32>
    %3 = vector.multi_reduction <add>, %2, %cst [0] : vector<16x32xf32> to vector<32xf32>
    %4 = vector.shape_cast %3 : vector<32xf32> to vector<1x32xf32>
    %5 = arith.mulf %2, %2 : vector<16x32xf32>
    %cst_2 = arith.constant dense<0.000000e+00> : vector<32xf32>
    %6 = vector.multi_reduction <add>, %5, %cst_2 [0] : vector<16x32xf32> to vector<32xf32>
    %7 = vector.shape_cast %6 : vector<32xf32> to vector<1x32xf32>
    %cst_3 = arith.constant 6.250000e-02 : f32
    %8 = vector.broadcast %cst_3 : f32 to vector<1x32xf32>
    %9 = arith.mulf %4, %8 : vector<1x32xf32>
    %cst_4 = arith.constant 6.250000e-02 : f32
    %10 = vector.broadcast %cst_4 : f32 to vector<1x32xf32>
    %11 = arith.mulf %7, %10 : vector<1x32xf32>
    %12 = arith.mulf %9, %9 : vector<1x32xf32>
    %13 = arith.subf %11, %12 : vector<1x32xf32>
    %14 = vector.broadcast %9 : vector<1x32xf32> to vector<16x32xf32>
    %15 = arith.subf %2, %14 : vector<16x32xf32>
    %cst_5 = arith.constant 9.99999974E-6 : f32
    %16 = vector.broadcast %cst_5 : f32 to vector<1x32xf32>
    %17 = arith.addf %13, %16 : vector<1x32xf32>
    %18 = math.rsqrt %17 : vector<1x32xf32>
    %19 = vector.broadcast %18 : vector<1x32xf32> to vector<16x32xf32>
    %20 = arith.mulf %15, %19 : vector<16x32xf32>
    %cst_6 = arith.constant 0.000000e+00 : f32
    %21 = vector.broadcast %cst_6 : f32 to vector<16x32xf32>
    %22 = arith.cmpf ogt, %20, %21 : vector<16x32xf32>
    %cst_7 = arith.constant 2.000000e-01 : f32
    %23 = vector.broadcast %cst_7 : f32 to vector<16x32xf32>
    %24 = arith.mulf %23, %20 : vector<16x32xf32>
    %25 = arith.select %22, %20, %24 : vector<16x32xi1>, vector<16x32xf32>
    %26 = arith.truncf %25 : vector<16x32xf32> to vector<16x32xbf16>
    %c0_8 = arith.constant 0 : index
    %c0_9 = arith.constant 0 : index
    %c0_10 = arith.constant 0 : index
    %27 = vector.load %arg2[%c0_8, %c0_9, %c0_10] : memref<1x16x32xbf16, #tpu.memory_space<vmem>>, vector<1x16x32xbf16>
    %28 = vector.shape_cast %27 : vector<1x16x32xbf16> to vector<16x32xbf16>
    %29 = vector.shape_cast %26 : vector<16x32xbf16> to vector<1x16x32xbf16>
    tpu.vector_store %arg2[%c0_8, %c0_9, %c0_10], %29 {strides = array<i32>} : memref<1x16x32xbf16, #tpu.memory_space<vmem>>, vector<1x16x32xbf16>,
    return
  }
  func.func @transform_0(%arg0: i32) -> (i32, i32, i32) {
    %c0_i32 = arith.constant 0 : i32
    %c0_i32_0 = arith.constant 0 : i32
    %c0_i32_1 = arith.constant 0 : i32
    return %arg0, %c0_i32, %c0_i32_0 : i32, i32, i32
  }
  func.func @transform_1(%arg0: i32) -> (i32, i32, i32) {
    %c0_i32 = arith.constant 0 : i32
    %c0_i32_0 = arith.constant 0 : i32
    %c0_i32_1 = arith.constant 0 : i32
    return %arg0, %c0_i32, %c0_i32_0 : i32, i32, i32
  }
}

module attributes {stable_mosaic.version = 11 : i64} {
  func.func @_in_lrelu_kernel(%arg0: i32, %arg1: memref<1x4x64xbf16, #tpu.memory_space<vmem>>, %arg2: memref<1x4x64xbf16, #tpu.memory_space<vmem>>) attributes {dimension_semantics = [#tpu.dimension_semantics<parallel>], iteration_bounds = array<i64: 2>, scalar_prefetch = 0 : i64, scratch_operands = 0 : i64, tpu.core_type = #tpu.core_type<tc>, window_params = [{transform_indices = @transform_0, window_bounds = array<i64: 1, 4, 64>}, {transform_indices = @transform_1, window_bounds = array<i64: 1, 4, 64>}]} {
    %c0 = arith.constant 0 : index
    %c0_0 = arith.constant 0 : index
    %c0_1 = arith.constant 0 : index
    %0 = vector.load %arg1[%c0, %c0_0, %c0_1] : memref<1x4x64xbf16, #tpu.memory_space<vmem>>, vector<1x4x64xbf16>
    %1 = vector.shape_cast %0 : vector<1x4x64xbf16> to vector<4x64xbf16>
    %2 = arith.extf %1 : vector<4x64xbf16> to vector<4x64xf32>
    %cst = arith.constant dense<0.000000e+00> : vector<64xf32>
    %3 = vector.multi_reduction <add>, %2, %cst [0] : vector<4x64xf32> to vector<64xf32>
    %4 = vector.shape_cast %3 : vector<64xf32> to vector<1x64xf32>
    %5 = arith.mulf %2, %2 : vector<4x64xf32>
    %cst_2 = arith.constant dense<0.000000e+00> : vector<64xf32>
    %6 = vector.multi_reduction <add>, %5, %cst_2 [0] : vector<4x64xf32> to vector<64xf32>
    %7 = vector.shape_cast %6 : vector<64xf32> to vector<1x64xf32>
    %cst_3 = arith.constant 2.500000e-01 : f32
    %8 = vector.broadcast %cst_3 : f32 to vector<1x64xf32>
    %9 = arith.mulf %4, %8 : vector<1x64xf32>
    %cst_4 = arith.constant 2.500000e-01 : f32
    %10 = vector.broadcast %cst_4 : f32 to vector<1x64xf32>
    %11 = arith.mulf %7, %10 : vector<1x64xf32>
    %12 = arith.mulf %9, %9 : vector<1x64xf32>
    %13 = arith.subf %11, %12 : vector<1x64xf32>
    %14 = vector.broadcast %9 : vector<1x64xf32> to vector<4x64xf32>
    %15 = arith.subf %2, %14 : vector<4x64xf32>
    %cst_5 = arith.constant 9.99999974E-6 : f32
    %16 = vector.broadcast %cst_5 : f32 to vector<1x64xf32>
    %17 = arith.addf %13, %16 : vector<1x64xf32>
    %18 = math.rsqrt %17 : vector<1x64xf32>
    %19 = vector.broadcast %18 : vector<1x64xf32> to vector<4x64xf32>
    %20 = arith.mulf %15, %19 : vector<4x64xf32>
    %cst_6 = arith.constant 0.000000e+00 : f32
    %21 = vector.broadcast %cst_6 : f32 to vector<4x64xf32>
    %22 = arith.cmpf ogt, %20, %21 : vector<4x64xf32>
    %cst_7 = arith.constant 2.000000e-01 : f32
    %23 = vector.broadcast %cst_7 : f32 to vector<4x64xf32>
    %24 = arith.mulf %23, %20 : vector<4x64xf32>
    %25 = arith.select %22, %20, %24 : vector<4x64xi1>, vector<4x64xf32>
    %26 = arith.truncf %25 : vector<4x64xf32> to vector<4x64xbf16>
    %c0_8 = arith.constant 0 : index
    %c0_9 = arith.constant 0 : index
    %c0_10 = arith.constant 0 : index
    %27 = vector.load %arg2[%c0_8, %c0_9, %c0_10] : memref<1x4x64xbf16, #tpu.memory_space<vmem>>, vector<1x4x64xbf16>
    %28 = vector.shape_cast %27 : vector<1x4x64xbf16> to vector<4x64xbf16>
    %29 = vector.shape_cast %26 : vector<4x64xbf16> to vector<1x4x64xbf16>
    tpu.vector_store %arg2[%c0_8, %c0_9, %c0_10], %29 {strides = array<i32>} : memref<1x4x64xbf16, #tpu.memory_space<vmem>>, vector<1x4x64xbf16>,
    return
  }
  func.func @transform_0(%arg0: i32) -> (i32, i32, i32) {
    %c0_i32 = arith.constant 0 : i32
    %c0_i32_0 = arith.constant 0 : i32
    %c0_i32_1 = arith.constant 0 : i32
    return %arg0, %c0_i32, %c0_i32_0 : i32, i32, i32
  }
  func.func @transform_1(%arg0: i32) -> (i32, i32, i32) {
    %c0_i32 = arith.constant 0 : i32
    %c0_i32_0 = arith.constant 0 : i32
    %c0_i32_1 = arith.constant 0 : i32
    return %arg0, %c0_i32, %c0_i32_0 : i32, i32, i32
  }
}

module attributes {stable_mosaic.version = 11 : i64} {
  func.func @_conv_tap_kernel(%arg0: i32, %arg1: i32, %arg2: memref<1x12x128xbf16, #tpu.memory_space<vmem>>, %arg3: memref<512x128xbf16, #tpu.memory_space<vmem>>, %arg4: memref<1x128xf32, #tpu.memory_space<vmem>>, %arg5: memref<1x6x128xbf16, #tpu.memory_space<vmem>>) attributes {dimension_semantics = [#tpu.dimension_semantics<parallel>, #tpu.dimension_semantics<parallel>], iteration_bounds = array<i64: 2, 1>, scalar_prefetch = 0 : i64, scratch_operands = 0 : i64, tpu.core_type = #tpu.core_type<tc>, window_params = [{transform_indices = @transform_0, window_bounds = array<i64: 1, 12, 128>}, {transform_indices = @transform_1, window_bounds = array<i64: 512, 128>}, {transform_indices = @transform_2, window_bounds = array<i64: 1, 128>}, {transform_indices = @transform_3, window_bounds = array<i64: 1, 6, 128>}]} {
    %cst = arith.constant 0.000000e+00 : f32
    %0 = vector.broadcast %cst : f32 to vector<6x128xf32>
    %c0 = arith.constant 0 : index
    %c0_0 = arith.constant 0 : index
    %c0_1 = arith.constant 0 : index
    %1 = vector.load %arg2[%c0, %c0_0, %c0_1] : memref<1x12x128xbf16, #tpu.memory_space<vmem>>, vector<1x6x128xbf16>
    %2 = vector.shape_cast %1 : vector<1x6x128xbf16> to vector<6x128xbf16>
    %c0_2 = arith.constant 0 : index
    %c1 = arith.constant 1 : index
    %c0_3 = arith.constant 0 : index
    %3 = vector.load %arg2[%c0_2, %c1, %c0_3] : memref<1x12x128xbf16, #tpu.memory_space<vmem>>, vector<1x6x128xbf16>
    %4 = vector.shape_cast %3 : vector<1x6x128xbf16> to vector<6x128xbf16>
    %5 = tpu.concatenate %2, %4 in 1 : vector<6x128xbf16>, vector<6x128xbf16> -> vector<6x256xbf16>
    %c0_4 = arith.constant 0 : index
    %c0_5 = arith.constant 0 : index
    %6 = vector.load %arg3[%c0_4, %c0_5] : memref<512x128xbf16, #tpu.memory_space<vmem>>, vector<256x128xbf16>
    %cst_6 = arith.constant dense<0.000000e+00> : vector<6x128xf32>
    %7 = tpu.matmul %5, %6, %cst_6 {dimension_numbers = #tpu.dot_dimension_numbers<[1], [0], [0], [1], [0, 0, 1, 1], [], []>} : vector<6x256xbf16>, vector<256x128xbf16>, vector<6x128xf32> -> vector<6x128xf32>
    %8 = arith.addf %0, %7 : vector<6x128xf32>
    %c0_7 = arith.constant 0 : index
    %c3 = arith.constant 3 : index
    %c0_8 = arith.constant 0 : index
    %9 = vector.load %arg2[%c0_7, %c3, %c0_8] : memref<1x12x128xbf16, #tpu.memory_space<vmem>>, vector<1x6x128xbf16>
    %10 = vector.shape_cast %9 : vector<1x6x128xbf16> to vector<6x128xbf16>
    %c0_9 = arith.constant 0 : index
    %c4 = arith.constant 4 : index
    %c0_10 = arith.constant 0 : index
    %11 = vector.load %arg2[%c0_9, %c4, %c0_10] : memref<1x12x128xbf16, #tpu.memory_space<vmem>>, vector<1x6x128xbf16>
    %12 = vector.shape_cast %11 : vector<1x6x128xbf16> to vector<6x128xbf16>
    %13 = tpu.concatenate %10, %12 in 1 : vector<6x128xbf16>, vector<6x128xbf16> -> vector<6x256xbf16>
    %c256 = arith.constant 256 : index
    %c0_11 = arith.constant 0 : index
    %14 = vector.load %arg3[%c256, %c0_11] : memref<512x128xbf16, #tpu.memory_space<vmem>>, vector<256x128xbf16>
    %cst_12 = arith.constant dense<0.000000e+00> : vector<6x128xf32>
    %15 = tpu.matmul %13, %14, %cst_12 {dimension_numbers = #tpu.dot_dimension_numbers<[1], [0], [0], [1], [0, 0, 1, 1], [], []>} : vector<6x256xbf16>, vector<256x128xbf16>, vector<6x128xf32> -> vector<6x128xf32>
    %16 = arith.addf %8, %15 : vector<6x128xf32>
    %c0_13 = arith.constant 0 : index
    %c0_14 = arith.constant 0 : index
    %17 = vector.load %arg4[%c0_13, %c0_14] : memref<1x128xf32, #tpu.memory_space<vmem>>, vector<1x128xf32>
    %18 = vector.broadcast %17 : vector<1x128xf32> to vector<6x128xf32>
    %19 = arith.addf %16, %18 : vector<6x128xf32>
    %20 = arith.truncf %19 : vector<6x128xf32> to vector<6x128xbf16>
    %c0_15 = arith.constant 0 : index
    %c0_16 = arith.constant 0 : index
    %c0_17 = arith.constant 0 : index
    %21 = vector.load %arg5[%c0_15, %c0_16, %c0_17] : memref<1x6x128xbf16, #tpu.memory_space<vmem>>, vector<1x6x128xbf16>
    %22 = vector.shape_cast %21 : vector<1x6x128xbf16> to vector<6x128xbf16>
    %23 = vector.shape_cast %20 : vector<6x128xbf16> to vector<1x6x128xbf16>
    tpu.vector_store %arg5[%c0_15, %c0_16, %c0_17], %23 {strides = array<i32>} : memref<1x6x128xbf16, #tpu.memory_space<vmem>>, vector<1x6x128xbf16>,
    return
  }
  func.func @transform_0(%arg0: i32, %arg1: i32) -> (i32, i32, i32) {
    %c0_i32 = arith.constant 0 : i32
    %c0_i32_0 = arith.constant 0 : i32
    %c0_i32_1 = arith.constant 0 : i32
    return %arg0, %c0_i32, %c0_i32_0 : i32, i32, i32
  }
  func.func @transform_1(%arg0: i32, %arg1: i32) -> (i32, i32) {
    %c0_i32 = arith.constant 0 : i32
    %c0_i32_0 = arith.constant 0 : i32
    return %c0_i32, %arg1 : i32, i32
  }
  func.func @transform_2(%arg0: i32, %arg1: i32) -> (i32, i32) {
    %c0_i32 = arith.constant 0 : i32
    %c0_i32_0 = arith.constant 0 : i32
    return %c0_i32, %arg1 : i32, i32
  }
  func.func @transform_3(%arg0: i32, %arg1: i32) -> (i32, i32, i32) {
    %c0_i32 = arith.constant 0 : i32
    %c0_i32_0 = arith.constant 0 : i32
    return %arg0, %c0_i32, %arg1 : i32, i32, i32
  }
}

module attributes {stable_mosaic.version = 11 : i64} {
  func.func @_linear_kernel(%arg0: i32, %arg1: memref<2x256xbf16, #tpu.memory_space<vmem>>, %arg2: memref<256x128xbf16, #tpu.memory_space<vmem>>, %arg3: memref<1x128xf32, #tpu.memory_space<vmem>>, %arg4: memref<2x128xf32, #tpu.memory_space<vmem>>) attributes {dimension_semantics = [#tpu.dimension_semantics<arbitrary>], iteration_bounds = array<i64: 1>, scalar_prefetch = 0 : i64, scratch_operands = 0 : i64, tpu.core_type = #tpu.core_type<tc>, window_params = [{pipeline_mode = #tpu.pipeline_mode<synchronous>, transform_indices = @transform_0, window_bounds = array<i64: 2, 256>}, {pipeline_mode = #tpu.pipeline_mode<synchronous>, transform_indices = @transform_1, window_bounds = array<i64: 256, 128>}, {pipeline_mode = #tpu.pipeline_mode<synchronous>, transform_indices = @transform_2, window_bounds = array<i64: 1, 128>}, {pipeline_mode = #tpu.pipeline_mode<synchronous>, transform_indices = @transform_3, window_bounds = array<i64: 2, 128>}]} {
    %c0 = arith.constant 0 : index
    %c0_0 = arith.constant 0 : index
    %0 = vector.load %arg1[%c0, %c0_0] : memref<2x256xbf16, #tpu.memory_space<vmem>>, vector<2x256xbf16>
    %c0_1 = arith.constant 0 : index
    %c0_2 = arith.constant 0 : index
    %1 = vector.load %arg2[%c0_1, %c0_2] : memref<256x128xbf16, #tpu.memory_space<vmem>>, vector<256x128xbf16>
    %cst = arith.constant dense<0.000000e+00> : vector<2x128xf32>
    %2 = tpu.matmul %0, %1, %cst {dimension_numbers = #tpu.dot_dimension_numbers<[1], [0], [0], [1], [0, 0, 1, 1], [], []>} : vector<2x256xbf16>, vector<256x128xbf16>, vector<2x128xf32> -> vector<2x128xf32>
    %c0_3 = arith.constant 0 : index
    %c0_4 = arith.constant 0 : index
    %3 = vector.load %arg3[%c0_3, %c0_4] : memref<1x128xf32, #tpu.memory_space<vmem>>, vector<1x128xf32>
    %4 = vector.broadcast %3 : vector<1x128xf32> to vector<2x128xf32>
    %5 = arith.addf %2, %4 : vector<2x128xf32>
    %c0_5 = arith.constant 0 : index
    %c0_6 = arith.constant 0 : index
    %6 = vector.load %arg4[%c0_5, %c0_6] : memref<2x128xf32, #tpu.memory_space<vmem>>, vector<2x128xf32>
    tpu.vector_store %arg4[%c0_5, %c0_6], %5 {strides = array<i32>} : memref<2x128xf32, #tpu.memory_space<vmem>>, vector<2x128xf32>,
    return
  }
  func.func @transform_0(%arg0: i32) -> (i32, i32) {
    %c0_i32 = arith.constant 0 : i32
    %c0_i32_0 = arith.constant 0 : i32
    %c0_i32_1 = arith.constant 0 : i32
    return %c0_i32, %c0_i32_0 : i32, i32
  }
  func.func @transform_1(%arg0: i32) -> (i32, i32) {
    %c0_i32 = arith.constant 0 : i32
    %c0_i32_0 = arith.constant 0 : i32
    %c0_i32_1 = arith.constant 0 : i32
    return %c0_i32, %c0_i32_0 : i32, i32
  }
  func.func @transform_2(%arg0: i32) -> (i32, i32) {
    %c0_i32 = arith.constant 0 : i32
    %c0_i32_0 = arith.constant 0 : i32
    %c0_i32_1 = arith.constant 0 : i32
    return %c0_i32, %c0_i32_0 : i32, i32
  }
  func.func @transform_3(%arg0: i32) -> (i32, i32) {
    %c0_i32 = arith.constant 0 : i32
    %c0_i32_0 = arith.constant 0 : i32
    %c0_i32_1 = arith.constant 0 : i32
    return %c0_i32, %c0_i32_0 : i32, i32
  }
}

</mosaic_0001>

<llo_original>
// kernel: _lambda_.8
$region0: #{_lambda_.8}
  #allocation0 [shape = 'u32[]', space=smem, size = 0x4, offset = 0x4, fixed_abs, tag = 'smem constant byte address 0x4 - core index']
  #allocation1 [shape = 'u32[144,128]{1,0:T(1,128)}', space=vmem, size = 0x12000, scoped, tag = 'internal scratch']
  %s0 = inlined_call_operand.vmem [shape: bf16[2,64,16], index: 0, kind: input, shape index: {}]
  %s1 = inlined_call_operand.vmem [shape: bf16[2,64,16], index: 1, kind: output, shape index: {}]
  %s2 = sld [smem:[#allocation0]]
  $region37: #{_lambda_.8} parent=0
    _
  %s4 = ssub.s32 1, %s2
  %s5 = scalar_select 0, %s4, %s2
  loop: start=0, step=1, limit=4
  $region2: #{_lambda_.8} parent=0 // loop_pre_header
    _
  $region3: #{_lambda_.8} parent=0 // loop_header
    %s7 = sphi 0, %s11
    %p8 = scmp.ge.s32.totalorder %s7, 4
    %s17 = sphi 0, %s19
    %s20 = sphi 0, %s17
    %s21 = sphi 0, %s20
    %s37 = sphi 0, %s21
    %s43 = sphi 0, %s45
    %s46 = sphi 0, %s43
    %s47 = sphi 0, %s46
    %s63 = sphi 0, %s47
  $region4: #{_lambda_.8} parent=0 // loop_header_branch
    %10 = sbr.rel (%p8) target = $region8
  $region5: #{_lambda_.8} parent=0 // loop_body
    %s12 = ssub.s32 %s7, 1
    %s13 = ssub.s32 %s7, 2
    %s14 = sadd.s32 %s7, 1
    %s15 = ssub.s32 %s7, %s14
    %p16 = scmp.eq.s32.totalorder %s15, 0
    %s18 = sadd.s32 %s17, 1
    %s19 = scalar_select %p16, %s17, %s18
    %p22 = pneg %p16
    %p23 = scmp.eq.s32.totalorder %s7, 1
    %p24 = por %p22, %p23
    %p25 = scmp.ne.s32.totalorder %s17, %s20
    %p26 = scmp.eq.s32.totalorder %s7, 0
    %p27 = por %p25, %p26
    %p28 = scmp.ne.s32.totalorder %s17, %s20
    %p29 = scmp.eq.s32.totalorder %s12, 1
    %p30 = por %p28, %p29
    %p31 = scmp.ne.s32.totalorder %s20, %s21
    %p32 = scmp.eq.s32.totalorder %s12, 0
    %p33 = por %p31, %p32
    %p34 = scmp.ne.s32.totalorder %s20, %s21
    %p35 = scmp.eq.s32.totalorder %s13, 1
    %p36 = por %p34, %p35
    %p38 = scmp.ne.s32.totalorder %s21, %s37
    %p39 = scmp.eq.s32.totalorder %s13, 0
    %p40 = por %p38, %p39
    %s41 = ssub.s32 %s7, %s14
    %p42 = scmp.eq.s32.totalorder %s41, 0
    %s44 = sadd.s32 %s43, 1
    %s45 = scalar_select %p42, %s43, %s44
    %p48 = pneg %p42
    %p49 = scmp.eq.s32.totalorder %s7, 1
    %p50 = por %p48, %p49
    %p51 = scmp.ne.s32.totalorder %s43, %s46
    %p52 = scmp.eq.s32.totalorder %s7, 0
    %p53 = por %p51, %p52
    %p54 = scmp.ne.s32.totalorder %s43, %s46
    %p55 = scmp.eq.s32.totalorder %s12, 1
    %p56 = por %p54, %p55
    %p57 = scmp.ne.s32.totalorder %s46, %s47
    %p58 = scmp.eq.s32.totalorder %s12, 0
    %p59 = por %p57, %p58
    %p60 = scmp.ne.s32.totalorder %s46, %s47
    %p61 = scmp.eq.s32.totalorder %s13, 1
    %p62 = por %p60, %p61
    %p64 = scmp.ne.s32.totalorder %s47, %s63
    %p65 = scmp.eq.s32.totalorder %s13, 0
    %p66 = por %p64, %p65
    %p67 = scmp.le.s32.totalorder 1, %s7
    %p68 = scmp.lt.s32.totalorder %s7, 3
    %p69 = pnand %p67, %p68
    %p70 = pneg %p69
    // Predicated region
    $region9: #{_lambda_.8} parent=5 // pred_check
      _
    $region10: #{_lambda_.8} parent=5 // pred_check_branch
      %72 = sbr.rel (%p69) target = $region12
    $region11: #{_lambda_.8} parent=5 // pred_region
      %s73 = ssub.s32 %s7, 1
    $region12: #{_lambda_.8} parent=5 // pred_fallthru
      _
    %p74 = scmp.lt.s32.totalorder %s7, 2
    // Predicated region
    $region13: #{_lambda_.8} parent=5 // pred_check
      %p75 = pneg %p74
    $region14: #{_lambda_.8} parent=5 // pred_check_branch
      %77 = sbr.rel (%p75) target = $region16
    $region15: #{_lambda_.8} parent=5 // pred_region
      // Predicated region
      $region17: #{_lambda_.8} parent=15 // pred_check
        %p78 = pneg %p27
      $region18: #{_lambda_.8} parent=15 // pred_check_branch
        %80 = sbr.rel (%p78) target = $region20
      $region19: #{_lambda_.8} parent=15 // pred_region
        %p81 = scmp.lt.s32.totalorder %s7, 1
        %s82 = scalar_select %p81, %s7, 1
        %s83 = smul.addr %s82, 8
        %s84 = smul.addr %s83, 4
        %s85 = scalar_lea.vmem %s0, %s84
      $region20: #{_lambda_.8} parent=15 // pred_fallthru
        _
    $region16: #{_lambda_.8} parent=5 // pred_fallthru
      _
    %p86 = scmp.le.s32.totalorder 1, %s7
    %p87 = scmp.lt.s32.totalorder %s7, 3
    %p88 = pnand %p86, %p87
    %p89 = pneg %p88
    // Predicated region
    $region21: #{_lambda_.8} parent=5 // pred_check
      _
    $region22: #{_lambda_.8} parent=5 // pred_check_branch
      %91 = sbr.rel (%p88) target = $region24
    $region23: #{_lambda_.8} parent=5 // pred_region
      %s92 = ssub.s32 %s7, 1
      %p93 = scmp.lt.s32.totalorder %s12, 1
      %s94 = scalar_select %p93, %s12, 1
      %s95 = smul.addr %s94, 8
      %s96 = smul.addr %s95, 4
      %s97 = scalar_lea.vmem %s0, %s96
      %p98 = pneg %p33
      %p99 = pneg %p30
      %p100 = pneg %p59
      %p101 = pneg %p56
      %p102 = scmp.lt.s32.totalorder %s12, 1
      %s103 = scalar_select %p102, %s12, 1
      %s104 = smul.addr %s103, 8
      %s105 = smul.addr %s104, 4
      %s106 = scalar_lea.vmem %s1, %s105
      %p107 = scmp.lt.s32.totalorder %s12, 1
      %s108 = scalar_select %p107, %s12, 1
      %s109 = smul.addr %s108, 8
      %s110 = smul.addr %s109, 4
      %s111 = scalar_lea.vmem %s0, %s110
      %p112 = scmp.lt.s32.totalorder %s12, 1
      %s113 = scalar_select %p112, %s12, 1
      %s114 = smul.addr %s113, 8
      %s115 = smul.addr %s114, 4
      %s116 = scalar_lea.vmem %s1, %s115
      %v117 = vld [vmem:[%s111] sm:$0xf]
      %v118 = vld [vmem:[%s111 + $0x4] sm:$0xf]
      %v119 = vld [vmem:[%s111 + $0x8] sm:$0xf]
      %v120 = vld [vmem:[%s111 + $0xc] sm:$0xf]
      %v121 = vld [vmem:[%s111 + $0x10] sm:$0xf]
      %v122 = vld [vmem:[%s111 + $0x14] sm:$0xf]
      %v123 = vld [vmem:[%s111 + $0x18] sm:$0xf]
      %v124 = vld [vmem:[%s111 + $0x1c] sm:$0xf]
      %v125 = vunpack.c.l.bf16 %v117
      %v126 = vunpack.c.l.bf16 %v118
      %v127 = vunpack.c.l.bf16 %v119
      %v128 = vunpack.c.l.bf16 %v120
      %v129 = vunpack.c.l.bf16 %v121
      %v130 = vunpack.c.l.bf16 %v122
      %v131 = vunpack.c.l.bf16 %v123
      %v132 = vunpack.c.l.bf16 %v124
      %vm133 = vcmask 130048
      %v134 = vsel %vm133, %v125, 0.0
      %v135 = vsel %vm133, %v126, 0.0
      %v136 = vadd.f32 %v134, %v135
      %v137 = vsel %vm133, %v127, 0.0
      %v138 = vadd.f32 %v136, %v137
      %v139 = vsel %vm133, %v128, 0.0
      %v140 = vadd.f32 %v138, %v139
      %v141 = vsel %vm133, %v129, 0.0
      %v142 = vadd.f32 %v140, %v141
      %v143 = vsel %vm133, %v130, 0.0
      %v144 = vadd.f32 %v142, %v143
      %v145 = vsel %vm133, %v131, 0.0
      %v146 = vadd.f32 %v144, %v145
      %v147 = vsel %vm133, %v132, 0.0
      %v148 = vadd.f32 %v146, %v147
      %v149 = vrot.slane %v148, 4
      %v150 = vadd.f32 %v148, %v149
      %v151 = vrot.slane %v150, 2
      %v152 = vadd.f32 %v150, %v151
      %v153 = vrot.slane %v152, 1
      %v154 = vadd.f32 %v152, %v153
      %v155 = vmul.f32 %v125, %v125
      %v156 = vmul.f32 %v126, %v126
      %v157 = vmul.f32 %v127, %v127
      %v158 = vmul.f32 %v128, %v128
      %v159 = vmul.f32 %v129, %v129
      %v160 = vmul.f32 %v130, %v130
      %v161 = vmul.f32 %v131, %v131
      %v162 = vmul.f32 %v132, %v132
      %v163 = vsel %vm133, %v155, 0.0
      %v164 = vsel %vm133, %v156, 0.0
      %v165 = vadd.f32 %v163, %v164
      %v166 = vsel %vm133, %v157, 0.0
      %v167 = vadd.f32 %v165, %v166
      %v168 = vsel %vm133, %v158, 0.0
      %v169 = vadd.f32 %v167, %v168
      %v170 = vsel %vm133, %v159, 0.0
      %v171 = vadd.f32 %v169, %v170
      %v172 = vsel %vm133, %v160, 0.0
      %v173 = vadd.f32 %v171, %v172
      %v174 = vsel %vm133, %v161, 0.0
      %v175 = vadd.f32 %v173, %v174
      %v176 = vsel %vm133, %v162, 0.0
      %v177 = vadd.f32 %v175, %v176
      %v178 = vrot.slane %v177, 4
      %v179 = vadd.f32 %v177, %v178
      %v180 = vrot.slane %v179, 2
      %v181 = vadd.f32 %v179, %v180
      %v182 = vrot.slane %v181, 1
      %v183 = vadd.f32 %v181, %v182
      %v184 = vmul.f32 %v154, 0.015625
      %v185 = vmul.f32 %v183, 0.015625
      %v186 = vmul.f32 %v184, %v184
      %v187 = vsub.f32 %v185, %v186
      %v188 = vsub.f32 %v125, %v184
      %v189 = vsub.f32 %v126, %v184
      %v190 = vsub.f32 %v127, %v184
      %v191 = vsub.f32 %v128, %v184
      %v192 = vsub.f32 %v129, %v184
      %v193 = vsub.f32 %v130, %v184
      %v194 = vsub.f32 %v131, %v184
      %v195 = vsub.f32 %v132, %v184
      %v196 = vadd.f32 %v187, 1e-05
      %v197 = vrsqrt.pop %v196
      %v198 = vmul.f32 %v188, %v197
      %v199 = vmul.f32 %v189, %v197
      %v200 = vmul.f32 %v190, %v197
      %v201 = vmul.f32 %v191, %v197
      %v202 = vmul.f32 %v192, %v197
      %v203 = vmul.f32 %v193, %v197
      %v204 = vmul.f32 %v194, %v197
      %v205 = vmul.f32 %v195, %v197
      %vm206 = vcmp.gt.f32.partialorder %v198, 0.0
      %vm207 = vcmp.gt.f32.partialorder %v199, 0.0
      %vm208 = vcmp.gt.f32.partialorder %v200, 0.0
      %vm209 = vcmp.gt.f32.partialorder %v201, 0.0
      %vm210 = vcmp.gt.f32.partialorder %v202, 0.0
      %vm211 = vcmp.gt.f32.partialorder %v203, 0.0
      %vm212 = vcmp.gt.f32.partialorder %v204, 0.0
      %vm213 = vcmp.gt.f32.partialorder %v205, 0.0
      %v214 = vmul.f32 %v198, 0.2
      %v215 = vmul.f32 %v199, 0.2
      %v216 = vmul.f32 %v200, 0.2
      %v217 = vmul.f32 %v201, 0.2
      %v218 = vmul.f32 %v202, 0.2
      %v219 = vmul.f32 %v203, 0.2
      %v220 = vmul.f32 %v204, 0.2
      %v221 = vmul.f32 %v205, 0.2
      %v222 = vsel %vm206, %v198, %v214
      %v223 = vsel %vm207, %v199, %v215
      %v224 = vsel %vm208, %v200, %v216
      %v225 = vsel %vm209, %v201, %v217
      %v226 = vsel %vm210, %v202, %v218
      %v227 = vsel %vm211, %v203, %v219
      %v228 = vsel %vm212, %v204, %v220
      %v229 = vsel %vm213, %v205, %v221
      %v230 = vpack.c.bf16 %v223, %v222
      %v231 = vpack.c.bf16 %v225, %v224
      %v232 = vpack.c.bf16 %v227, %v226
      %v233 = vpack.c.bf16 %v229, %v228
      %v238 = vunpack.c.l.b16 %v230
      %v239 = vunpack.c.h.b16 %v230
      %v240 = vunpack.c.l.b16 %v231
      %v241 = vunpack.c.h.b16 %v231
      %v242 = vunpack.c.l.b16 %v232
      %v243 = vunpack.c.h.b16 %v232
      %v244 = vunpack.c.l.b16 %v233
      %v245 = vunpack.c.h.b16 %v233
      %v246 = vpack.c.b16 %v238, %v238
      %v247 = vpack.c.b16 %v239, %v239
      %v248 = vpack.c.b16 %v240, %v240
      %v249 = vpack.c.b16 %v241, %v241
      %v250 = vpack.c.b16 %v242, %v242
      %v251 = vpack.c.b16 %v243, %v243
      %v252 = vpack.c.b16 %v244, %v244
      %v253 = vpack.c.b16 %v245, %v245
      %vm262 = vcmask 125952
      %263 = vst.msk [vmem:[%s116] sm:$0xf] %vm262, %v246
      %264 = vst.msk [vmem:[%s116 + $0x4] sm:$0xf] %vm262, %v247
      %265 = vst.msk [vmem:[%s116 + $0x8] sm:$0xf] %vm262, %v248
      %266 = vst.msk [vmem:[%s116 + $0xc] sm:$0xf] %vm262, %v249
      %267 = vst.msk [vmem:[%s116 + $0x10] sm:$0xf] %vm262, %v250
      %268 = vst.msk [vmem:[%s116 + $0x14] sm:$0xf] %vm262, %v251
      %269 = vst.msk [vmem:[%s116 + $0x18] sm:$0xf] %vm262, %v252
      %270 = vst.msk [vmem:[%s116 + $0x1c] sm:$0xf] %vm262, %v253
      %p271 = scmp.lt.s32.totalorder %s12, 1
      %s272 = scalar_select %p271, %s12, 1
      %s273 = smul.addr %s272, 8
      %s274 = smul.addr %s273, 4
      %s275 = scalar_lea.vmem %s1, %s274
      // Predicated region
      $region25: #{_lambda_.8} parent=23 // pred_check
        %p276 = pneg %p56
      $region26: #{_lambda_.8} parent=23 // pred_check_branch
        %278 = sbr.rel (%p276) target = $region28
      $region27: #{_lambda_.8} parent=23 // pred_region
        _
      $region28: #{_lambda_.8} parent=23 // pred_fallthru
        _
    $region24: #{_lambda_.8} parent=5 // pred_fallthru
      _
    %p279 = scmp.le.s32.totalorder 2, %s7
    // Predicated region
    $region29: #{_lambda_.8} parent=5 // pred_check
      %p280 = pneg %p279
    $region30: #{_lambda_.8} parent=5 // pred_check_branch
      %282 = sbr.rel (%p280) target = $region32
    $region31: #{_lambda_.8} parent=5 // pred_region
      %s283 = ssub.s32 %s7, 2
      // Predicated region
      $region33: #{_lambda_.8} parent=31 // pred_check
        %p284 = pneg %p62
      $region34: #{_lambda_.8} parent=31 // pred_check_branch
        %286 = sbr.rel (%p284) target = $region36
      $region35: #{_lambda_.8} parent=31 // pred_region
        %p287 = scmp.lt.s32.totalorder %s13, 1
        %s288 = scalar_select %p287, %s13, 1
        %s289 = smul.addr %s288, 8
        %s290 = smul.addr %s289, 4
        %s291 = scalar_lea.vmem %s1, %s290
      $region36: #{_lambda_.8} parent=31 // pred_fallthru
        _
    $region32: #{_lambda_.8} parent=5 // pred_fallthru
      _
  $region6: #{_lambda_.8} parent=0 // loop_footer
    %s11 = sadd.s32 1, %s7
  $region7: #{_lambda_.8} parent=0 // loop_footer_branch
    %6 = sbr.rel target = $region3
  $region8: #{_lambda_.8} parent=0 // loop_exit
    _

// kernel: _lambda_.7
$region0: #{_lambda_.7}
  #allocation0 [shape = 'u32[]', space=smem, size = 0x4, offset = 0x4, fixed_abs, tag = 'smem constant byte address 0x4 - core index']
  #allocation1 [shape = 'u32[144,128]{1,0:T(1,128)}', space=vmem, size = 0x12000, scoped, tag = 'internal scratch']
  %s0 = inlined_call_operand.vmem [shape: bf16[2,90,12], index: 0, kind: input, shape index: {}]
  %s1 = inlined_call_operand.vmem [shape: bf16[48,128], index: 1, kind: input, shape index: {}]
  %s2 = inlined_call_operand.vmem [shape: f32[1,128], index: 2, kind: input, shape index: {}]
  %s3 = inlined_call_operand.vmem [shape: bf16[2,72,128], index: 3, kind: output, shape index: {}]
  %s4 = sld [smem:[#allocation0]]
  $region45: #{_lambda_.7} parent=0
    _
  %s6 = ssub.s32 1, %s4
  %s7 = scalar_select 0, %s6, %s4
  loop: start=0, step=1, limit=4
  $region2: #{_lambda_.7} parent=0 // loop_pre_header
    _
  $region3: #{_lambda_.7} parent=0 // loop_header
    %s9 = sphi 0, %s13
    %p10 = scmp.ge.s32.totalorder %s9, 4
    %s16 = sphi 0, %s28
    %s17 = sphi 0, %s24
    %s18 = sphi 0, %s16
    %s19 = sphi 0, %s17
    %s20 = sphi 0, %s18
    %s21 = sphi 0, %s19
    %s31 = sphi 0, %s33
    %s34 = sphi 0, %s31
    %s35 = sphi 0, %s34
    %s51 = sphi 0, %s35
    %s57 = sphi 0, %s59
    %s60 = sphi 0, %s57
    %s61 = sphi 0, %s60
    %s77 = sphi 0, %s61
    %s83 = sphi 0, %s85
    %s86 = sphi 0, %s83
    %s87 = sphi 0, %s86
    %s103 = sphi 0, %s87
    %s111 = sphi 0, %s113
    %s114 = sphi 0, %s111
    %s115 = sphi 0, %s114
    %s131 = sphi 0, %s115
  $region4: #{_lambda_.7} parent=0 // loop_header_branch
    %12 = sbr.rel (%p10) target = $region8
  $region5: #{_lambda_.7} parent=0 // loop_body
    %s14 = ssub.s32 %s9, 1
    %s15 = ssub.s32 %s9, 2
    %s22 = sadd.s32 1, %s17
    %p23 = scmp.ge.s32.totalorder %s22, 1
    %s24 = scalar_select %p23, 0, %s22
    %s25 = sadd.s32 1, %s16
    %s26 = scalar_select %p23, %s25, %s16
    %p27 = scmp.ge.s32.totalorder %s26, 2
    %s28 = scalar_select %p27, 0, %s26
    %s29 = ssub.s32 %s16, %s28
    %p30 = scmp.eq.s32.totalorder %s29, 0
    %s32 = sadd.s32 %s31, 1
    %s33 = scalar_select %p30, %s31, %s32
    %p36 = pneg %p30
    %p37 = scmp.eq.s32.totalorder %s9, 1
    %p38 = por %p36, %p37
    %p39 = scmp.ne.s32.totalorder %s31, %s34
    %p40 = scmp.eq.s32.totalorder %s9, 0
    %p41 = por %p39, %p40
    %p42 = scmp.ne.s32.totalorder %s31, %s34
    %p43 = scmp.eq.s32.totalorder %s14, 1
    %p44 = por %p42, %p43
    %p45 = scmp.ne.s32.totalorder %s34, %s35
    %p46 = scmp.eq.s32.totalorder %s14, 0
    %p47 = por %p45, %p46
    %p48 = scmp.ne.s32.totalorder %s34, %s35
    %p49 = scmp.eq.s32.totalorder %s15, 1
    %p50 = por %p48, %p49
    %p52 = scmp.ne.s32.totalorder %s35, %s51
    %p53 = scmp.eq.s32.totalorder %s15, 0
    %p54 = por %p52, %p53
    %s55 = ssub.s32 %s17, %s24
    %p56 = scmp.eq.s32.totalorder %s55, 0
    %s58 = sadd.s32 %s57, 1
    %s59 = scalar_select %p56, %s57, %s58
    %p62 = pneg %p56
    %p63 = scmp.eq.s32.totalorder %s9, 1
    %p64 = por %p62, %p63
    %p65 = scmp.ne.s32.totalorder %s57, %s60
    %p66 = scmp.eq.s32.totalorder %s9, 0
    %p67 = por %p65, %p66
    %p68 = scmp.ne.s32.totalorder %s57, %s60
    %p69 = scmp.eq.s32.totalorder %s14, 1
    %p70 = por %p68, %p69
    %p71 = scmp.ne.s32.totalorder %s60, %s61
    %p72 = scmp.eq.s32.totalorder %s14, 0
    %p73 = por %p71, %p72
    %p74 = scmp.ne.s32.totalorder %s60, %s61
    %p75 = scmp.eq.s32.totalorder %s15, 1
    %p76 = por %p74, %p75
    %p78 = scmp.ne.s32.totalorder %s61, %s77
    %p79 = scmp.eq.s32.totalorder %s15, 0
    %p80 = por %p78, %p79
    %s81 = ssub.s32 %s17, %s24
    %p82 = scmp.eq.s32.totalorder %s81, 0
    %s84 = sadd.s32 %s83, 1
    %s85 = scalar_select %p82, %s83, %s84
    %p88 = pneg %p82
    %p89 = scmp.eq.s32.totalorder %s9, 1
    %p90 = por %p88, %p89
    %p91 = scmp.ne.s32.totalorder %s83, %s86
    %p92 = scmp.eq.s32.totalorder %s9, 0
    %p93 = por %p91, %p92
    %p94 = scmp.ne.s32.totalorder %s83, %s86
    %p95 = scmp.eq.s32.totalorder %s14, 1
    %p96 = por %p94, %p95
    %p97 = scmp.ne.s32.totalorder %s86, %s87
    %p98 = scmp.eq.s32.totalorder %s14, 0
    %p99 = por %p97, %p98
    %p100 = scmp.ne.s32.totalorder %s86, %s87
    %p101 = scmp.eq.s32.totalorder %s15, 1
    %p102 = por %p100, %p101
    %p104 = scmp.ne.s32.totalorder %s87, %s103
    %p105 = scmp.eq.s32.totalorder %s15, 0
    %p106 = por %p104, %p105
    %s107 = ssub.s32 %s16, %s28
    %s108 = ssub.s32 %s17, %s24
    %s109 = sor.u32 %s107, %s108
    %p110 = scmp.eq.s32.totalorder %s109, 0
    %s112 = sadd.s32 %s111, 1
    %s113 = scalar_select %p110, %s111, %s112
    %p116 = pneg %p110
    %p117 = scmp.eq.s32.totalorder %s9, 1
    %p118 = por %p116, %p117
    %p119 = scmp.ne.s32.totalorder %s111, %s114
    %p120 = scmp.eq.s32.totalorder %s9, 0
    %p121 = por %p119, %p120
    %p122 = scmp.ne.s32.totalorder %s111, %s114
    %p123 = scmp.eq.s32.totalorder %s14, 1
    %p124 = por %p122, %p123
    %p125 = scmp.ne.s32.totalorder %s114, %s115
    %p126 = scmp.eq.s32.totalorder %s14, 0
    %p127 = por %p125, %p126
    %p128 = scmp.ne.s32.totalorder %s114, %s115
    %p129 = scmp.eq.s32.totalorder %s15, 1
    %p130 = por %p128, %p129
    %p132 = scmp.ne.s32.totalorder %s115, %s131
    %p133 = scmp.eq.s32.totalorder %s15, 0
    %p134 = por %p132, %p133
    %p135 = scmp.le.s32.totalorder 1, %s9
    %p136 = scmp.lt.s32.totalorder %s9, 3
    %p137 = pnand %p135, %p136
    %p138 = pneg %p137
    // Predicated region
    $region9: #{_lambda_.7} parent=5 // pred_check
      _
    $region10: #{_lambda_.7} parent=5 // pred_check_branch
      %140 = sbr.rel (%p137) target = $region12
    $region11: #{_lambda_.7} parent=5 // pred_region
      %s141 = ssub.s32 %s9, 1
      // Predicated region
      $region13: #{_lambda_.7} parent=11 // pred_check
        %p142 = pneg %p73
      $region14: #{_lambda_.7} parent=11 // pred_check_branch
        %144 = sbr.rel (%p142) target = $region16
      $region15: #{_lambda_.7} parent=11 // pred_region
        %p145 = scmp.lt.s32.totalorder %s19, 0
        %s146 = scalar_select %p145, %s19, 0
        %s147 = smul.addr %s146, 4
        %s148 = scalar_lea.vmem %s1, %s147
      $region16: #{_lambda_.7} parent=11 // pred_fallthru
        _
      // Predicated region
      $region17: #{_lambda_.7} parent=11 // pred_check
        %p149 = pneg %p99
      $region18: #{_lambda_.7} parent=11 // pred_check_branch
        %151 = sbr.rel (%p149) target = $region20
      $region19: #{_lambda_.7} parent=11 // pred_region
        %p152 = scmp.lt.s32.totalorder %s19, 0
        %s153 = scalar_select %p152, %s19, 0
        %s154 = scalar_lea.vmem %s2, %s153
      $region20: #{_lambda_.7} parent=11 // pred_fallthru
        _
    $region12: #{_lambda_.7} parent=5 // pred_fallthru
      _
    %p155 = scmp.lt.s32.totalorder %s9, 2
    // Predicated region
    $region21: #{_lambda_.7} parent=5 // pred_check
      %p156 = pneg %p155
    $region22: #{_lambda_.7} parent=5 // pred_check_branch
      %158 = sbr.rel (%p156) target = $region24
    $region23: #{_lambda_.7} parent=5 // pred_region
      // Predicated region
      $region25: #{_lambda_.7} parent=23 // pred_check
        %p159 = pneg %p41
      $region26: #{_lambda_.7} parent=23 // pred_check_branch
        %161 = sbr.rel (%p159) target = $region28
      $region27: #{_lambda_.7} parent=23 // pred_region
        %p162 = scmp.lt.s32.totalorder %s16, 1
        %s163 = scalar_select %p162, %s16, 1
        %s164 = smul.addr %s163, 12
        %s165 = smul.addr %s164, 4
        %s166 = scalar_lea.vmem %s0, %s165
      $region28: #{_lambda_.7} parent=23 // pred_fallthru
        _
    $region24: #{_lambda_.7} parent=5 // pred_fallthru
      _
    %p167 = scmp.le.s32.totalorder 1, %s9
    %p168 = scmp.lt.s32.totalorder %s9, 3
    %p169 = pnand %p167, %p168
    %p170 = pneg %p169
    // Predicated region
    $region29: #{_lambda_.7} parent=5 // pred_check
      _
    $region30: #{_lambda_.7} parent=5 // pred_check_branch
      %172 = sbr.rel (%p169) target = $region32
    $region31: #{_lambda_.7} parent=5 // pred_region
      %s173 = ssub.s32 %s9, 1
      %p174 = scmp.lt.s32.totalorder %s18, 1
      %s175 = scalar_select %p174, %s18, 1
      %s176 = smul.addr %s175, 12
      %s177 = smul.addr %s176, 4
      %s178 = scalar_lea.vmem %s0, %s177
      %p179 = pneg %p47
      %p180 = pneg %p44
      %p181 = scmp.lt.s32.totalorder %s19, 0
      %s182 = scalar_select %p181, %s19, 0
      %s183 = smul.addr %s182, 4
      %s184 = scalar_lea.vmem %s1, %s183
      %p185 = pneg %p73
      %p186 = pneg %p70
      %p187 = scmp.lt.s32.totalorder %s19, 0
      %s188 = scalar_select %p187, %s19, 0
      %s189 = scalar_lea.vmem %s2, %s188
      %p190 = pneg %p99
      %p191 = pneg %p96
      %p192 = pneg %p127
      %p193 = pneg %p124
      %p194 = scmp.lt.s32.totalorder %s18, 1
      %s195 = scalar_select %p194, %s18, 1
      %p196 = scmp.lt.s32.totalorder %s19, 0
      %s197 = scalar_select %p196, %s19, 0
      %s198 = smul.addr %s195, 9
      %s199 = sadd.s32 %s197, %s198
      %s200 = smul.addr %s199, 4
      %s201 = scalar_lea.vmem %s3, %s200
      %p202 = scmp.lt.s32.totalorder %s18, 1
      %s203 = scalar_select %p202, %s18, 1
      %s204 = smul.addr %s203, 12
      %s205 = smul.addr %s204, 4
      %s206 = scalar_lea.vmem %s0, %s205
      %p207 = scmp.lt.s32.totalorder %s19, 0
      %s208 = scalar_select %p207, %s19, 0
      %s209 = smul.addr %s208, 4
      %s210 = scalar_lea.vmem %s1, %s209
      %p211 = scmp.lt.s32.totalorder %s19, 0
      %s212 = scalar_select %p211, %s19, 0
      %s213 = scalar_lea.vmem %s2, %s212
      %p214 = scmp.lt.s32.totalorder %s18, 1
      %s215 = scalar_select %p214, %s18, 1
      %p216 = scmp.lt.s32.totalorder %s19, 0
      %s217 = scalar_select %p216, %s19, 0
      %s218 = smul.addr %s215, 9
      %s219 = sadd.s32 %s217, %s218
      %s220 = smul.addr %s219, 4
      %s221 = scalar_lea.vmem %s3, %s220
      %v223 = vld [vmem:[%s206] sm:$0xf]
      %v224 = vld [vmem:[%s206 + $0x4] sm:$0xf]
      %v225 = vld [vmem:[%s206 + $0x8] sm:$0xf]
      %v226 = vld [vmem:[%s206 + $0xc] sm:$0xf]
      %v227 = vld [vmem:[%s206 + $0x10] sm:$0xf]
      %v228 = vld [vmem:[%s206 + $0x14] sm:$0xf]
      %v229 = vld [vmem:[%s206 + $0x18] sm:$0xf]
      %v230 = vld [vmem:[%s206 + $0x1c] sm:$0xf]
      %v231 = vld [vmem:[%s206 + $0x20] sm:$0xf]
      %v232 = vld [vmem:[%s210] sm:$0xf]
      %v233 = vld [vmem:[%s210 + $0x4] sm:$0x3]
      %v234 = vld [vmem:[%s206 + $0x24] sm:$0x1]
      %v235 = vld [vmem:[%s210 + $0x4] sm:$0xc]
      %v236 = vld [vmem:[%s210 + $0x8] sm:$0xf]
      %v247 = vunpack.c.l.b16 %v223
      %v248 = vunpack.c.l.b16 %v224
      %v249 = vunpack.c.l.b16 %v225
      %v250 = vunpack.c.l.b16 %v226
      %v251 = vunpack.c.l.b16 %v227
      %v252 = vunpack.c.l.b16 %v228
      %v253 = vunpack.c.l.b16 %v229
      %v254 = vunpack.c.l.b16 %v230
      %v255 = vunpack.c.l.b16 %v231
      %v256 = vunpack.c.l.b16 %v234
      %v257 = vpack.c.b16 %v248, %v247
      %v258 = vpack.c.b16 %v250, %v249
      %v259 = vpack.c.b16 %v252, %v251
      %v260 = vpack.c.b16 %v254, %v253
      %v261 = vpack.c.b16 %v256, %v255
      %vm262 = vsmask.f32 7424
      %v264 = vshrl.u32 %v257, 16
      %v266 = vshll.u32 %v257, 16
      %v268 = vrot.slane %v266, 1
      %v269 = vor.u32 %v264, %v268
      %v271 = vshll.u32 %v258, 16
      %v273 = vrot.slane %v271, 1
      %v274 = vsel %vm262, %v269, %v273
      %v275 = vshrl.u32 %v258, 16
      %v277 = vor.u32 %v275, %v273
      %v279 = vshll.u32 %v259, 16
      %v281 = vrot.slane %v279, 1
      %v282 = vsel %vm262, %v277, %v281
      %v283 = vshrl.u32 %v259, 16
      %v285 = vor.u32 %v283, %v281
      %v287 = vshll.u32 %v260, 16
      %v289 = vrot.slane %v287, 1
      %v290 = vsel %vm262, %v285, %v289
      %v291 = vshrl.u32 %v260, 16
      %v293 = vor.u32 %v291, %v289
      %v295 = vshll.u32 %v261, 16
      %v297 = vrot.slane %v295, 1
      %v298 = vsel %vm262, %v293, %v297
      %v299 = vshrl.u32 %v261, 16
      %v301 = vor.u32 %v299, %v297
      %v304 = vunpack.c.l.b16 %v235
      %v305 = vunpack.c.l.b16 %v236
      %v306 = vpack.c.b16 %v305, %v304
      %v307 = vrot.slane %v306, 2
      %vm308 = vcmask 97280
      %v310 = vsel %vm308, %v274, 0
      %v313 = vsel %vm308, %v282, 0
      %v316 = vsel %vm308, %v290, 0
      %v319 = vsel %vm308, %v298, 0
      %v322 = vsel %vm308, %v301, 0
      %vm324 = vcmask 1045504
      %v326 = vsel %vm324, %v307, 0
      %328 = vmatprep.subr.bf16.mxu0 0
      %329 = vmatpush1.bf16.msra.mxu0 %v326
      %330 = vmatprep.subr.bf16.mxu0 0
      %331 = vmatpush1.bf16.msra.mxu0 0
      %332 = vmatprep.subr.bf16.mxu0 0
      %333 = vmatpush1.bf16.msra.mxu0 0
      %334 = vmatprep.subr.bf16.mxu0 0
      %335 = vmatpush1.bf16.msra.mxu0 0
      %336 = vmatprep.subr.bf16.mxu0 0
      %337 = vmatpush1.bf16.msra.mxu0 0
      %338 = vmatprep.subr.bf16.mxu0 0
      %339 = vmatpush1.bf16.msra.mxu0 0
      %340 = vmatprep.subr.bf16.mxu0 0
      %341 = vmatpush1.bf16.msra.mxu0 0
      %342 = vmatprep.subr.bf16.mxu0 0
      %343 = vmatpush1.bf16.msra.mxu0 0
      %344 = vmatprep.subr.bf16.mxu0 0
      %345 = vmatpush1.bf16.msra.mxu0 0
      %346 = vmatprep.subr.bf16.mxu0 0
      %347 = vmatpush1.bf16.msra.mxu0 0
      %348 = vmatprep.subr.bf16.mxu0 0
      %349 = vmatpush1.bf16.msra.mxu0 0
      %350 = vmatprep.subr.bf16.mxu0 0
      %351 = vmatpush1.bf16.msra.mxu0 0
      %352 = vmatprep.subr.bf16.mxu0 0
      %353 = vmatpush1.bf16.msra.mxu0 0
      %354 = vmatprep.subr.bf16.mxu0 0
      %355 = vmatpush1.bf16.msra.mxu0 0
      %356 = vmatprep.subr.bf16.mxu0 0
      %357 = vmatpush1.bf16.msra.mxu0 0
      %358 = vmatprep.subr.bf16.mxu0 0
      %359 = vmatpush1.bf16.msra.mxu0 0
      %360 = vmatprep.mubr.bf16.mxu0 0
      %361 = vmatmul.mubr.bf16.gmra.mrb[0].mxu0 %v310
      %v362 = vpop.f32.mrb[0].mxu0
      %v363 = vadd.f32 0.0, %v362
      %v364 = vpop.f32.mrb[0].mxu0
      %v365 = vpop.f32.mrb[0].mxu0
      %v366 = vadd.f32 0.0, %v365
      %v367 = vpop.f32.mrb[0].mxu0
      %368 = vmatprep.mubr.bf16.mxu0 0
      %369 = vmatmul.mubr.bf16.gmra.mrb[0].mxu0 %v313
      %v370 = vpop.f32.mrb[0].mxu0
      %v371 = vadd.f32 0.0, %v370
      %v372 = vpop.f32.mrb[0].mxu0
      %v373 = vpop.f32.mrb[0].mxu0
      %v374 = vadd.f32 0.0, %v373
      %v375 = vpop.f32.mrb[0].mxu0
      %376 = vmatprep.mubr.bf16.mxu0 0
      %377 = vmatmul.mubr.bf16.gmra.mrb[0].mxu0 %v316
      %v378 = vpop.f32.mrb[0].mxu0
      %v379 = vadd.f32 0.0, %v378
      %v380 = vpop.f32.mrb[0].mxu0
      %v381 = vpop.f32.mrb[0].mxu0
      %v382 = vadd.f32 0.0, %v381
      %v383 = vpop.f32.mrb[0].mxu0
      %384 = vmatprep.mubr.bf16.mxu0 0
      %385 = vmatmul.mubr.bf16.gmra.mrb[0].mxu0 %v319
      %v386 = vpop.f32.mrb[0].mxu0
      %v387 = vadd.f32 0.0, %v386
      %v388 = vpop.f32.mrb[0].mxu0
      %v389 = vpop.f32.mrb[0].mxu0
      %v390 = vadd.f32 0.0, %v389
      %v391 = vpop.f32.mrb[0].mxu0
      %392 = vmatprep.mubr.bf16.mxu0 0
      %393 = vmatmul.mubr.bf16.gmra.mrb[0].mxu0 %v322
      %v394 = vpop.f32.mrb[0].mxu0
      %v395 = vadd.f32 0.0, %v394
      %v396 = vpop.f32.mrb[0].mxu0
      %v397 = vpop.f32.mrb[0].mxu0
      %v398 = vpop.f32.mrb[0].mxu0
      %399 = vdwg.mxu0
      %v400 = vpack.c.b16 %v255, %v255
      %v403 = vunpack.c.l.b16 %v232
      %v404 = vunpack.c.l.b16 %v233
      %v405 = vpack.c.b16 %v404, %v403
      %v406 = vsel %vm308, %v257, 0
      %v408 = vsel %vm308, %v258, 0
      %v410 = vsel %vm308, %v259, 0
      %v412 = vsel %vm308, %v260, 0
      %v415 = vsel %vm308, %v400, 0
      %v418 = vsel %vm324, %v405, 0
      %420 = vmatprep.subr.bf16.mxu0 0
      %421 = vmatpush1.bf16.msra.mxu0 %v418
      %422 = vmatprep.subr.bf16.mxu0 0
      %423 = vmatpush1.bf16.msra.mxu0 0
      %424 = vmatprep.subr.bf16.mxu0 0
      %425 = vmatpush1.bf16.msra.mxu0 0
      %426 = vmatprep.subr.bf16.mxu0 0
      %427 = vmatpush1.bf16.msra.mxu0 0
      %428 = vmatprep.subr.bf16.mxu0 0
      %429 = vmatpush1.bf16.msra.mxu0 0
      %430 = vmatprep.subr.bf16.mxu0 0
      %431 = vmatpush1.bf16.msra.mxu0 0
      %432 = vmatprep.subr.bf16.mxu0 0
      %433 = vmatpush1.bf16.msra.mxu0 0
      %434 = vmatprep.subr.bf16.mxu0 0
      %435 = vmatpush1.bf16.msra.mxu0 0
      %436 = vmatprep.subr.bf16.mxu0 0
      %437 = vmatpush1.bf16.msra.mxu0 0
      %438 = vmatprep.subr.bf16.mxu0 0
      %439 = vmatpush1.bf16.msra.mxu0 0
      %440 = vmatprep.subr.bf16.mxu0 0
      %441 = vmatpush1.bf16.msra.mxu0 0
      %442 = vmatprep.subr.bf16.mxu0 0
      %443 = vmatpush1.bf16.msra.mxu0 0
      %444 = vmatprep.subr.bf16.mxu0 0
      %445 = vmatpush1.bf16.msra.mxu0 0
      %446 = vmatprep.subr.bf16.mxu0 0
      %447 = vmatpush1.bf16.msra.mxu0 0
      %448 = vmatprep.subr.bf16.mxu0 0
      %449 = vmatpush1.bf16.msra.mxu0 0
      %450 = vmatprep.subr.bf16.mxu0 0
      %451 = vmatpush1.bf16.msra.mxu0 0
      %452 = vmatprep.mubr.bf16.mxu0 0
      %453 = vmatmul.mubr.bf16.gmra.mrb[0].mxu0 %v406
      %v454 = vpop.f32.mrb[0].mxu0
      %v455 = vadd.f32 %v363, %v454
      %v456 = vpop.f32.mrb[0].mxu0
      %v457 = vpop.f32.mrb[0].mxu0
      %v458 = vadd.f32 %v366, %v457
      %v459 = vpop.f32.mrb[0].mxu0
      %460 = vmatprep.mubr.bf16.mxu0 0
      %461 = vmatmul.mubr.bf16.gmra.mrb[0].mxu0 %v408
      %v462 = vpop.f32.mrb[0].mxu0
      %v463 = vadd.f32 %v371, %v462
      %v464 = vpop.f32.mrb[0].mxu0
      %v465 = vpop.f32.mrb[0].mxu0
      %v466 = vadd.f32 %v374, %v465
      %v467 = vpop.f32.mrb[0].mxu0
      %468 = vmatprep.mubr.bf16.mxu0 0
      %469 = vmatmul.mubr.bf16.gmra.mrb[0].mxu0 %v410
      %v470 = vpop.f32.mrb[0].mxu0
      %v471 = vadd.f32 %v379, %v470
      %v472 = vpop.f32.mrb[0].mxu0
      %v473 = vpop.f32.mrb[0].mxu0
      %v474 = vadd.f32 %v382, %v473
      %v475 = vpop.f32.mrb[0].mxu0
      %476 = vmatprep.mubr.bf16.mxu0 0
      %477 = vmatmul.mubr.bf16.gmra.mrb[0].mxu0 %v412
      %v478 = vpop.f32.mrb[0].mxu0
      %v479 = vadd.f32 %v387, %v478
      %v480 = vpop.f32.mrb[0].mxu0
      %v481 = vpop.f32.mrb[0].mxu0
      %v482 = vadd.f32 %v390, %v481
      %v483 = vpop.f32.mrb[0].mxu0
      %484 = vmatprep.mubr.bf16.mxu0 0
      %485 = vmatmul.mubr.bf16.gmra.mrb[0].mxu0 %v415
      %v486 = vpop.f32.mrb[0].mxu0
      %v487 = vadd.f32 %v395, %v486
      %v488 = vpop.f32.mrb[0].mxu0
      %v489 = vpop.f32.mrb[0].mxu0
      %v490 = vpop.f32.mrb[0].mxu0
      %491 = vdwg.mxu0
      %v492 = vld [vmem:[%s206 + $0x4] sm:$0xf]
      %v493 = vld [vmem:[%s206 + $0x8] sm:$0xf]
      %v494 = vld [vmem:[%s206 + $0xc] sm:$0xf]
      %v495 = vld [vmem:[%s206 + $0x10] sm:$0xf]
      %v496 = vld [vmem:[%s206 + $0x14] sm:$0xf]
      %v497 = vld [vmem:[%s206 + $0x18] sm:$0xf]
      %v498 = vld [vmem:[%s206 + $0x1c] sm:$0xf]
      %v499 = vld [vmem:[%s206 + $0x20] sm:$0xf]
      %v500 = vld [vmem:[%s206 + $0x24] sm:$0xf]
      %v501 = vld [vmem:[%s206 + $0x28] sm:$0x1]
      %v502 = vld [vmem:[%s210 + $0xc] sm:$0xf]
      %v503 = vld [vmem:[%s210 + $0x10] sm:$0x3]
      %v514 = vunpack.c.l.b16 %v492
      %v515 = vunpack.c.l.b16 %v493
      %v516 = vunpack.c.l.b16 %v494
      %v517 = vunpack.c.l.b16 %v495
      %v518 = vunpack.c.l.b16 %v496
      %v519 = vunpack.c.l.b16 %v497
      %v520 = vunpack.c.l.b16 %v498
      %v521 = vunpack.c.l.b16 %v499
      %v522 = vunpack.c.l.b16 %v500
      %v523 = vunpack.c.l.b16 %v501
      %v524 = vpack.c.b16 %v515, %v514
      %v525 = vpack.c.b16 %v517, %v516
      %v526 = vpack.c.b16 %v519, %v518
      %v527 = vpack.c.b16 %v521, %v520
      %v528 = vpack.c.b16 %v523, %v522
      %v530 = vshrl.u32 %v524, 16
      %v532 = vshll.u32 %v524, 16
      %v534 = vrot.slane %v532, 1
      %v535 = vor.u32 %v530, %v534
      %v537 = vshll.u32 %v525, 16
      %v539 = vrot.slane %v537, 1
      %v540 = vsel %vm262, %v535, %v539
      %v541 = vshrl.u32 %v525, 16
      %v543 = vor.u32 %v541, %v539
      %v545 = vshll.u32 %v526, 16
      %v547 = vrot.slane %v545, 1
      %v548 = vsel %vm262, %v543, %v547
      %v549 = vshrl.u32 %v526, 16
      %v551 = vor.u32 %v549, %v547
      %v553 = vshll.u32 %v527, 16
      %v555 = vrot.slane %v553, 1
      %v556 = vsel %vm262, %v551, %v555
      %v557 = vshrl.u32 %v527, 16
      %v559 = vor.u32 %v557, %v555
      %v561 = vshll.u32 %v528, 16
      %v563 = vrot.slane %v561, 1
      %v564 = vsel %vm262, %v559, %v563
      %v565 = vshrl.u32 %v528, 16
      %v567 = vor.u32 %v565, %v563
      %v570 = vunpack.c.l.b16 %v502
      %v571 = vunpack.c.l.b16 %v503
      %v572 = vpack.c.b16 %v571, %v570
      %v574 = vsel %vm308, %v540, 0
      %v577 = vsel %vm308, %v548, 0
      %v580 = vsel %vm308, %v556, 0
      %v583 = vsel %vm308, %v564, 0
      %v586 = vsel %vm308, %v567, 0
      %v589 = vsel %vm324, %v572, 0
      %591 = vmatprep.subr.bf16.mxu0 0
      %592 = vmatpush1.bf16.msra.mxu0 %v589
      %593 = vmatprep.subr.bf16.mxu0 0
      %594 = vmatpush1.bf16.msra.mxu0 0
      %595 = vmatprep.subr.bf16.mxu0 0
      %596 = vmatpush1.bf16.msra.mxu0 0
      %597 = vmatprep.subr.bf16.mxu0 0
      %598 = vmatpush1.bf16.msra.mxu0 0
      %599 = vmatprep.subr.bf16.mxu0 0
      %600 = vmatpush1.bf16.msra.mxu0 0
      %601 = vmatprep.subr.bf16.mxu0 0
      %602 = vmatpush1.bf16.msra.mxu0 0
      %603 = vmatprep.subr.bf16.mxu0 0
      %604 = vmatpush1.bf16.msra.mxu0 0
      %605 = vmatprep.subr.bf16.mxu0 0
      %606 = vmatpush1.bf16.msra.mxu0 0
      %607 = vmatprep.subr.bf16.mxu0 0
      %608 = vmatpush1.bf16.msra.mxu0 0
      %609 = vmatprep.subr.bf16.mxu0 0
      %610 = vmatpush1.bf16.msra.mxu0 0
      %611 = vmatprep.subr.bf16.mxu0 0
      %612 = vmatpush1.bf16.msra.mxu0 0
      %613 = vmatprep.subr.bf16.mxu0 0
      %614 = vmatpush1.bf16.msra.mxu0 0
      %615 = vmatprep.subr.bf16.mxu0 0
      %616 = vmatpush1.bf16.msra.mxu0 0
      %617 = vmatprep.subr.bf16.mxu0 0
      %618 = vmatpush1.bf16.msra.mxu0 0
      %619 = vmatprep.subr.bf16.mxu0 0
      %620 = vmatpush1.bf16.msra.mxu0 0
      %621 = vmatprep.subr.bf16.mxu0 0
      %622 = vmatpush1.bf16.msra.mxu0 0
      %623 = vmatprep.mubr.bf16.mxu0 0
      %624 = vmatmul.mubr.bf16.gmra.mrb[0].mxu0 %v574
      %v625 = vpop.f32.mrb[0].mxu0
      %v626 = vadd.f32 0.0, %v625
      %v627 = vpop.f32.mrb[0].mxu0
      %v628 = vpop.f32.mrb[0].mxu0
      %v629 = vadd.f32 0.0, %v628
      %v630 = vpop.f32.mrb[0].mxu0
      %631 = vmatprep.mubr.bf16.mxu0 0
      %632 = vmatmul.mubr.bf16.gmra.mrb[0].mxu0 %v577
      %v633 = vpop.f32.mrb[0].mxu0
      %v634 = vadd.f32 0.0, %v633
      %v635 = vpop.f32.mrb[0].mxu0
      %v636 = vpop.f32.mrb[0].mxu0
      %v637 = vadd.f32 0.0, %v636
      %v638 = vpop.f32.mrb[0].mxu0
      %639 = vmatprep.mubr.bf16.mxu0 0
      %640 = vmatmul.mubr.bf16.gmra.mrb[0].mxu0 %v580
      %v641 = vpop.f32.mrb[0].mxu0
      %v642 = vadd.f32 0.0, %v641
      %v643 = vpop.f32.mrb[0].mxu0
      %v644 = vpop.f32.mrb[0].mxu0
      %v645 = vadd.f32 0.0, %v644
      %v646 = vpop.f32.mrb[0].mxu0
      %647 = vmatprep.mubr.bf16.mxu0 0
      %648 = vmatmul.mubr.bf16.gmra.mrb[0].mxu0 %v583
      %v649 = vpop.f32.mrb[0].mxu0
      %v650 = vadd.f32 0.0, %v649
      %v651 = vpop.f32.mrb[0].mxu0
      %v652 = vpop.f32.mrb[0].mxu0
      %v653 = vadd.f32 0.0, %v652
      %v654 = vpop.f32.mrb[0].mxu0
      %655 = vmatprep.mubr.bf16.mxu0 0
      %656 = vmatmul.mubr.bf16.gmra.mrb[0].mxu0 %v586
      %v657 = vpop.f32.mrb[0].mxu0
      %v658 = vadd.f32 0.0, %v657
      %v659 = vpop.f32.mrb[0].mxu0
      %v660 = vpop.f32.mrb[0].mxu0
      %v661 = vpop.f32.mrb[0].mxu0
      %662 = vdwg.mxu0
      %v663 = vadd.f32 %v455, %v626
      %v664 = vadd.f32 %v458, %v629
      %v665 = vadd.f32 %v463, %v634
      %v666 = vadd.f32 %v466, %v637
      %v667 = vadd.f32 %v471, %v642
      %v668 = vadd.f32 %v474, %v645
      %v669 = vadd.f32 %v479, %v650
      %v670 = vadd.f32 %v482, %v653
      %v671 = vadd.f32 %v487, %v658
      %v672 = vld [vmem:[%s206 + $0x4] sm:$0xe]
      %v673 = vld [vmem:[%s210 + $0x10] sm:$0xc]
      %v674 = vld [vmem:[%s210 + $0x14] sm:$0xf]
      %v676 = vunpack.c.l.b16 %v672
      %v677 = vpack.c.b16 %v515, %v676
      %vm678 = vcmask 1046528
      %v679 = vrot.slane %v677, 1
      %v680 = vrot.slane %v525, 1
      %v681 = vsel %vm678, %v679, %v680
      %v682 = vrot.slane %v526, 1
      %v683 = vsel %vm678, %v680, %v682
      %v684 = vrot.slane %v527, 1
      %v685 = vsel %vm678, %v682, %v684
      %v686 = vrot.slane %v528, 1
      %v687 = vsel %vm678, %v684, %v686
      %v690 = vunpack.c.l.b16 %v673
      %v691 = vunpack.c.l.b16 %v674
      %v692 = vpack.c.b16 %v691, %v690
      %v693 = vrot.slane %v692, 2
      %v695 = vsel %vm308, %v681, 0
      %v698 = vsel %vm308, %v683, 0
      %v701 = vsel %vm308, %v685, 0
      %v704 = vsel %vm308, %v687, 0
      %v707 = vsel %vm308, %v686, 0
      %v710 = vsel %vm324, %v693, 0
      %712 = vmatprep.subr.bf16.mxu0 0
      %713 = vmatpush1.bf16.msra.mxu0 %v710
      %714 = vmatprep.subr.bf16.mxu0 0
      %715 = vmatpush1.bf16.msra.mxu0 0
      %716 = vmatprep.subr.bf16.mxu0 0
      %717 = vmatpush1.bf16.msra.mxu0 0
      %718 = vmatprep.subr.bf16.mxu0 0
      %719 = vmatpush1.bf16.msra.mxu0 0
      %720 = vmatprep.subr.bf16.mxu0 0
      %721 = vmatpush1.bf16.msra.mxu0 0
      %722 = vmatprep.subr.bf16.mxu0 0
      %723 = vmatpush1.bf16.msra.mxu0 0
      %724 = vmatprep.subr.bf16.mxu0 0
      %725 = vmatpush1.bf16.msra.mxu0 0
      %726 = vmatprep.subr.bf16.mxu0 0
      %727 = vmatpush1.bf16.msra.mxu0 0
      %728 = vmatprep.subr.bf16.mxu0 0
      %729 = vmatpush1.bf16.msra.mxu0 0
      %730 = vmatprep.subr.bf16.mxu0 0
      %731 = vmatpush1.bf16.msra.mxu0 0
      %732 = vmatprep.subr.bf16.mxu0 0
      %733 = vmatpush1.bf16.msra.mxu0 0
      %734 = vmatprep.subr.bf16.mxu0 0
      %735 = vmatpush1.bf16.msra.mxu0 0
      %736 = vmatprep.subr.bf16.mxu0 0
      %737 = vmatpush1.bf16.msra.mxu0 0
      %738 = vmatprep.subr.bf16.mxu0 0
      %739 = vmatpush1.bf16.msra.mxu0 0
      %740 = vmatprep.subr.bf16.mxu0 0
      %741 = vmatpush1.bf16.msra.mxu0 0
      %742 = vmatprep.subr.bf16.mxu0 0
      %743 = vmatpush1.bf16.msra.mxu0 0
      %744 = vmatprep.mubr.bf16.mxu0 0
      %745 = vmatmul.mubr.bf16.gmra.mrb[0].mxu0 %v695
      %v746 = vpop.f32.mrb[0].mxu0
      %v747 = vadd.f32 0.0, %v746
      %v748 = vpop.f32.mrb[0].mxu0
      %v749 = vpop.f32.mrb[0].mxu0
      %v750 = vadd.f32 0.0, %v749
      %v751 = vpop.f32.mrb[0].mxu0
      %752 = vmatprep.mubr.bf16.mxu0 0
      %753 = vmatmul.mubr.bf16.gmra.mrb[0].mxu0 %v698
      %v754 = vpop.f32.mrb[0].mxu0
      %v755 = vadd.f32 0.0, %v754
      %v756 = vpop.f32.mrb[0].mxu0
      %v757 = vpop.f32.mrb[0].mxu0
      %v758 = vadd.f32 0.0, %v757
      %v759 = vpop.f32.mrb[0].mxu0
      %760 = vmatprep.mubr.bf16.mxu0 0
      %761 = vmatmul.mubr.bf16.gmra.mrb[0].mxu0 %v701
      %v762 = vpop.f32.mrb[0].mxu0
      %v763 = vadd.f32 0.0, %v762
      %v764 = vpop.f32.mrb[0].mxu0
      %v765 = vpop.f32.mrb[0].mxu0
      %v766 = vadd.f32 0.0, %v765
      %v767 = vpop.f32.mrb[0].mxu0
      %768 = vmatprep.mubr.bf16.mxu0 0
      %769 = vmatmul.mubr.bf16.gmra.mrb[0].mxu0 %v704
      %v770 = vpop.f32.mrb[0].mxu0
      %v771 = vadd.f32 0.0, %v770
      %v772 = vpop.f32.mrb[0].mxu0
      %v773 = vpop.f32.mrb[0].mxu0
      %v774 = vadd.f32 0.0, %v773
      %v775 = vpop.f32.mrb[0].mxu0
      %776 = vmatprep.mubr.bf16.mxu0 0
      %777 = vmatmul.mubr.bf16.gmra.mrb[0].mxu0 %v707
      %v778 = vpop.f32.mrb[0].mxu0
      %v779 = vadd.f32 0.0, %v778
      %v780 = vpop.f32.mrb[0].mxu0
      %v781 = vpop.f32.mrb[0].mxu0
      %v782 = vpop.f32.mrb[0].mxu0
      %783 = vdwg.mxu0
      %v784 = vadd.f32 %v663, %v747
      %v785 = vadd.f32 %v664, %v750
      %v786 = vadd.f32 %v665, %v755
      %v787 = vadd.f32 %v666, %v758
      %v788 = vadd.f32 %v667, %v763
      %v789 = vadd.f32 %v668, %v766
      %v790 = vadd.f32 %v669, %v771
      %v791 = vadd.f32 %v670, %v774
      %v792 = vadd.f32 %v671, %v779
      %v793 = vld [vmem:[%s213] sm:$0x1]
      %v795 = vlaneseq
      %v796 = vshrl.u32 %v795, 7
      %v797 = vsub.s32 0, %v796
      %v798 = vrot.slane %v793, %v797
      %v800 = vadd.f32 %v784, %v798
      %v801 = vadd.f32 %v785, %v798
      %v802 = vadd.f32 %v786, %v798
      %v803 = vadd.f32 %v787, %v798
      %v804 = vadd.f32 %v788, %v798
      %v805 = vadd.f32 %v789, %v798
      %v806 = vadd.f32 %v790, %v798
      %v807 = vadd.f32 %v791, %v798
      %v808 = vadd.f32 %v792, %v798
      %v809 = vpack.c.bf16 %v801, %v800
      %v810 = vpack.c.bf16 %v803, %v802
      %v811 = vpack.c.bf16 %v805, %v804
      %v812 = vpack.c.bf16 %v807, %v806
      %v813 = vpack.c.bf16 %v808, %v808
      %v819 = vunpack.c.l.b16 %v809
      %v820 = vunpack.c.h.b16 %v809
      %v821 = vunpack.c.l.b16 %v810
      %v822 = vunpack.c.h.b16 %v810
      %v823 = vunpack.c.l.b16 %v811
      %v824 = vunpack.c.h.b16 %v811
      %v825 = vunpack.c.l.b16 %v812
      %v826 = vunpack.c.h.b16 %v812
      %v827 = vunpack.c.l.b16 %v813
      %v828 = vpack.c.b16 %v819, %v819
      %v829 = vpack.c.b16 %v820, %v820
      %v830 = vpack.c.b16 %v821, %v821
      %v831 = vpack.c.b16 %v822, %v822
      %v832 = vpack.c.b16 %v823, %v823
      %v833 = vpack.c.b16 %v824, %v824
      %v834 = vpack.c.b16 %v825, %v825
      %v835 = vpack.c.b16 %v826, %v826
      %v836 = vpack.c.b16 %v827, %v827
      %846 = vst [vmem:[%s221] sm:$0xf] %v828
      %847 = vst [vmem:[%s221 + $0x4] sm:$0xf] %v829
      %848 = vst [vmem:[%s221 + $0x8] sm:$0xf] %v830
      %849 = vst [vmem:[%s221 + $0xc] sm:$0xf] %v831
      %850 = vst [vmem:[%s221 + $0x10] sm:$0xf] %v832
      %851 = vst [vmem:[%s221 + $0x14] sm:$0xf] %v833
      %852 = vst [vmem:[%s221 + $0x18] sm:$0xf] %v834
      %853 = vst [vmem:[%s221 + $0x1c] sm:$0xf] %v835
      %854 = vst [vmem:[%s221 + $0x20] sm:$0xf] %v836
      %p855 = scmp.lt.s32.totalorder %s18, 1
      %s856 = scalar_select %p855, %s18, 1
      %p857 = scmp.lt.s32.totalorder %s19, 0
      %s858 = scalar_select %p857, %s19, 0
      %s859 = smul.addr %s856, 9
      %s860 = sadd.s32 %s858, %s859
      %s861 = smul.addr %s860, 4
      %s862 = scalar_lea.vmem %s3, %s861
      // Predicated region
      $region33: #{_lambda_.7} parent=31 // pred_check
        %p863 = pneg %p124
      $region34: #{_lambda_.7} parent=31 // pred_check_branch
        %865 = sbr.rel (%p863) target = $region36
      $region35: #{_lambda_.7} parent=31 // pred_region
        _
      $region36: #{_lambda_.7} parent=31 // pred_fallthru
        _
    $region32: #{_lambda_.7} parent=5 // pred_fallthru
      _
    %p866 = scmp.le.s32.totalorder 2, %s9
    // Predicated region
    $region37: #{_lambda_.7} parent=5 // pred_check
      %p867 = pneg %p866
    $region38: #{_lambda_.7} parent=5 // pred_check_branch
      %869 = sbr.rel (%p867) target = $region40
    $region39: #{_lambda_.7} parent=5 // pred_region
      %s870 = ssub.s32 %s9, 2
      // Predicated region
      $region41: #{_lambda_.7} parent=39 // pred_check
        %p871 = pneg %p130
      $region42: #{_lambda_.7} parent=39 // pred_check_branch
        %873 = sbr.rel (%p871) target = $region44
      $region43: #{_lambda_.7} parent=39 // pred_region
        %p874 = scmp.lt.s32.totalorder %s20, 1
        %s875 = scalar_select %p874, %s20, 1
        %p876 = scmp.lt.s32.totalorder %s21, 0
        %s877 = scalar_select %p876, %s21, 0
        %s878 = smul.addr %s875, 9
        %s879 = sadd.s32 %s877, %s878
        %s880 = smul.addr %s879, 4
        %s881 = scalar_lea.vmem %s3, %s880
      $region44: #{_lambda_.7} parent=39 // pred_fallthru
        _
    $region40: #{_lambda_.7} parent=5 // pred_fallthru
      _
  $region6: #{_lambda_.7} parent=0 // loop_footer
    %s13 = sadd.s32 1, %s9
  $region7: #{_lambda_.7} parent=0 // loop_footer_branch
    %8 = sbr.rel target = $region3
  $region8: #{_lambda_.7} parent=0 // loop_exit
    _

// kernel: _lambda_.10
$region0: #{_lambda_.10}
  #allocation0 [shape = 'u32[]', space=smem, size = 0x4, offset = 0x4, fixed_abs, tag = 'smem constant byte address 0x4 - core index']
  #allocation1 [shape = 'u32[144,128]{1,0:T(1,128)}', space=vmem, size = 0x12000, scoped, tag = 'internal scratch']
  %s0 = inlined_call_operand.vmem [shape: bf16[2,16,32], index: 0, kind: input, shape index: {}]
  %s1 = inlined_call_operand.vmem [shape: bf16[2,16,32], index: 1, kind: output, shape index: {}]
  %s2 = sld [smem:[#allocation0]]
  $region37: #{_lambda_.10} parent=0
    _
  %s4 = ssub.s32 1, %s2
  %s5 = scalar_select 0, %s4, %s2
  loop: start=0, step=1, limit=4
  $region2: #{_lambda_.10} parent=0 // loop_pre_header
    _
  $region3: #{_lambda_.10} parent=0 // loop_header
    %s7 = sphi 0, %s11
    %p8 = scmp.ge.s32.totalorder %s7, 4
    %s17 = sphi 0, %s19
    %s20 = sphi 0, %s17
    %s21 = sphi 0, %s20
    %s37 = sphi 0, %s21
    %s43 = sphi 0, %s45
    %s46 = sphi 0, %s43
    %s47 = sphi 0, %s46
    %s63 = sphi 0, %s47
  $region4: #{_lambda_.10} parent=0 // loop_header_branch
    %10 = sbr.rel (%p8) target = $region8
  $region5: #{_lambda_.10} parent=0 // loop_body
    %s12 = ssub.s32 %s7, 1
    %s13 = ssub.s32 %s7, 2
    %s14 = sadd.s32 %s7, 1
    %s15 = ssub.s32 %s7, %s14
    %p16 = scmp.eq.s32.totalorder %s15, 0
    %s18 = sadd.s32 %s17, 1
    %s19 = scalar_select %p16, %s17, %s18
    %p22 = pneg %p16
    %p23 = scmp.eq.s32.totalorder %s7, 1
    %p24 = por %p22, %p23
    %p25 = scmp.ne.s32.totalorder %s17, %s20
    %p26 = scmp.eq.s32.totalorder %s7, 0
    %p27 = por %p25, %p26
    %p28 = scmp.ne.s32.totalorder %s17, %s20
    %p29 = scmp.eq.s32.totalorder %s12, 1
    %p30 = por %p28, %p29
    %p31 = scmp.ne.s32.totalorder %s20, %s21
    %p32 = scmp.eq.s32.totalorder %s12, 0
    %p33 = por %p31, %p32
    %p34 = scmp.ne.s32.totalorder %s20, %s21
    %p35 = scmp.eq.s32.totalorder %s13, 1
    %p36 = por %p34, %p35
    %p38 = scmp.ne.s32.totalorder %s21, %s37
    %p39 = scmp.eq.s32.totalorder %s13, 0
    %p40 = por %p38, %p39
    %s41 = ssub.s32 %s7, %s14
    %p42 = scmp.eq.s32.totalorder %s41, 0
    %s44 = sadd.s32 %s43, 1
    %s45 = scalar_select %p42, %s43, %s44
    %p48 = pneg %p42
    %p49 = scmp.eq.s32.totalorder %s7, 1
    %p50 = por %p48, %p49
    %p51 = scmp.ne.s32.totalorder %s43, %s46
    %p52 = scmp.eq.s32.totalorder %s7, 0
    %p53 = por %p51, %p52
    %p54 = scmp.ne.s32.totalorder %s43, %s46
    %p55 = scmp.eq.s32.totalorder %s12, 1
    %p56 = por %p54, %p55
    %p57 = scmp.ne.s32.totalorder %s46, %s47
    %p58 = scmp.eq.s32.totalorder %s12, 0
    %p59 = por %p57, %p58
    %p60 = scmp.ne.s32.totalorder %s46, %s47
    %p61 = scmp.eq.s32.totalorder %s13, 1
    %p62 = por %p60, %p61
    %p64 = scmp.ne.s32.totalorder %s47, %s63
    %p65 = scmp.eq.s32.totalorder %s13, 0
    %p66 = por %p64, %p65
    %p67 = scmp.le.s32.totalorder 1, %s7
    %p68 = scmp.lt.s32.totalorder %s7, 3
    %p69 = pnand %p67, %p68
    %p70 = pneg %p69
    // Predicated region
    $region9: #{_lambda_.10} parent=5 // pred_check
      _
    $region10: #{_lambda_.10} parent=5 // pred_check_branch
      %72 = sbr.rel (%p69) target = $region12
    $region11: #{_lambda_.10} parent=5 // pred_region
      %s73 = ssub.s32 %s7, 1
    $region12: #{_lambda_.10} parent=5 // pred_fallthru
      _
    %p74 = scmp.lt.s32.totalorder %s7, 2
    // Predicated region
    $region13: #{_lambda_.10} parent=5 // pred_check
      %p75 = pneg %p74
    $region14: #{_lambda_.10} parent=5 // pred_check_branch
      %77 = sbr.rel (%p75) target = $region16
    $region15: #{_lambda_.10} parent=5 // pred_region
      // Predicated region
      $region17: #{_lambda_.10} parent=15 // pred_check
        %p78 = pneg %p27
      $region18: #{_lambda_.10} parent=15 // pred_check_branch
        %80 = sbr.rel (%p78) target = $region20
      $region19: #{_lambda_.10} parent=15 // pred_region
        %p81 = scmp.lt.s32.totalorder %s7, 1
        %s82 = scalar_select %p81, %s7, 1
        %s83 = smul.addr %s82, 2
        %s84 = smul.addr %s83, 4
        %s85 = scalar_lea.vmem %s0, %s84
      $region20: #{_lambda_.10} parent=15 // pred_fallthru
        _
    $region16: #{_lambda_.10} parent=5 // pred_fallthru
      _
    %p86 = scmp.le.s32.totalorder 1, %s7
    %p87 = scmp.lt.s32.totalorder %s7, 3
    %p88 = pnand %p86, %p87
    %p89 = pneg %p88
    // Predicated region
    $region21: #{_lambda_.10} parent=5 // pred_check
      _
    $region22: #{_lambda_.10} parent=5 // pred_check_branch
      %91 = sbr.rel (%p88) target = $region24
    $region23: #{_lambda_.10} parent=5 // pred_region
      %s92 = ssub.s32 %s7, 1
      %p93 = scmp.lt.s32.totalorder %s12, 1
      %s94 = scalar_select %p93, %s12, 1
      %s95 = smul.addr %s94, 2
      %s96 = smul.addr %s95, 4
      %s97 = scalar_lea.vmem %s0, %s96
      %p98 = pneg %p33
      %p99 = pneg %p30
      %p100 = pneg %p59
      %p101 = pneg %p56
      %p102 = scmp.lt.s32.totalorder %s12, 1
      %s103 = scalar_select %p102, %s12, 1
      %s104 = smul.addr %s103, 2
      %s105 = smul.addr %s104, 4
      %s106 = scalar_lea.vmem %s1, %s105
      %p107 = scmp.lt.s32.totalorder %s12, 1
      %s108 = scalar_select %p107, %s12, 1
      %s109 = smul.addr %s108, 2
      %s110 = smul.addr %s109, 4
      %s111 = scalar_lea.vmem %s0, %s110
      %p112 = scmp.lt.s32.totalorder %s12, 1
      %s113 = scalar_select %p112, %s12, 1
      %s114 = smul.addr %s113, 2
      %s115 = smul.addr %s114, 4
      %s116 = scalar_lea.vmem %s1, %s115
      %v117 = vld [vmem:[%s111] sm:$0xf]
      %v118 = vld [vmem:[%s111 + $0x4] sm:$0xf]
      %v119 = vunpack.c.l.bf16 %v117
      %v120 = vunpack.c.l.bf16 %v118
      %vm121 = vcmask 261120
      %v122 = vsel %vm121, %v119, 0.0
      %v123 = vsel %vm121, %v120, 0.0
      %v124 = vadd.f32 %v122, %v123
      %v125 = vrot.slane %v124, 4
      %v126 = vadd.f32 %v124, %v125
      %v127 = vrot.slane %v126, 2
      %v128 = vadd.f32 %v126, %v127
      %v129 = vrot.slane %v128, 1
      %v130 = vadd.f32 %v128, %v129
      %v131 = vmul.f32 %v119, %v119
      %v132 = vmul.f32 %v120, %v120
      %v133 = vsel %vm121, %v131, 0.0
      %v134 = vsel %vm121, %v132, 0.0
      %v135 = vadd.f32 %v133, %v134
      %v136 = vrot.slane %v135, 4
      %v137 = vadd.f32 %v135, %v136
      %v138 = vrot.slane %v137, 2
      %v139 = vadd.f32 %v137, %v138
      %v140 = vrot.slane %v139, 1
      %v141 = vadd.f32 %v139, %v140
      %v142 = vmul.f32 %v130, 0.0625
      %v143 = vmul.f32 %v141, 0.0625
      %v144 = vmul.f32 %v142, %v142
      %v145 = vsub.f32 %v143, %v144
      %v146 = vsub.f32 %v119, %v142
      %v147 = vsub.f32 %v120, %v142
      %v148 = vadd.f32 %v145, 1e-05
      %v149 = vrsqrt.pop %v148
      %v150 = vmul.f32 %v146, %v149
      %v151 = vmul.f32 %v147, %v149
      %vm152 = vcmp.gt.f32.partialorder %v150, 0.0
      %vm153 = vcmp.gt.f32.partialorder %v151, 0.0
      %v154 = vmul.f32 %v150, 0.2
      %v155 = vmul.f32 %v151, 0.2
      %v156 = vsel %vm152, %v150, %v154
      %v157 = vsel %vm153, %v151, %v155
      %v158 = vpack.c.bf16 %v157, %v156
      %v160 = vunpack.c.l.b16 %v158
      %v161 = vunpack.c.h.b16 %v158
      %v162 = vpack.c.b16 %v160, %v160
      %v163 = vpack.c.b16 %v161, %v161
      %vm166 = vcmask 257024
      %167 = vst.msk [vmem:[%s116] sm:$0xf] %vm166, %v162
      %168 = vst.msk [vmem:[%s116 + $0x4] sm:$0xf] %vm166, %v163
      %p169 = scmp.lt.s32.totalorder %s12, 1
      %s170 = scalar_select %p169, %s12, 1
      %s171 = smul.addr %s170, 2
      %s172 = smul.addr %s171, 4
      %s173 = scalar_lea.vmem %s1, %s172
      // Predicated region
      $region25: #{_lambda_.10} parent=23 // pred_check
        %p174 = pneg %p56
      $region26: #{_lambda_.10} parent=23 // pred_check_branch
        %176 = sbr.rel (%p174) target = $region28
      $region27: #{_lambda_.10} parent=23 // pred_region
        _
      $region28: #{_lambda_.10} parent=23 // pred_fallthru
        _
    $region24: #{_lambda_.10} parent=5 // pred_fallthru
      _
    %p177 = scmp.le.s32.totalorder 2, %s7
    // Predicated region
    $region29: #{_lambda_.10} parent=5 // pred_check
      %p178 = pneg %p177
    $region30: #{_lambda_.10} parent=5 // pred_check_branch
      %180 = sbr.rel (%p178) target = $region32
    $region31: #{_lambda_.10} parent=5 // pred_region
      %s181 = ssub.s32 %s7, 2
      // Predicated region
      $region33: #{_lambda_.10} parent=31 // pred_check
        %p182 = pneg %p62
      $region34: #{_lambda_.10} parent=31 // pred_check_branch
        %184 = sbr.rel (%p182) target = $region36
      $region35: #{_lambda_.10} parent=31 // pred_region
        %p185 = scmp.lt.s32.totalorder %s13, 1
        %s186 = scalar_select %p185, %s13, 1
        %s187 = smul.addr %s186, 2
        %s188 = smul.addr %s187, 4
        %s189 = scalar_lea.vmem %s1, %s188
      $region36: #{_lambda_.10} parent=31 // pred_fallthru
        _
    $region32: #{_lambda_.10} parent=5 // pred_fallthru
      _
  $region6: #{_lambda_.10} parent=0 // loop_footer
    %s11 = sadd.s32 1, %s7
  $region7: #{_lambda_.10} parent=0 // loop_footer_branch
    %6 = sbr.rel target = $region3
  $region8: #{_lambda_.10} parent=0 // loop_exit
    _

// kernel: _lambda_.9
$region0: #{_lambda_.9}
  #allocation0 [shape = 'u32[]', space=smem, size = 0x4, offset = 0x4, fixed_abs, tag = 'smem constant byte address 0x4 - core index']
  #allocation1 [shape = 'u32[144,128]{1,0:T(1,128)}', space=vmem, size = 0x12000, scoped, tag = 'internal scratch']
  %s0 = inlined_call_operand.vmem [shape: bf16[2,30,64], index: 0, kind: input, shape index: {}]
  %s1 = inlined_call_operand.vmem [shape: bf16[256,128], index: 1, kind: input, shape index: {}]
  %s2 = inlined_call_operand.vmem [shape: f32[1,128], index: 2, kind: input, shape index: {}]
  %s3 = inlined_call_operand.vmem [shape: bf16[2,20,128], index: 3, kind: output, shape index: {}]
  %s4 = sld [smem:[#allocation0]]
  $region45: #{_lambda_.9} parent=0
    _
  %s6 = ssub.s32 1, %s4
  %s7 = scalar_select 0, %s6, %s4
  loop: start=0, step=1, limit=4
  $region2: #{_lambda_.9} parent=0 // loop_pre_header
    _
  $region3: #{_lambda_.9} parent=0 // loop_header
    %s9 = sphi 0, %s13
    %p10 = scmp.ge.s32.totalorder %s9, 4
    %s16 = sphi 0, %s28
    %s17 = sphi 0, %s24
    %s18 = sphi 0, %s16
    %s19 = sphi 0, %s17
    %s20 = sphi 0, %s18
    %s21 = sphi 0, %s19
    %s31 = sphi 0, %s33
    %s34 = sphi 0, %s31
    %s35 = sphi 0, %s34
    %s51 = sphi 0, %s35
    %s57 = sphi 0, %s59
    %s60 = sphi 0, %s57
    %s61 = sphi 0, %s60
    %s77 = sphi 0, %s61
    %s83 = sphi 0, %s85
    %s86 = sphi 0, %s83
    %s87 = sphi 0, %s86
    %s103 = sphi 0, %s87
    %s111 = sphi 0, %s113
    %s114 = sphi 0, %s111
    %s115 = sphi 0, %s114
    %s131 = sphi 0, %s115
  $region4: #{_lambda_.9} parent=0 // loop_header_branch
    %12 = sbr.rel (%p10) target = $region8
  $region5: #{_lambda_.9} parent=0 // loop_body
    %s14 = ssub.s32 %s9, 1
    %s15 = ssub.s32 %s9, 2
    %s22 = sadd.s32 1, %s17
    %p23 = scmp.ge.s32.totalorder %s22, 1
    %s24 = scalar_select %p23, 0, %s22
    %s25 = sadd.s32 1, %s16
    %s26 = scalar_select %p23, %s25, %s16
    %p27 = scmp.ge.s32.totalorder %s26, 2
    %s28 = scalar_select %p27, 0, %s26
    %s29 = ssub.s32 %s16, %s28
    %p30 = scmp.eq.s32.totalorder %s29, 0
    %s32 = sadd.s32 %s31, 1
    %s33 = scalar_select %p30, %s31, %s32
    %p36 = pneg %p30
    %p37 = scmp.eq.s32.totalorder %s9, 1
    %p38 = por %p36, %p37
    %p39 = scmp.ne.s32.totalorder %s31, %s34
    %p40 = scmp.eq.s32.totalorder %s9, 0
    %p41 = por %p39, %p40
    %p42 = scmp.ne.s32.totalorder %s31, %s34
    %p43 = scmp.eq.s32.totalorder %s14, 1
    %p44 = por %p42, %p43
    %p45 = scmp.ne.s32.totalorder %s34, %s35
    %p46 = scmp.eq.s32.totalorder %s14, 0
    %p47 = por %p45, %p46
    %p48 = scmp.ne.s32.totalorder %s34, %s35
    %p49 = scmp.eq.s32.totalorder %s15, 1
    %p50 = por %p48, %p49
    %p52 = scmp.ne.s32.totalorder %s35, %s51
    %p53 = scmp.eq.s32.totalorder %s15, 0
    %p54 = por %p52, %p53
    %s55 = ssub.s32 %s17, %s24
    %p56 = scmp.eq.s32.totalorder %s55, 0
    %s58 = sadd.s32 %s57, 1
    %s59 = scalar_select %p56, %s57, %s58
    %p62 = pneg %p56
    %p63 = scmp.eq.s32.totalorder %s9, 1
    %p64 = por %p62, %p63
    %p65 = scmp.ne.s32.totalorder %s57, %s60
    %p66 = scmp.eq.s32.totalorder %s9, 0
    %p67 = por %p65, %p66
    %p68 = scmp.ne.s32.totalorder %s57, %s60
    %p69 = scmp.eq.s32.totalorder %s14, 1
    %p70 = por %p68, %p69
    %p71 = scmp.ne.s32.totalorder %s60, %s61
    %p72 = scmp.eq.s32.totalorder %s14, 0
    %p73 = por %p71, %p72
    %p74 = scmp.ne.s32.totalorder %s60, %s61
    %p75 = scmp.eq.s32.totalorder %s15, 1
    %p76 = por %p74, %p75
    %p78 = scmp.ne.s32.totalorder %s61, %s77
    %p79 = scmp.eq.s32.totalorder %s15, 0
    %p80 = por %p78, %p79
    %s81 = ssub.s32 %s17, %s24
    %p82 = scmp.eq.s32.totalorder %s81, 0
    %s84 = sadd.s32 %s83, 1
    %s85 = scalar_select %p82, %s83, %s84
    %p88 = pneg %p82
    %p89 = scmp.eq.s32.totalorder %s9, 1
    %p90 = por %p88, %p89
    %p91 = scmp.ne.s32.totalorder %s83, %s86
    %p92 = scmp.eq.s32.totalorder %s9, 0
    %p93 = por %p91, %p92
    %p94 = scmp.ne.s32.totalorder %s83, %s86
    %p95 = scmp.eq.s32.totalorder %s14, 1
    %p96 = por %p94, %p95
    %p97 = scmp.ne.s32.totalorder %s86, %s87
    %p98 = scmp.eq.s32.totalorder %s14, 0
    %p99 = por %p97, %p98
    %p100 = scmp.ne.s32.totalorder %s86, %s87
    %p101 = scmp.eq.s32.totalorder %s15, 1
    %p102 = por %p100, %p101
    %p104 = scmp.ne.s32.totalorder %s87, %s103
    %p105 = scmp.eq.s32.totalorder %s15, 0
    %p106 = por %p104, %p105
    %s107 = ssub.s32 %s16, %s28
    %s108 = ssub.s32 %s17, %s24
    %s109 = sor.u32 %s107, %s108
    %p110 = scmp.eq.s32.totalorder %s109, 0
    %s112 = sadd.s32 %s111, 1
    %s113 = scalar_select %p110, %s111, %s112
    %p116 = pneg %p110
    %p117 = scmp.eq.s32.totalorder %s9, 1
    %p118 = por %p116, %p117
    %p119 = scmp.ne.s32.totalorder %s111, %s114
    %p120 = scmp.eq.s32.totalorder %s9, 0
    %p121 = por %p119, %p120
    %p122 = scmp.ne.s32.totalorder %s111, %s114
    %p123 = scmp.eq.s32.totalorder %s14, 1
    %p124 = por %p122, %p123
    %p125 = scmp.ne.s32.totalorder %s114, %s115
    %p126 = scmp.eq.s32.totalorder %s14, 0
    %p127 = por %p125, %p126
    %p128 = scmp.ne.s32.totalorder %s114, %s115
    %p129 = scmp.eq.s32.totalorder %s15, 1
    %p130 = por %p128, %p129
    %p132 = scmp.ne.s32.totalorder %s115, %s131
    %p133 = scmp.eq.s32.totalorder %s15, 0
    %p134 = por %p132, %p133
    %p135 = scmp.le.s32.totalorder 1, %s9
    %p136 = scmp.lt.s32.totalorder %s9, 3
    %p137 = pnand %p135, %p136
    %p138 = pneg %p137
    // Predicated region
    $region9: #{_lambda_.9} parent=5 // pred_check
      _
    $region10: #{_lambda_.9} parent=5 // pred_check_branch
      %140 = sbr.rel (%p137) target = $region12
    $region11: #{_lambda_.9} parent=5 // pred_region
      %s141 = ssub.s32 %s9, 1
      // Predicated region
      $region13: #{_lambda_.9} parent=11 // pred_check
        %p142 = pneg %p73
      $region14: #{_lambda_.9} parent=11 // pred_check_branch
        %144 = sbr.rel (%p142) target = $region16
      $region15: #{_lambda_.9} parent=11 // pred_region
        %p145 = scmp.lt.s32.totalorder %s19, 0
        %s146 = scalar_select %p145, %s19, 0
        %s147 = smul.addr %s146, 4
        %s148 = scalar_lea.vmem %s1, %s147
      $region16: #{_lambda_.9} parent=11 // pred_fallthru
        _
      // Predicated region
      $region17: #{_lambda_.9} parent=11 // pred_check
        %p149 = pneg %p99
      $region18: #{_lambda_.9} parent=11 // pred_check_branch
        %151 = sbr.rel (%p149) target = $region20
      $region19: #{_lambda_.9} parent=11 // pred_region
        %p152 = scmp.lt.s32.totalorder %s19, 0
        %s153 = scalar_select %p152, %s19, 0
        %s154 = scalar_lea.vmem %s2, %s153
      $region20: #{_lambda_.9} parent=11 // pred_fallthru
        _
    $region12: #{_lambda_.9} parent=5 // pred_fallthru
      _
    %p155 = scmp.lt.s32.totalorder %s9, 2
    // Predicated region
    $region21: #{_lambda_.9} parent=5 // pred_check
      %p156 = pneg %p155
    $region22: #{_lambda_.9} parent=5 // pred_check_branch
      %158 = sbr.rel (%p156) target = $region24
    $region23: #{_lambda_.9} parent=5 // pred_region
      // Predicated region
      $region25: #{_lambda_.9} parent=23 // pred_check
        %p159 = pneg %p41
      $region26: #{_lambda_.9} parent=23 // pred_check_branch
        %161 = sbr.rel (%p159) target = $region28
      $region27: #{_lambda_.9} parent=23 // pred_region
        %p162 = scmp.lt.s32.totalorder %s16, 1
        %s163 = scalar_select %p162, %s16, 1
        %s164 = smul.addr %s163, 4
        %s165 = smul.addr %s164, 4
        %s166 = scalar_lea.vmem %s0, %s165
      $region28: #{_lambda_.9} parent=23 // pred_fallthru
        _
    $region24: #{_lambda_.9} parent=5 // pred_fallthru
      _
    %p167 = scmp.le.s32.totalorder 1, %s9
    %p168 = scmp.lt.s32.totalorder %s9, 3
    %p169 = pnand %p167, %p168
    %p170 = pneg %p169
    // Predicated region
    $region29: #{_lambda_.9} parent=5 // pred_check
      _
    $region30: #{_lambda_.9} parent=5 // pred_check_branch
      %172 = sbr.rel (%p169) target = $region32
    $region31: #{_lambda_.9} parent=5 // pred_region
      %s173 = ssub.s32 %s9, 1
      %p174 = scmp.lt.s32.totalorder %s18, 1
      %s175 = scalar_select %p174, %s18, 1
      %s176 = smul.addr %s175, 4
      %s177 = smul.addr %s176, 4
      %s178 = scalar_lea.vmem %s0, %s177
      %p179 = pneg %p47
      %p180 = pneg %p44
      %p181 = scmp.lt.s32.totalorder %s19, 0
      %s182 = scalar_select %p181, %s19, 0
      %s183 = smul.addr %s182, 4
      %s184 = scalar_lea.vmem %s1, %s183
      %p185 = pneg %p73
      %p186 = pneg %p70
      %p187 = scmp.lt.s32.totalorder %s19, 0
      %s188 = scalar_select %p187, %s19, 0
      %s189 = scalar_lea.vmem %s2, %s188
      %p190 = pneg %p99
      %p191 = pneg %p96
      %p192 = pneg %p127
      %p193 = pneg %p124
      %p194 = scmp.lt.s32.totalorder %s18, 1
      %s195 = scalar_select %p194, %s18, 1
      %p196 = scmp.lt.s32.totalorder %s19, 0
      %s197 = scalar_select %p196, %s19, 0
      %s198 = smul.addr %s195, 3
      %s199 = sadd.s32 %s197, %s198
      %s200 = smul.addr %s199, 4
      %s201 = scalar_lea.vmem %s3, %s200
      %p202 = scmp.lt.s32.totalorder %s18, 1
      %s203 = scalar_select %p202, %s18, 1
      %s204 = smul.addr %s203, 4
      %s205 = smul.addr %s204, 4
      %s206 = scalar_lea.vmem %s0, %s205
      %p207 = scmp.lt.s32.totalorder %s19, 0
      %s208 = scalar_select %p207, %s19, 0
      %s209 = smul.addr %s208, 4
      %s210 = scalar_lea.vmem %s1, %s209
      %p211 = scmp.lt.s32.totalorder %s19, 0
      %s212 = scalar_select %p211, %s19, 0
      %s213 = scalar_lea.vmem %s2, %s212
      %p214 = scmp.lt.s32.totalorder %s18, 1
      %s215 = scalar_select %p214, %s18, 1
      %p216 = scmp.lt.s32.totalorder %s19, 0
      %s217 = scalar_select %p216, %s19, 0
      %s218 = smul.addr %s215, 3
      %s219 = sadd.s32 %s217, %s218
      %s220 = smul.addr %s219, 4
      %s221 = scalar_lea.vmem %s3, %s220
      %v223 = vld [vmem:[%s206] sm:$0xf]
      %v224 = vld [vmem:[%s206 + $0x4] sm:$0xf]
      %v225 = vld [vmem:[%s206 + $0x8] sm:$0x3]
      %v226 = vld [vmem:[%s210] sm:$0xf]
      %v227 = vld [vmem:[%s210 + $0x4] sm:$0xf]
      %v228 = vld [vmem:[%s210 + $0x8] sm:$0xf]
      %v229 = vld [vmem:[%s210 + $0xc] sm:$0xf]
      %v230 = vld [vmem:[%s210 + $0x10] sm:$0xf]
      %v231 = vld [vmem:[%s210 + $0x14] sm:$0xf]
      %v232 = vld [vmem:[%s210 + $0x18] sm:$0xf]
      %v233 = vld [vmem:[%s210 + $0x1c] sm:$0xf]
      %v234 = vld [vmem:[%s206 + $0x8] sm:$0x7]
      %v235 = vld [vmem:[%s210 + $0x20] sm:$0xf]
      %v236 = vld [vmem:[%s210 + $0x24] sm:$0xf]
      %v237 = vld [vmem:[%s210 + $0x28] sm:$0xf]
      %v238 = vld [vmem:[%s210 + $0x2c] sm:$0xf]
      %v239 = vld [vmem:[%s210 + $0x30] sm:$0xf]
      %v240 = vld [vmem:[%s210 + $0x34] sm:$0xf]
      %v241 = vld [vmem:[%s210 + $0x38] sm:$0xf]
      %v242 = vld [vmem:[%s210 + $0x3c] sm:$0xf]
      %v246 = vunpack.c.l.b16 %v223
      %v247 = vunpack.c.l.b16 %v224
      %v248 = vunpack.c.l.b16 %v234
      %v249 = vpack.c.b16 %v247, %v246
      %v250 = vpack.c.b16 %v248, %v248
      %vm251 = vsmask.f32 7424
      %v253 = vshrl.u32 %v249, 16
      %v255 = vshll.u32 %v249, 16
      %v257 = vrot.slane %v255, 1
      %v258 = vor.u32 %v253, %v257
      %v260 = vshll.u32 %v250, 16
      %v262 = vrot.slane %v260, 1
      %v263 = vsel %vm251, %v258, %v262
      %v264 = vshrl.u32 %v250, 16
      %v266 = vor.u32 %v264, %v262
      %v275 = vunpack.c.l.b16 %v235
      %v276 = vunpack.c.l.b16 %v236
      %v277 = vunpack.c.l.b16 %v237
      %v278 = vunpack.c.l.b16 %v238
      %v279 = vunpack.c.l.b16 %v239
      %v280 = vunpack.c.l.b16 %v240
      %v281 = vunpack.c.l.b16 %v241
      %v282 = vunpack.c.l.b16 %v242
      %v283 = vpack.c.b16 %v276, %v275
      %v284 = vpack.c.b16 %v278, %v277
      %v285 = vpack.c.b16 %v280, %v279
      %v286 = vpack.c.b16 %v282, %v281
      %vm291 = vcmask 523264
      %v293 = vsel %vm291, %v263, 0
      %v296 = vsel %vm291, %v266, 0
      %298 = vmatprep.subr.bf16.mxu0 0
      %299 = vmatpush1.bf16.msra.mxu0 %v283
      %300 = vmatprep.subr.bf16.mxu0 0
      %301 = vmatpush1.bf16.msra.mxu0 %v284
      %302 = vmatprep.subr.bf16.mxu0 0
      %303 = vmatpush1.bf16.msra.mxu0 %v285
      %304 = vmatprep.subr.bf16.mxu0 0
      %305 = vmatpush1.bf16.msra.mxu0 %v286
      %306 = vmatprep.subr.bf16.mxu0 0
      %307 = vmatpush1.bf16.msra.mxu0 0
      %308 = vmatprep.subr.bf16.mxu0 0
      %309 = vmatpush1.bf16.msra.mxu0 0
      %310 = vmatprep.subr.bf16.mxu0 0
      %311 = vmatpush1.bf16.msra.mxu0 0
      %312 = vmatprep.subr.bf16.mxu0 0
      %313 = vmatpush1.bf16.msra.mxu0 0
      %314 = vmatprep.subr.bf16.mxu0 0
      %315 = vmatpush1.bf16.msra.mxu0 0
      %316 = vmatprep.subr.bf16.mxu0 0
      %317 = vmatpush1.bf16.msra.mxu0 0
      %318 = vmatprep.subr.bf16.mxu0 0
      %319 = vmatpush1.bf16.msra.mxu0 0
      %320 = vmatprep.subr.bf16.mxu0 0
      %321 = vmatpush1.bf16.msra.mxu0 0
      %322 = vmatprep.subr.bf16.mxu0 0
      %323 = vmatpush1.bf16.msra.mxu0 0
      %324 = vmatprep.subr.bf16.mxu0 0
      %325 = vmatpush1.bf16.msra.mxu0 0
      %326 = vmatprep.subr.bf16.mxu0 0
      %327 = vmatpush1.bf16.msra.mxu0 0
      %328 = vmatprep.subr.bf16.mxu0 0
      %329 = vmatpush1.bf16.msra.mxu0 0
      %330 = vmatprep.mubr.bf16.mxu0 0
      %331 = vmatmul.mubr.bf16.gmra.mrb[0].mxu0 %v293
      %v332 = vpop.f32.mrb[0].mxu0
      %v333 = vadd.f32 0.0, %v332
      %v334 = vpop.f32.mrb[0].mxu0
      %v335 = vpop.f32.mrb[0].mxu0
      %v336 = vadd.f32 0.0, %v335
      %v337 = vpop.f32.mrb[0].mxu0
      %338 = vmatprep.mubr.bf16.mxu0 0
      %339 = vmatmul.mubr.bf16.gmra.mrb[0].mxu0 %v296
      %v340 = vpop.f32.mrb[0].mxu0
      %v341 = vadd.f32 0.0, %v340
      %v342 = vpop.f32.mrb[0].mxu0
      %v343 = vpop.f32.mrb[0].mxu0
      %v344 = vpop.f32.mrb[0].mxu0
      %345 = vdwg.mxu0
      %v347 = vunpack.c.l.b16 %v225
      %v348 = vpack.c.b16 %v347, %v347
      %v357 = vunpack.c.l.b16 %v226
      %v358 = vunpack.c.l.b16 %v227
      %v359 = vunpack.c.l.b16 %v228
      %v360 = vunpack.c.l.b16 %v229
      %v361 = vunpack.c.l.b16 %v230
      %v362 = vunpack.c.l.b16 %v231
      %v363 = vunpack.c.l.b16 %v232
      %v364 = vunpack.c.l.b16 %v233
      %v365 = vpack.c.b16 %v358, %v357
      %v366 = vpack.c.b16 %v360, %v359
      %v367 = vpack.c.b16 %v362, %v361
      %v368 = vpack.c.b16 %v364, %v363
      %v373 = vsel %vm291, %v249, 0
      %v376 = vsel %vm291, %v348, 0
      %378 = vmatprep.subr.bf16.mxu0 0
      %379 = vmatpush1.bf16.msra.mxu0 %v365
      %380 = vmatprep.subr.bf16.mxu0 0
      %381 = vmatpush1.bf16.msra.mxu0 %v366
      %382 = vmatprep.subr.bf16.mxu0 0
      %383 = vmatpush1.bf16.msra.mxu0 %v367
      %384 = vmatprep.subr.bf16.mxu0 0
      %385 = vmatpush1.bf16.msra.mxu0 %v368
      %386 = vmatprep.subr.bf16.mxu0 0
      %387 = vmatpush1.bf16.msra.mxu0 0
      %388 = vmatprep.subr.bf16.mxu0 0
      %389 = vmatpush1.bf16.msra.mxu0 0
      %390 = vmatprep.subr.bf16.mxu0 0
      %391 = vmatpush1.bf16.msra.mxu0 0
      %392 = vmatprep.subr.bf16.mxu0 0
      %393 = vmatpush1.bf16.msra.mxu0 0
      %394 = vmatprep.subr.bf16.mxu0 0
      %395 = vmatpush1.bf16.msra.mxu0 0
      %396 = vmatprep.subr.bf16.mxu0 0
      %397 = vmatpush1.bf16.msra.mxu0 0
      %398 = vmatprep.subr.bf16.mxu0 0
      %399 = vmatpush1.bf16.msra.mxu0 0
      %400 = vmatprep.subr.bf16.mxu0 0
      %401 = vmatpush1.bf16.msra.mxu0 0
      %402 = vmatprep.subr.bf16.mxu0 0
      %403 = vmatpush1.bf16.msra.mxu0 0
      %404 = vmatprep.subr.bf16.mxu0 0
      %405 = vmatpush1.bf16.msra.mxu0 0
      %406 = vmatprep.subr.bf16.mxu0 0
      %407 = vmatpush1.bf16.msra.mxu0 0
      %408 = vmatprep.subr.bf16.mxu0 0
      %409 = vmatpush1.bf16.msra.mxu0 0
      %410 = vmatprep.mubr.bf16.mxu0 0
      %411 = vmatmul.mubr.bf16.gmra.mrb[0].mxu0 %v373
      %v412 = vpop.f32.mrb[0].mxu0
      %v413 = vadd.f32 %v333, %v412
      %v414 = vpop.f32.mrb[0].mxu0
      %v415 = vpop.f32.mrb[0].mxu0
      %v416 = vadd.f32 %v336, %v415
      %v417 = vpop.f32.mrb[0].mxu0
      %418 = vmatprep.mubr.bf16.mxu0 0
      %419 = vmatmul.mubr.bf16.gmra.mrb[0].mxu0 %v376
      %v420 = vpop.f32.mrb[0].mxu0
      %v421 = vadd.f32 %v341, %v420
      %v422 = vpop.f32.mrb[0].mxu0
      %v423 = vpop.f32.mrb[0].mxu0
      %v424 = vpop.f32.mrb[0].mxu0
      %425 = vdwg.mxu0
      %v426 = vld [vmem:[%s206] sm:$0xc]
      %v427 = vld [vmem:[%s206 + $0x4] sm:$0xf]
      %v428 = vld [vmem:[%s206 + $0x8] sm:$0xf]
      %v429 = vld [vmem:[%s206 + $0xc] sm:$0x1]
      %v430 = vld [vmem:[%s210 + $0x40] sm:$0xf]
      %v431 = vld [vmem:[%s210 + $0x44] sm:$0xf]
      %v432 = vld [vmem:[%s210 + $0x48] sm:$0xf]
      %v433 = vld [vmem:[%s210 + $0x4c] sm:$0xf]
      %v434 = vld [vmem:[%s210 + $0x50] sm:$0xf]
      %v435 = vld [vmem:[%s210 + $0x54] sm:$0xf]
      %v436 = vld [vmem:[%s210 + $0x58] sm:$0xf]
      %v437 = vld [vmem:[%s210 + $0x5c] sm:$0xf]
      %v442 = vunpack.c.l.b16 %v426
      %v443 = vunpack.c.l.b16 %v427
      %v444 = vunpack.c.l.b16 %v428
      %v445 = vunpack.c.l.b16 %v429
      %v446 = vpack.c.b16 %v443, %v442
      %v447 = vpack.c.b16 %v445, %v444
      %vm448 = vsmask.f32 5376
      %v450 = vshrl.u32 %v446, 16
      %v452 = vrot.slane %v450, 2
      %v453 = vshll.u32 %v446, 16
      %v455 = vrot.slane %v453, 3
      %v456 = vor.u32 %v452, %v455
      %v458 = vshrl.u32 %v447, 16
      %v460 = vrot.slane %v458, 2
      %v461 = vshll.u32 %v447, 16
      %v463 = vrot.slane %v461, 3
      %v464 = vor.u32 %v460, %v463
      %v465 = vsel %vm448, %v456, %v464
      %v474 = vunpack.c.l.b16 %v430
      %v475 = vunpack.c.l.b16 %v431
      %v476 = vunpack.c.l.b16 %v432
      %v477 = vunpack.c.l.b16 %v433
      %v478 = vunpack.c.l.b16 %v434
      %v479 = vunpack.c.l.b16 %v435
      %v480 = vunpack.c.l.b16 %v436
      %v481 = vunpack.c.l.b16 %v437
      %v482 = vpack.c.b16 %v475, %v474
      %v483 = vpack.c.b16 %v477, %v476
      %v484 = vpack.c.b16 %v479, %v478
      %v485 = vpack.c.b16 %v481, %v480
      %v491 = vsel %vm291, %v465, 0
      %v494 = vsel %vm291, %v464, 0
      %496 = vmatprep.subr.bf16.mxu0 0
      %497 = vmatpush1.bf16.msra.mxu0 %v482
      %498 = vmatprep.subr.bf16.mxu0 0
      %499 = vmatpush1.bf16.msra.mxu0 %v483
      %500 = vmatprep.subr.bf16.mxu0 0
      %501 = vmatpush1.bf16.msra.mxu0 %v484
      %502 = vmatprep.subr.bf16.mxu0 0
      %503 = vmatpush1.bf16.msra.mxu0 %v485
      %504 = vmatprep.subr.bf16.mxu0 0
      %505 = vmatpush1.bf16.msra.mxu0 0
      %506 = vmatprep.subr.bf16.mxu0 0
      %507 = vmatpush1.bf16.msra.mxu0 0
      %508 = vmatprep.subr.bf16.mxu0 0
      %509 = vmatpush1.bf16.msra.mxu0 0
      %510 = vmatprep.subr.bf16.mxu0 0
      %511 = vmatpush1.bf16.msra.mxu0 0
      %512 = vmatprep.subr.bf16.mxu0 0
      %513 = vmatpush1.bf16.msra.mxu0 0
      %514 = vmatprep.subr.bf16.mxu0 0
      %515 = vmatpush1.bf16.msra.mxu0 0
      %516 = vmatprep.subr.bf16.mxu0 0
      %517 = vmatpush1.bf16.msra.mxu0 0
      %518 = vmatprep.subr.bf16.mxu0 0
      %519 = vmatpush1.bf16.msra.mxu0 0
      %520 = vmatprep.subr.bf16.mxu0 0
      %521 = vmatpush1.bf16.msra.mxu0 0
      %522 = vmatprep.subr.bf16.mxu0 0
      %523 = vmatpush1.bf16.msra.mxu0 0
      %524 = vmatprep.subr.bf16.mxu0 0
      %525 = vmatpush1.bf16.msra.mxu0 0
      %526 = vmatprep.subr.bf16.mxu0 0
      %527 = vmatpush1.bf16.msra.mxu0 0
      %528 = vmatprep.mubr.bf16.mxu0 0
      %529 = vmatmul.mubr.bf16.gmra.mrb[0].mxu0 %v491
      %v530 = vpop.f32.mrb[0].mxu0
      %v531 = vadd.f32 0.0, %v530
      %v532 = vpop.f32.mrb[0].mxu0
      %v533 = vpop.f32.mrb[0].mxu0
      %v534 = vadd.f32 0.0, %v533
      %v535 = vpop.f32.mrb[0].mxu0
      %536 = vmatprep.mubr.bf16.mxu0 0
      %537 = vmatmul.mubr.bf16.gmra.mrb[0].mxu0 %v494
      %v538 = vpop.f32.mrb[0].mxu0
      %v539 = vadd.f32 0.0, %v538
      %v540 = vpop.f32.mrb[0].mxu0
      %v541 = vpop.f32.mrb[0].mxu0
      %v542 = vpop.f32.mrb[0].mxu0
      %543 = vdwg.mxu0
      %v544 = vadd.f32 %v413, %v531
      %v545 = vadd.f32 %v416, %v534
      %v546 = vadd.f32 %v421, %v539
      %v547 = vld [vmem:[%s206] sm:$0x8]
      %v548 = vld [vmem:[%s210 + $0x60] sm:$0xf]
      %v549 = vld [vmem:[%s210 + $0x64] sm:$0xf]
      %v550 = vld [vmem:[%s210 + $0x68] sm:$0xf]
      %v551 = vld [vmem:[%s210 + $0x6c] sm:$0xf]
      %v552 = vld [vmem:[%s210 + $0x70] sm:$0xf]
      %v553 = vld [vmem:[%s210 + $0x74] sm:$0xf]
      %v554 = vld [vmem:[%s210 + $0x78] sm:$0xf]
      %v555 = vld [vmem:[%s210 + $0x7c] sm:$0xf]
      %v557 = vunpack.c.l.b16 %v547
      %v558 = vpack.c.b16 %v443, %v557
      %vm559 = vcmask 1044480
      %v560 = vrot.slane %v558, 3
      %v561 = vrot.slane %v447, 3
      %v562 = vsel %vm559, %v560, %v561
      %v571 = vunpack.c.l.b16 %v548
      %v572 = vunpack.c.l.b16 %v549
      %v573 = vunpack.c.l.b16 %v550
      %v574 = vunpack.c.l.b16 %v551
      %v575 = vunpack.c.l.b16 %v552
      %v576 = vunpack.c.l.b16 %v553
      %v577 = vunpack.c.l.b16 %v554
      %v578 = vunpack.c.l.b16 %v555
      %v579 = vpack.c.b16 %v572, %v571
      %v580 = vpack.c.b16 %v574, %v573
      %v581 = vpack.c.b16 %v576, %v575
      %v582 = vpack.c.b16 %v578, %v577
      %v588 = vsel %vm291, %v562, 0
      %v591 = vsel %vm291, %v561, 0
      %593 = vmatprep.subr.bf16.mxu0 0
      %594 = vmatpush1.bf16.msra.mxu0 %v579
      %595 = vmatprep.subr.bf16.mxu0 0
      %596 = vmatpush1.bf16.msra.mxu0 %v580
      %597 = vmatprep.subr.bf16.mxu0 0
      %598 = vmatpush1.bf16.msra.mxu0 %v581
      %599 = vmatprep.subr.bf16.mxu0 0
      %600 = vmatpush1.bf16.msra.mxu0 %v582
      %601 = vmatprep.subr.bf16.mxu0 0
      %602 = vmatpush1.bf16.msra.mxu0 0
      %603 = vmatprep.subr.bf16.mxu0 0
      %604 = vmatpush1.bf16.msra.mxu0 0
      %605 = vmatprep.subr.bf16.mxu0 0
      %606 = vmatpush1.bf16.msra.mxu0 0
      %607 = vmatprep.subr.bf16.mxu0 0
      %608 = vmatpush1.bf16.msra.mxu0 0
      %609 = vmatprep.subr.bf16.mxu0 0
      %610 = vmatpush1.bf16.msra.mxu0 0
      %611 = vmatprep.subr.bf16.mxu0 0
      %612 = vmatpush1.bf16.msra.mxu0 0
      %613 = vmatprep.subr.bf16.mxu0 0
      %614 = vmatpush1.bf16.msra.mxu0 0
      %615 = vmatprep.subr.bf16.mxu0 0
      %616 = vmatpush1.bf16.msra.mxu0 0
      %617 = vmatprep.subr.bf16.mxu0 0
      %618 = vmatpush1.bf16.msra.mxu0 0
      %619 = vmatprep.subr.bf16.mxu0 0
      %620 = vmatpush1.bf16.msra.mxu0 0
      %621 = vmatprep.subr.bf16.mxu0 0
      %622 = vmatpush1.bf16.msra.mxu0 0
      %623 = vmatprep.subr.bf16.mxu0 0
      %624 = vmatpush1.bf16.msra.mxu0 0
      %625 = vmatprep.mubr.bf16.mxu0 0
      %626 = vmatmul.mubr.bf16.gmra.mrb[0].mxu0 %v588
      %v627 = vpop.f32.mrb[0].mxu0
      %v628 = vadd.f32 0.0, %v627
      %v629 = vpop.f32.mrb[0].mxu0
      %v630 = vpop.f32.mrb[0].mxu0
      %v631 = vadd.f32 0.0, %v630
      %v632 = vpop.f32.mrb[0].mxu0
      %633 = vmatprep.mubr.bf16.mxu0 0
      %634 = vmatmul.mubr.bf16.gmra.mrb[0].mxu0 %v591
      %v635 = vpop.f32.mrb[0].mxu0
      %v636 = vadd.f32 0.0, %v635
      %v637 = vpop.f32.mrb[0].mxu0
      %v638 = vpop.f32.mrb[0].mxu0
      %v639 = vpop.f32.mrb[0].mxu0
      %640 = vdwg.mxu0
      %v641 = vadd.f32 %v544, %v628
      %v642 = vadd.f32 %v545, %v631
      %v643 = vadd.f32 %v546, %v636
      %v644 = vld [vmem:[%s213] sm:$0x1]
      %v646 = vlaneseq
      %v647 = vshrl.u32 %v646, 7
      %v648 = vsub.s32 0, %v647
      %v649 = vrot.slane %v644, %v648
      %v651 = vadd.f32 %v641, %v649
      %v652 = vadd.f32 %v642, %v649
      %v653 = vadd.f32 %v643, %v649
      %v654 = vpack.c.bf16 %v652, %v651
      %v655 = vpack.c.bf16 %v653, %v653
      %v658 = vunpack.c.l.b16 %v654
      %v659 = vunpack.c.h.b16 %v654
      %v660 = vunpack.c.l.b16 %v655
      %v661 = vpack.c.b16 %v658, %v658
      %v662 = vpack.c.b16 %v659, %v659
      %v663 = vpack.c.b16 %v660, %v660
      %667 = vst [vmem:[%s221] sm:$0xf] %v661
      %668 = vst [vmem:[%s221 + $0x4] sm:$0xf] %v662
      %669 = vst [vmem:[%s221 + $0x8] sm:$0x3] %v663
      %p670 = scmp.lt.s32.totalorder %s18, 1
      %s671 = scalar_select %p670, %s18, 1
      %p672 = scmp.lt.s32.totalorder %s19, 0
      %s673 = scalar_select %p672, %s19, 0
      %s674 = smul.addr %s671, 3
      %s675 = sadd.s32 %s673, %s674
      %s676 = smul.addr %s675, 4
      %s677 = scalar_lea.vmem %s3, %s676
      // Predicated region
      $region33: #{_lambda_.9} parent=31 // pred_check
        %p678 = pneg %p124
      $region34: #{_lambda_.9} parent=31 // pred_check_branch
        %680 = sbr.rel (%p678) target = $region36
      $region35: #{_lambda_.9} parent=31 // pred_region
        _
      $region36: #{_lambda_.9} parent=31 // pred_fallthru
        _
    $region32: #{_lambda_.9} parent=5 // pred_fallthru
      _
    %p681 = scmp.le.s32.totalorder 2, %s9
    // Predicated region
    $region37: #{_lambda_.9} parent=5 // pred_check
      %p682 = pneg %p681
    $region38: #{_lambda_.9} parent=5 // pred_check_branch
      %684 = sbr.rel (%p682) target = $region40
    $region39: #{_lambda_.9} parent=5 // pred_region
      %s685 = ssub.s32 %s9, 2
      // Predicated region
      $region41: #{_lambda_.9} parent=39 // pred_check
        %p686 = pneg %p130
      $region42: #{_lambda_.9} parent=39 // pred_check_branch
        %688 = sbr.rel (%p686) target = $region44
      $region43: #{_lambda_.9} parent=39 // pred_region
        %p689 = scmp.lt.s32.totalorder %s20, 1
        %s690 = scalar_select %p689, %s20, 1
        %p691 = scmp.lt.s32.totalorder %s21, 0
        %s692 = scalar_select %p691, %s21, 0
        %s693 = smul.addr %s690, 3
        %s694 = sadd.s32 %s692, %s693
        %s695 = smul.addr %s694, 4
        %s696 = scalar_lea.vmem %s3, %s695
      $region44: #{_lambda_.9} parent=39 // pred_fallthru
        _
    $region40: #{_lambda_.9} parent=5 // pred_fallthru
      _
  $region6: #{_lambda_.9} parent=0 // loop_footer
    %s13 = sadd.s32 1, %s9
  $region7: #{_lambda_.9} parent=0 // loop_footer_branch
    %8 = sbr.rel target = $region3
  $region8: #{_lambda_.9} parent=0 // loop_exit
    _

// kernel: _lambda_.12
$region0: #{_lambda_.12}
  #allocation0 [shape = 'u32[]', space=smem, size = 0x4, offset = 0x4, fixed_abs, tag = 'smem constant byte address 0x4 - core index']
  #allocation1 [shape = 'u32[144,128]{1,0:T(1,128)}', space=vmem, size = 0x12000, scoped, tag = 'internal scratch']
  %s0 = inlined_call_operand.vmem [shape: bf16[2,4,64], index: 0, kind: input, shape index: {}]
  %s1 = inlined_call_operand.vmem [shape: bf16[2,4,64], index: 1, kind: output, shape index: {}]
  %s2 = sld [smem:[#allocation0]]
  $region37: #{_lambda_.12} parent=0
    _
  %s4 = ssub.s32 1, %s2
  %s5 = scalar_select 0, %s4, %s2
  loop: start=0, step=1, limit=4
  $region2: #{_lambda_.12} parent=0 // loop_pre_header
    _
  $region3: #{_lambda_.12} parent=0 // loop_header
    %s7 = sphi 0, %s11
    %p8 = scmp.ge.s32.totalorder %s7, 4
    %s17 = sphi 0, %s19
    %s20 = sphi 0, %s17
    %s21 = sphi 0, %s20
    %s37 = sphi 0, %s21
    %s43 = sphi 0, %s45
    %s46 = sphi 0, %s43
    %s47 = sphi 0, %s46
    %s63 = sphi 0, %s47
  $region4: #{_lambda_.12} parent=0 // loop_header_branch
    %10 = sbr.rel (%p8) target = $region8
  $region5: #{_lambda_.12} parent=0 // loop_body
    %s12 = ssub.s32 %s7, 1
    %s13 = ssub.s32 %s7, 2
    %s14 = sadd.s32 %s7, 1
    %s15 = ssub.s32 %s7, %s14
    %p16 = scmp.eq.s32.totalorder %s15, 0
    %s18 = sadd.s32 %s17, 1
    %s19 = scalar_select %p16, %s17, %s18
    %p22 = pneg %p16
    %p23 = scmp.eq.s32.totalorder %s7, 1
    %p24 = por %p22, %p23
    %p25 = scmp.ne.s32.totalorder %s17, %s20
    %p26 = scmp.eq.s32.totalorder %s7, 0
    %p27 = por %p25, %p26
    %p28 = scmp.ne.s32.totalorder %s17, %s20
    %p29 = scmp.eq.s32.totalorder %s12, 1
    %p30 = por %p28, %p29
    %p31 = scmp.ne.s32.totalorder %s20, %s21
    %p32 = scmp.eq.s32.totalorder %s12, 0
    %p33 = por %p31, %p32
    %p34 = scmp.ne.s32.totalorder %s20, %s21
    %p35 = scmp.eq.s32.totalorder %s13, 1
    %p36 = por %p34, %p35
    %p38 = scmp.ne.s32.totalorder %s21, %s37
    %p39 = scmp.eq.s32.totalorder %s13, 0
    %p40 = por %p38, %p39
    %s41 = ssub.s32 %s7, %s14
    %p42 = scmp.eq.s32.totalorder %s41, 0
    %s44 = sadd.s32 %s43, 1
    %s45 = scalar_select %p42, %s43, %s44
    %p48 = pneg %p42
    %p49 = scmp.eq.s32.totalorder %s7, 1
    %p50 = por %p48, %p49
    %p51 = scmp.ne.s32.totalorder %s43, %s46
    %p52 = scmp.eq.s32.totalorder %s7, 0
    %p53 = por %p51, %p52
    %p54 = scmp.ne.s32.totalorder %s43, %s46
    %p55 = scmp.eq.s32.totalorder %s12, 1
    %p56 = por %p54, %p55
    %p57 = scmp.ne.s32.totalorder %s46, %s47
    %p58 = scmp.eq.s32.totalorder %s12, 0
    %p59 = por %p57, %p58
    %p60 = scmp.ne.s32.totalorder %s46, %s47
    %p61 = scmp.eq.s32.totalorder %s13, 1
    %p62 = por %p60, %p61
    %p64 = scmp.ne.s32.totalorder %s47, %s63
    %p65 = scmp.eq.s32.totalorder %s13, 0
    %p66 = por %p64, %p65
    %p67 = scmp.le.s32.totalorder 1, %s7
    %p68 = scmp.lt.s32.totalorder %s7, 3
    %p69 = pnand %p67, %p68
    %p70 = pneg %p69
    // Predicated region
    $region9: #{_lambda_.12} parent=5 // pred_check
      _
    $region10: #{_lambda_.12} parent=5 // pred_check_branch
      %72 = sbr.rel (%p69) target = $region12
    $region11: #{_lambda_.12} parent=5 // pred_region
      %s73 = ssub.s32 %s7, 1
    $region12: #{_lambda_.12} parent=5 // pred_fallthru
      _
    %p74 = scmp.lt.s32.totalorder %s7, 2
    // Predicated region
    $region13: #{_lambda_.12} parent=5 // pred_check
      %p75 = pneg %p74
    $region14: #{_lambda_.12} parent=5 // pred_check_branch
      %77 = sbr.rel (%p75) target = $region16
    $region15: #{_lambda_.12} parent=5 // pred_region
      // Predicated region
      $region17: #{_lambda_.12} parent=15 // pred_check
        %p78 = pneg %p27
      $region18: #{_lambda_.12} parent=15 // pred_check_branch
        %80 = sbr.rel (%p78) target = $region20
      $region19: #{_lambda_.12} parent=15 // pred_region
        %p81 = scmp.lt.s32.totalorder %s7, 1
        %s82 = scalar_select %p81, %s7, 1
        %s83 = smul.addr %s82, 2
        %s84 = scalar_lea.vmem %s0, %s83
      $region20: #{_lambda_.12} parent=15 // pred_fallthru
        _
    $region16: #{_lambda_.12} parent=5 // pred_fallthru
      _
    %p85 = scmp.le.s32.totalorder 1, %s7
    %p86 = scmp.lt.s32.totalorder %s7, 3
    %p87 = pnand %p85, %p86
    %p88 = pneg %p87
    // Predicated region
    $region21: #{_lambda_.12} parent=5 // pred_check
      _
    $region22: #{_lambda_.12} parent=5 // pred_check_branch
      %90 = sbr.rel (%p87) target = $region24
    $region23: #{_lambda_.12} parent=5 // pred_region
      %s91 = ssub.s32 %s7, 1
      %p92 = scmp.lt.s32.totalorder %s12, 1
      %s93 = scalar_select %p92, %s12, 1
      %s94 = smul.addr %s93, 2
      %s95 = scalar_lea.vmem %s0, %s94
      %p96 = pneg %p33
      %p97 = pneg %p30
      %p98 = pneg %p59
      %p99 = pneg %p56
      %p100 = scmp.lt.s32.totalorder %s12, 1
      %s101 = scalar_select %p100, %s12, 1
      %s102 = smul.addr %s101, 2
      %s103 = scalar_lea.vmem %s1, %s102
      %p104 = scmp.lt.s32.totalorder %s12, 1
      %s105 = scalar_select %p104, %s12, 1
      %s106 = smul.addr %s105, 2
      %s107 = scalar_lea.vmem %s0, %s106
      %p108 = scmp.lt.s32.totalorder %s12, 1
      %s109 = scalar_select %p108, %s12, 1
      %s110 = smul.addr %s109, 2
      %s111 = scalar_lea.vmem %s1, %s110
      %v112 = vld [vmem:[%s107] sm:$0x3]
      %v113 = vunpack.c.l.bf16 %v112
      %vm114 = vcmask 519168
      %v115 = vsel %vm114, %v113, 0.0
      %v116 = vrot.slane %v115, 4
      %v117 = vadd.f32 %v115, %v116
      %v118 = vrot.slane %v117, 2
      %v119 = vadd.f32 %v117, %v118
      %v120 = vrot.slane %v119, 1
      %v121 = vadd.f32 %v119, %v120
      %v122 = vmul.f32 %v113, %v113
      %v123 = vsel %vm114, %v122, 0.0
      %v124 = vrot.slane %v123, 4
      %v125 = vadd.f32 %v123, %v124
      %v126 = vrot.slane %v125, 2
      %v127 = vadd.f32 %v125, %v126
      %v128 = vrot.slane %v127, 1
      %v129 = vadd.f32 %v127, %v128
      %v130 = vmul.f32 %v121, 0.25
      %v131 = vmul.f32 %v129, 0.25
      %v132 = vmul.f32 %v130, %v130
      %v133 = vsub.f32 %v131, %v132
      %v134 = vsub.f32 %v113, %v130
      %v135 = vadd.f32 %v133, 1e-05
      %v136 = vrsqrt.pop %v135
      %v137 = vmul.f32 %v134, %v136
      %vm138 = vcmp.gt.f32.partialorder %v137, 0.0
      %v139 = vmul.f32 %v137, 0.2
      %v140 = vsel %vm138, %v137, %v139
      %v141 = vpack.c.bf16 %v140, %v140
      %vm142 = vcmask 517120
      %143 = vst.msk [vmem:[%s111] sm:$0x3] %vm142, %v141
      %p144 = scmp.lt.s32.totalorder %s12, 1
      %s145 = scalar_select %p144, %s12, 1
      %s146 = smul.addr %s145, 2
      %s147 = scalar_lea.vmem %s1, %s146
      // Predicated region
      $region25: #{_lambda_.12} parent=23 // pred_check
        %p148 = pneg %p56
      $region26: #{_lambda_.12} parent=23 // pred_check_branch
        %150 = sbr.rel (%p148) target = $region28
      $region27: #{_lambda_.12} parent=23 // pred_region
        _
      $region28: #{_lambda_.12} parent=23 // pred_fallthru
        _
    $region24: #{_lambda_.12} parent=5 // pred_fallthru
      _
    %p151 = scmp.le.s32.totalorder 2, %s7
    // Predicated region
    $region29: #{_lambda_.12} parent=5 // pred_check
      %p152 = pneg %p151
    $region30: #{_lambda_.12} parent=5 // pred_check_branch
      %154 = sbr.rel (%p152) target = $region32
    $region31: #{_lambda_.12} parent=5 // pred_region
      %s155 = ssub.s32 %s7, 2
      // Predicated region
      $region33: #{_lambda_.12} parent=31 // pred_check
        %p156 = pneg %p62
      $region34: #{_lambda_.12} parent=31 // pred_check_branch
        %158 = sbr.rel (%p156) target = $region36
      $region35: #{_lambda_.12} parent=31 // pred_region
        %p159 = scmp.lt.s32.totalorder %s13, 1
        %s160 = scalar_select %p159, %s13, 1
        %s161 = smul.addr %s160, 2
        %s162 = scalar_lea.vmem %s1, %s161
      $region36: #{_lambda_.12} parent=31 // pred_fallthru
        _
    $region32: #{_lambda_.12} parent=5 // pred_fallthru
      _
  $region6: #{_lambda_.12} parent=0 // loop_footer
    %s11 = sadd.s32 1, %s7
  $region7: #{_lambda_.12} parent=0 // loop_footer_branch
    %6 = sbr.rel target = $region3
  $region8: #{_lambda_.12} parent=0 // loop_exit
    _

// kernel: _lambda_.11
$region0: #{_lambda_.11}
  #allocation0 [shape = 'u32[]', space=smem, size = 0x4, offset = 0x4, fixed_abs, tag = 'smem constant byte address 0x4 - core index']
  #allocation1 [shape = 'u32[144,128]{1,0:T(1,128)}', space=vmem, size = 0x12000, scoped, tag = 'internal scratch']
  %s0 = inlined_call_operand.vmem [shape: bf16[2,12,128], index: 0, kind: input, shape index: {}]
  %s1 = inlined_call_operand.vmem [shape: bf16[512,128], index: 1, kind: input, shape index: {}]
  %s2 = inlined_call_operand.vmem [shape: f32[1,128], index: 2, kind: input, shape index: {}]
  %s3 = inlined_call_operand.vmem [shape: bf16[2,6,128], index: 3, kind: output, shape index: {}]
  %s4 = sld [smem:[#allocation0]]
  $region45: #{_lambda_.11} parent=0
    _
  %s6 = ssub.s32 1, %s4
  %s7 = scalar_select 0, %s6, %s4
  loop: start=0, step=1, limit=4
  $region2: #{_lambda_.11} parent=0 // loop_pre_header
    _
  $region3: #{_lambda_.11} parent=0 // loop_header
    %s9 = sphi 0, %s13
    %p10 = scmp.ge.s32.totalorder %s9, 4
    %s16 = sphi 0, %s28
    %s17 = sphi 0, %s24
    %s18 = sphi 0, %s16
    %s19 = sphi 0, %s17
    %s20 = sphi 0, %s18
    %s21 = sphi 0, %s19
    %s31 = sphi 0, %s33
    %s34 = sphi 0, %s31
    %s35 = sphi 0, %s34
    %s51 = sphi 0, %s35
    %s57 = sphi 0, %s59
    %s60 = sphi 0, %s57
    %s61 = sphi 0, %s60
    %s77 = sphi 0, %s61
    %s83 = sphi 0, %s85
    %s86 = sphi 0, %s83
    %s87 = sphi 0, %s86
    %s103 = sphi 0, %s87
    %s111 = sphi 0, %s113
    %s114 = sphi 0, %s111
    %s115 = sphi 0, %s114
    %s131 = sphi 0, %s115
  $region4: #{_lambda_.11} parent=0 // loop_header_branch
    %12 = sbr.rel (%p10) target = $region8
  $region5: #{_lambda_.11} parent=0 // loop_body
    %s14 = ssub.s32 %s9, 1
    %s15 = ssub.s32 %s9, 2
    %s22 = sadd.s32 1, %s17
    %p23 = scmp.ge.s32.totalorder %s22, 1
    %s24 = scalar_select %p23, 0, %s22
    %s25 = sadd.s32 1, %s16
    %s26 = scalar_select %p23, %s25, %s16
    %p27 = scmp.ge.s32.totalorder %s26, 2
    %s28 = scalar_select %p27, 0, %s26
    %s29 = ssub.s32 %s16, %s28
    %p30 = scmp.eq.s32.totalorder %s29, 0
    %s32 = sadd.s32 %s31, 1
    %s33 = scalar_select %p30, %s31, %s32
    %p36 = pneg %p30
    %p37 = scmp.eq.s32.totalorder %s9, 1
    %p38 = por %p36, %p37
    %p39 = scmp.ne.s32.totalorder %s31, %s34
    %p40 = scmp.eq.s32.totalorder %s9, 0
    %p41 = por %p39, %p40
    %p42 = scmp.ne.s32.totalorder %s31, %s34
    %p43 = scmp.eq.s32.totalorder %s14, 1
    %p44 = por %p42, %p43
    %p45 = scmp.ne.s32.totalorder %s34, %s35
    %p46 = scmp.eq.s32.totalorder %s14, 0
    %p47 = por %p45, %p46
    %p48 = scmp.ne.s32.totalorder %s34, %s35
    %p49 = scmp.eq.s32.totalorder %s15, 1
    %p50 = por %p48, %p49
    %p52 = scmp.ne.s32.totalorder %s35, %s51
    %p53 = scmp.eq.s32.totalorder %s15, 0
    %p54 = por %p52, %p53
    %s55 = ssub.s32 %s17, %s24
    %p56 = scmp.eq.s32.totalorder %s55, 0
    %s58 = sadd.s32 %s57, 1
    %s59 = scalar_select %p56, %s57, %s58
    %p62 = pneg %p56
    %p63 = scmp.eq.s32.totalorder %s9, 1
    %p64 = por %p62, %p63
    %p65 = scmp.ne.s32.totalorder %s57, %s60
    %p66 = scmp.eq.s32.totalorder %s9, 0
    %p67 = por %p65, %p66
    %p68 = scmp.ne.s32.totalorder %s57, %s60
    %p69 = scmp.eq.s32.totalorder %s14, 1
    %p70 = por %p68, %p69
    %p71 = scmp.ne.s32.totalorder %s60, %s61
    %p72 = scmp.eq.s32.totalorder %s14, 0
    %p73 = por %p71, %p72
    %p74 = scmp.ne.s32.totalorder %s60, %s61
    %p75 = scmp.eq.s32.totalorder %s15, 1
    %p76 = por %p74, %p75
    %p78 = scmp.ne.s32.totalorder %s61, %s77
    %p79 = scmp.eq.s32.totalorder %s15, 0
    %p80 = por %p78, %p79
    %s81 = ssub.s32 %s17, %s24
    %p82 = scmp.eq.s32.totalorder %s81, 0
    %s84 = sadd.s32 %s83, 1
    %s85 = scalar_select %p82, %s83, %s84
    %p88 = pneg %p82
    %p89 = scmp.eq.s32.totalorder %s9, 1
    %p90 = por %p88, %p89
    %p91 = scmp.ne.s32.totalorder %s83, %s86
    %p92 = scmp.eq.s32.totalorder %s9, 0
    %p93 = por %p91, %p92
    %p94 = scmp.ne.s32.totalorder %s83, %s86
    %p95 = scmp.eq.s32.totalorder %s14, 1
    %p96 = por %p94, %p95
    %p97 = scmp.ne.s32.totalorder %s86, %s87
    %p98 = scmp.eq.s32.totalorder %s14, 0
    %p99 = por %p97, %p98
    %p100 = scmp.ne.s32.totalorder %s86, %s87
    %p101 = scmp.eq.s32.totalorder %s15, 1
    %p102 = por %p100, %p101
    %p104 = scmp.ne.s32.totalorder %s87, %s103
    %p105 = scmp.eq.s32.totalorder %s15, 0
    %p106 = por %p104, %p105
    %s107 = ssub.s32 %s16, %s28
    %s108 = ssub.s32 %s17, %s24
    %s109 = sor.u32 %s107, %s108
    %p110 = scmp.eq.s32.totalorder %s109, 0
    %s112 = sadd.s32 %s111, 1
    %s113 = scalar_select %p110, %s111, %s112
    %p116 = pneg %p110
    %p117 = scmp.eq.s32.totalorder %s9, 1
    %p118 = por %p116, %p117
    %p119 = scmp.ne.s32.totalorder %s111, %s114
    %p120 = scmp.eq.s32.totalorder %s9, 0
    %p121 = por %p119, %p120
    %p122 = scmp.ne.s32.totalorder %s111, %s114
    %p123 = scmp.eq.s32.totalorder %s14, 1
    %p124 = por %p122, %p123
    %p125 = scmp.ne.s32.totalorder %s114, %s115
    %p126 = scmp.eq.s32.totalorder %s14, 0
    %p127 = por %p125, %p126
    %p128 = scmp.ne.s32.totalorder %s114, %s115
    %p129 = scmp.eq.s32.totalorder %s15, 1
    %p130 = por %p128, %p129
    %p132 = scmp.ne.s32.totalorder %s115, %s131
    %p133 = scmp.eq.s32.totalorder %s15, 0
    %p134 = por %p132, %p133
    %p135 = scmp.le.s32.totalorder 1, %s9
    %p136 = scmp.lt.s32.totalorder %s9, 3
    %p137 = pnand %p135, %p136
    %p138 = pneg %p137
    // Predicated region
    $region9: #{_lambda_.11} parent=5 // pred_check
      _
    $region10: #{_lambda_.11} parent=5 // pred_check_branch
      %140 = sbr.rel (%p137) target = $region12
    $region11: #{_lambda_.11} parent=5 // pred_region
      %s141 = ssub.s32 %s9, 1
      // Predicated region
      $region13: #{_lambda_.11} parent=11 // pred_check
        %p142 = pneg %p73
      $region14: #{_lambda_.11} parent=11 // pred_check_branch
        %144 = sbr.rel (%p142) target = $region16
      $region15: #{_lambda_.11} parent=11 // pred_region
        %p145 = scmp.lt.s32.totalorder %s19, 0
        %s146 = scalar_select %p145, %s19, 0
        %s147 = smul.addr %s146, 4
        %s148 = scalar_lea.vmem %s1, %s147
      $region16: #{_lambda_.11} parent=11 // pred_fallthru
        _
      // Predicated region
      $region17: #{_lambda_.11} parent=11 // pred_check
        %p149 = pneg %p99
      $region18: #{_lambda_.11} parent=11 // pred_check_branch
        %151 = sbr.rel (%p149) target = $region20
      $region19: #{_lambda_.11} parent=11 // pred_region
        %p152 = scmp.lt.s32.totalorder %s19, 0
        %s153 = scalar_select %p152, %s19, 0
        %s154 = scalar_lea.vmem %s2, %s153
      $region20: #{_lambda_.11} parent=11 // pred_fallthru
        _
    $region12: #{_lambda_.11} parent=5 // pred_fallthru
      _
    %p155 = scmp.lt.s32.totalorder %s9, 2
    // Predicated region
    $region21: #{_lambda_.11} parent=5 // pred_check
      %p156 = pneg %p155
    $region22: #{_lambda_.11} parent=5 // pred_check_branch
      %158 = sbr.rel (%p156) target = $region24
    $region23: #{_lambda_.11} parent=5 // pred_region
      // Predicated region
      $region25: #{_lambda_.11} parent=23 // pred_check
        %p159 = pneg %p41
      $region26: #{_lambda_.11} parent=23 // pred_check_branch
        %161 = sbr.rel (%p159) target = $region28
      $region27: #{_lambda_.11} parent=23 // pred_region
        %p162 = scmp.lt.s32.totalorder %s16, 1
        %s163 = scalar_select %p162, %s16, 1
        %s164 = smul.addr %s163, 2
        %s165 = smul.addr %s164, 4
        %s166 = scalar_lea.vmem %s0, %s165
      $region28: #{_lambda_.11} parent=23 // pred_fallthru
        _
    $region24: #{_lambda_.11} parent=5 // pred_fallthru
      _
    %p167 = scmp.le.s32.totalorder 1, %s9
    %p168 = scmp.lt.s32.totalorder %s9, 3
    %p169 = pnand %p167, %p168
    %p170 = pneg %p169
    // Predicated region
    $region29: #{_lambda_.11} parent=5 // pred_check
      _
    $region30: #{_lambda_.11} parent=5 // pred_check_branch
      %172 = sbr.rel (%p169) target = $region32
    $region31: #{_lambda_.11} parent=5 // pred_region
      %s173 = ssub.s32 %s9, 1
      %p174 = scmp.lt.s32.totalorder %s18, 1
      %s175 = scalar_select %p174, %s18, 1
      %s176 = smul.addr %s175, 2
      %s177 = smul.addr %s176, 4
      %s178 = scalar_lea.vmem %s0, %s177
      %p179 = pneg %p47
      %p180 = pneg %p44
      %p181 = scmp.lt.s32.totalorder %s19, 0
      %s182 = scalar_select %p181, %s19, 0
      %s183 = smul.addr %s182, 4
      %s184 = scalar_lea.vmem %s1, %s183
      %p185 = pneg %p73
      %p186 = pneg %p70
      %p187 = scmp.lt.s32.totalorder %s19, 0
      %s188 = scalar_select %p187, %s19, 0
      %s189 = scalar_lea.vmem %s2, %s188
      %p190 = pneg %p99
      %p191 = pneg %p96
      %p192 = pneg %p127
      %p193 = pneg %p124
      %p194 = scmp.lt.s32.totalorder %s18, 1
      %s195 = scalar_select %p194, %s18, 1
      %p196 = scmp.lt.s32.totalorder %s19, 0
      %s197 = scalar_select %p196, %s19, 0
      %s198 = sadd.s32 %s197, %s195
      %s199 = smul.addr %s198, 4
      %s200 = scalar_lea.vmem %s3, %s199
      %p201 = scmp.lt.s32.totalorder %s18, 1
      %s202 = scalar_select %p201, %s18, 1
      %s203 = smul.addr %s202, 2
      %s204 = smul.addr %s203, 4
      %s205 = scalar_lea.vmem %s0, %s204
      %p206 = scmp.lt.s32.totalorder %s19, 0
      %s207 = scalar_select %p206, %s19, 0
      %s208 = smul.addr %s207, 4
      %s209 = scalar_lea.vmem %s1, %s208
      %p210 = scmp.lt.s32.totalorder %s19, 0
      %s211 = scalar_select %p210, %s19, 0
      %s212 = scalar_lea.vmem %s2, %s211
      %p213 = scmp.lt.s32.totalorder %s18, 1
      %s214 = scalar_select %p213, %s18, 1
      %p215 = scmp.lt.s32.totalorder %s19, 0
      %s216 = scalar_select %p215, %s19, 0
      %s217 = sadd.s32 %s216, %s214
      %s218 = smul.addr %s217, 4
      %s219 = scalar_lea.vmem %s3, %s218
      %v221 = vld [vmem:[%s205] sm:$0x7]
      %v222 = vld [vmem:[%s205] sm:$0xf]
      %v224 = vunpack.c.l.b16 %v222
      %v225 = vpack.c.b16 %v224, %v224
      %v227 = vshrl.u32 %v225, 16
      %v229 = vshll.u32 %v225, 16
      %v231 = vrot.slane %v229, 1
      %v232 = vor.u32 %v227, %v231
      %v234 = vld [vmem:[%s209] sm:$0xf]
      %v235 = vld [vmem:[%s209 + $0x4] sm:$0xf]
      %v236 = vld [vmem:[%s209 + $0x8] sm:$0xf]
      %v237 = vld [vmem:[%s209 + $0xc] sm:$0xf]
      %v238 = vld [vmem:[%s209 + $0x10] sm:$0xf]
      %v239 = vld [vmem:[%s209 + $0x14] sm:$0xf]
      %v240 = vld [vmem:[%s209 + $0x18] sm:$0xf]
      %v241 = vld [vmem:[%s209 + $0x1c] sm:$0xf]
      %v242 = vld [vmem:[%s209 + $0x20] sm:$0xf]
      %v243 = vld [vmem:[%s209 + $0x24] sm:$0xf]
      %v244 = vld [vmem:[%s209 + $0x28] sm:$0xf]
      %v245 = vld [vmem:[%s209 + $0x2c] sm:$0xf]
      %v246 = vld [vmem:[%s209 + $0x30] sm:$0xf]
      %v247 = vld [vmem:[%s209 + $0x34] sm:$0xf]
      %v248 = vld [vmem:[%s209 + $0x38] sm:$0xf]
      %v249 = vld [vmem:[%s209 + $0x3c] sm:$0xf]
      %v250 = vld [vmem:[%s209 + $0x40] sm:$0xf]
      %v251 = vld [vmem:[%s209 + $0x44] sm:$0xf]
      %v252 = vld [vmem:[%s209 + $0x48] sm:$0xf]
      %v253 = vld [vmem:[%s209 + $0x4c] sm:$0xf]
      %v254 = vld [vmem:[%s209 + $0x50] sm:$0xf]
      %v255 = vld [vmem:[%s209 + $0x54] sm:$0xf]
      %v256 = vld [vmem:[%s209 + $0x58] sm:$0xf]
      %v257 = vld [vmem:[%s209 + $0x5c] sm:$0xf]
      %v258 = vld [vmem:[%s209 + $0x60] sm:$0xf]
      %v259 = vld [vmem:[%s209 + $0x64] sm:$0xf]
      %v260 = vld [vmem:[%s209 + $0x68] sm:$0xf]
      %v261 = vld [vmem:[%s209 + $0x6c] sm:$0xf]
      %v262 = vld [vmem:[%s209 + $0x70] sm:$0xf]
      %v263 = vld [vmem:[%s209 + $0x74] sm:$0xf]
      %v264 = vld [vmem:[%s209 + $0x78] sm:$0xf]
      %v265 = vld [vmem:[%s209 + $0x7c] sm:$0xf]
      %v266 = vld [vmem:[%s205] sm:$0xe]
      %v267 = vld [vmem:[%s205 + $0x4] sm:$0x1]
      %v268 = vld [vmem:[%s205] sm:$0xc]
      %v271 = vunpack.c.l.b16 %v266
      %v272 = vunpack.c.l.b16 %v267
      %v273 = vpack.c.b16 %v272, %v271
      %v275 = vunpack.c.l.b16 %v268
      %v276 = vpack.c.b16 %v272, %v275
      %v278 = vshrl.u32 %v276, 16
      %v280 = vshll.u32 %v276, 16
      %v282 = vrot.slane %v280, 1
      %v283 = vor.u32 %v278, %v282
      %v284 = vld [vmem:[%s209 + $0x80] sm:$0xf]
      %v285 = vld [vmem:[%s209 + $0x84] sm:$0xf]
      %v286 = vld [vmem:[%s209 + $0x88] sm:$0xf]
      %v287 = vld [vmem:[%s209 + $0x8c] sm:$0xf]
      %v288 = vld [vmem:[%s209 + $0x90] sm:$0xf]
      %v289 = vld [vmem:[%s209 + $0x94] sm:$0xf]
      %v290 = vld [vmem:[%s209 + $0x98] sm:$0xf]
      %v291 = vld [vmem:[%s209 + $0x9c] sm:$0xf]
      %v292 = vld [vmem:[%s209 + $0xa0] sm:$0xf]
      %v293 = vld [vmem:[%s209 + $0xa4] sm:$0xf]
      %v294 = vld [vmem:[%s209 + $0xa8] sm:$0xf]
      %v295 = vld [vmem:[%s209 + $0xac] sm:$0xf]
      %v296 = vld [vmem:[%s209 + $0xb0] sm:$0xf]
      %v297 = vld [vmem:[%s209 + $0xb4] sm:$0xf]
      %v298 = vld [vmem:[%s209 + $0xb8] sm:$0xf]
      %v299 = vld [vmem:[%s209 + $0xbc] sm:$0xf]
      %v300 = vld [vmem:[%s209 + $0xc0] sm:$0xf]
      %v301 = vld [vmem:[%s209 + $0xc4] sm:$0xf]
      %v302 = vld [vmem:[%s209 + $0xc8] sm:$0xf]
      %v303 = vld [vmem:[%s209 + $0xcc] sm:$0xf]
      %v304 = vld [vmem:[%s209 + $0xd0] sm:$0xf]
      %v305 = vld [vmem:[%s209 + $0xd4] sm:$0xf]
      %v306 = vld [vmem:[%s209 + $0xd8] sm:$0xf]
      %v307 = vld [vmem:[%s209 + $0xdc] sm:$0xf]
      %v308 = vld [vmem:[%s209 + $0xe0] sm:$0xf]
      %v309 = vld [vmem:[%s209 + $0xe4] sm:$0xf]
      %v310 = vld [vmem:[%s209 + $0xe8] sm:$0xf]
      %v311 = vld [vmem:[%s209 + $0xec] sm:$0xf]
      %v312 = vld [vmem:[%s209 + $0xf0] sm:$0xf]
      %v313 = vld [vmem:[%s209 + $0xf4] sm:$0xf]
      %v314 = vld [vmem:[%s209 + $0xf8] sm:$0xf]
      %v315 = vld [vmem:[%s209 + $0xfc] sm:$0xf]
      %v317 = vshrl.u32 %v273, 16
      %v319 = vrot.slane %v317, 1
      %v320 = vshll.u32 %v273, 16
      %v322 = vrot.slane %v320, 2
      %v323 = vor.u32 %v319, %v322
      %v325 = vshrl.u32 %v283, 16
      %v327 = vrot.slane %v325, 1
      %v328 = vshll.u32 %v283, 16
      %v330 = vrot.slane %v328, 2
      %v331 = vor.u32 %v327, %v330
      %v366 = vunpack.c.l.b16 %v284
      %v367 = vunpack.c.l.b16 %v285
      %v368 = vunpack.c.l.b16 %v286
      %v369 = vunpack.c.l.b16 %v287
      %v370 = vunpack.c.l.b16 %v288
      %v371 = vunpack.c.l.b16 %v289
      %v372 = vunpack.c.l.b16 %v290
      %v373 = vunpack.c.l.b16 %v291
      %v374 = vunpack.c.l.b16 %v292
      %v375 = vunpack.c.l.b16 %v293
      %v376 = vunpack.c.l.b16 %v294
      %v377 = vunpack.c.l.b16 %v295
      %v378 = vunpack.c.l.b16 %v296
      %v379 = vunpack.c.l.b16 %v297
      %v380 = vunpack.c.l.b16 %v298
      %v381 = vunpack.c.l.b16 %v299
      %v382 = vunpack.c.l.b16 %v300
      %v383 = vunpack.c.l.b16 %v301
      %v384 = vunpack.c.l.b16 %v302
      %v385 = vunpack.c.l.b16 %v303
      %v386 = vunpack.c.l.b16 %v304
      %v387 = vunpack.c.l.b16 %v305
      %v388 = vunpack.c.l.b16 %v306
      %v389 = vunpack.c.l.b16 %v307
      %v390 = vunpack.c.l.b16 %v308
      %v391 = vunpack.c.l.b16 %v309
      %v392 = vunpack.c.l.b16 %v310
      %v393 = vunpack.c.l.b16 %v311
      %v394 = vunpack.c.l.b16 %v312
      %v395 = vunpack.c.l.b16 %v313
      %v396 = vunpack.c.l.b16 %v314
      %v397 = vunpack.c.l.b16 %v315
      %v398 = vpack.c.b16 %v367, %v366
      %v399 = vpack.c.b16 %v369, %v368
      %v400 = vpack.c.b16 %v371, %v370
      %v401 = vpack.c.b16 %v373, %v372
      %v402 = vpack.c.b16 %v375, %v374
      %v403 = vpack.c.b16 %v377, %v376
      %v404 = vpack.c.b16 %v379, %v378
      %v405 = vpack.c.b16 %v381, %v380
      %v406 = vpack.c.b16 %v383, %v382
      %v407 = vpack.c.b16 %v385, %v384
      %v408 = vpack.c.b16 %v387, %v386
      %v409 = vpack.c.b16 %v389, %v388
      %v410 = vpack.c.b16 %v391, %v390
      %v411 = vpack.c.b16 %v393, %v392
      %v412 = vpack.c.b16 %v395, %v394
      %v413 = vpack.c.b16 %v397, %v396
      %430 = vmatprep.subr.bf16.mxu0 0
      %431 = vmatpush1.bf16.msra.mxu0 %v398
      %432 = vmatprep.subr.bf16.mxu0 0
      %433 = vmatpush1.bf16.msra.mxu0 %v399
      %434 = vmatprep.subr.bf16.mxu0 0
      %435 = vmatpush1.bf16.msra.mxu0 %v400
      %436 = vmatprep.subr.bf16.mxu0 0
      %437 = vmatpush1.bf16.msra.mxu0 %v401
      %438 = vmatprep.subr.bf16.mxu0 0
      %439 = vmatpush1.bf16.msra.mxu0 %v402
      %440 = vmatprep.subr.bf16.mxu0 0
      %441 = vmatpush1.bf16.msra.mxu0 %v403
      %442 = vmatprep.subr.bf16.mxu0 0
      %443 = vmatpush1.bf16.msra.mxu0 %v404
      %444 = vmatprep.subr.bf16.mxu0 0
      %445 = vmatpush1.bf16.msra.mxu0 %v405
      %446 = vmatprep.subr.bf16.mxu0 0
      %447 = vmatpush1.bf16.msra.mxu0 %v406
      %448 = vmatprep.subr.bf16.mxu0 0
      %449 = vmatpush1.bf16.msra.mxu0 %v407
      %450 = vmatprep.subr.bf16.mxu0 0
      %451 = vmatpush1.bf16.msra.mxu0 %v408
      %452 = vmatprep.subr.bf16.mxu0 0
      %453 = vmatpush1.bf16.msra.mxu0 %v409
      %454 = vmatprep.subr.bf16.mxu0 0
      %455 = vmatpush1.bf16.msra.mxu0 %v410
      %456 = vmatprep.subr.bf16.mxu0 0
      %457 = vmatpush1.bf16.msra.mxu0 %v411
      %458 = vmatprep.subr.bf16.mxu0 0
      %459 = vmatpush1.bf16.msra.mxu0 %v412
      %460 = vmatprep.subr.bf16.mxu0 0
      %461 = vmatpush1.bf16.msra.mxu0 %v413
      %462 = vmatprep.mubr.bf16.mxu0 %v331
      %463 = vmatmul.mubr.bf16.gmra.mrb[0].mxu0 %v323
      %v464 = vpop.f32.mrb[0].mxu0
      %v465 = vadd.f32 0.0, %v464
      %v466 = vpop.f32.mrb[0].mxu0
      %v467 = vpop.f32.mrb[0].mxu0
      %v468 = vpop.f32.mrb[0].mxu0
      %469 = vdwg.mxu0
      %v502 = vunpack.c.l.b16 %v234
      %v503 = vunpack.c.l.b16 %v235
      %v504 = vunpack.c.l.b16 %v236
      %v505 = vunpack.c.l.b16 %v237
      %v506 = vunpack.c.l.b16 %v238
      %v507 = vunpack.c.l.b16 %v239
      %v508 = vunpack.c.l.b16 %v240
      %v509 = vunpack.c.l.b16 %v241
      %v510 = vunpack.c.l.b16 %v242
      %v511 = vunpack.c.l.b16 %v243
      %v512 = vunpack.c.l.b16 %v244
      %v513 = vunpack.c.l.b16 %v245
      %v514 = vunpack.c.l.b16 %v246
      %v515 = vunpack.c.l.b16 %v247
      %v516 = vunpack.c.l.b16 %v248
      %v517 = vunpack.c.l.b16 %v249
      %v518 = vunpack.c.l.b16 %v250
      %v519 = vunpack.c.l.b16 %v251
      %v520 = vunpack.c.l.b16 %v252
      %v521 = vunpack.c.l.b16 %v253
      %v522 = vunpack.c.l.b16 %v254
      %v523 = vunpack.c.l.b16 %v255
      %v524 = vunpack.c.l.b16 %v256
      %v525 = vunpack.c.l.b16 %v257
      %v526 = vunpack.c.l.b16 %v258
      %v527 = vunpack.c.l.b16 %v259
      %v528 = vunpack.c.l.b16 %v260
      %v529 = vunpack.c.l.b16 %v261
      %v530 = vunpack.c.l.b16 %v262
      %v531 = vunpack.c.l.b16 %v263
      %v532 = vunpack.c.l.b16 %v264
      %v533 = vunpack.c.l.b16 %v265
      %v534 = vpack.c.b16 %v503, %v502
      %v535 = vpack.c.b16 %v505, %v504
      %v536 = vpack.c.b16 %v507, %v506
      %v537 = vpack.c.b16 %v509, %v508
      %v538 = vpack.c.b16 %v511, %v510
      %v539 = vpack.c.b16 %v513, %v512
      %v540 = vpack.c.b16 %v515, %v514
      %v541 = vpack.c.b16 %v517, %v516
      %v542 = vpack.c.b16 %v519, %v518
      %v543 = vpack.c.b16 %v521, %v520
      %v544 = vpack.c.b16 %v523, %v522
      %v545 = vpack.c.b16 %v525, %v524
      %v546 = vpack.c.b16 %v527, %v526
      %v547 = vpack.c.b16 %v529, %v528
      %v548 = vpack.c.b16 %v531, %v530
      %v549 = vpack.c.b16 %v533, %v532
      %566 = vmatprep.subr.bf16.mxu0 0
      %567 = vmatpush1.bf16.msra.mxu0 %v534
      %568 = vmatprep.subr.bf16.mxu0 0
      %569 = vmatpush1.bf16.msra.mxu0 %v535
      %570 = vmatprep.subr.bf16.mxu0 0
      %571 = vmatpush1.bf16.msra.mxu0 %v536
      %572 = vmatprep.subr.bf16.mxu0 0
      %573 = vmatpush1.bf16.msra.mxu0 %v537
      %574 = vmatprep.subr.bf16.mxu0 0
      %575 = vmatpush1.bf16.msra.mxu0 %v538
      %576 = vmatprep.subr.bf16.mxu0 0
      %577 = vmatpush1.bf16.msra.mxu0 %v539
      %578 = vmatprep.subr.bf16.mxu0 0
      %579 = vmatpush1.bf16.msra.mxu0 %v540
      %580 = vmatprep.subr.bf16.mxu0 0
      %581 = vmatpush1.bf16.msra.mxu0 %v541
      %582 = vmatprep.subr.bf16.mxu0 0
      %583 = vmatpush1.bf16.msra.mxu0 %v542
      %584 = vmatprep.subr.bf16.mxu0 0
      %585 = vmatpush1.bf16.msra.mxu0 %v543
      %586 = vmatprep.subr.bf16.mxu0 0
      %587 = vmatpush1.bf16.msra.mxu0 %v544
      %588 = vmatprep.subr.bf16.mxu0 0
      %589 = vmatpush1.bf16.msra.mxu0 %v545
      %590 = vmatprep.subr.bf16.mxu0 0
      %591 = vmatpush1.bf16.msra.mxu0 %v546
      %592 = vmatprep.subr.bf16.mxu0 0
      %593 = vmatpush1.bf16.msra.mxu0 %v547
      %594 = vmatprep.subr.bf16.mxu0 0
      %595 = vmatpush1.bf16.msra.mxu0 %v548
      %596 = vmatprep.subr.bf16.mxu0 0
      %597 = vmatpush1.bf16.msra.mxu0 %v549
      %598 = vmatprep.mubr.bf16.mxu0 %v232
      %599 = vmatmul.mubr.bf16.gmra.mrb[0].mxu0 %v221
      %v600 = vpop.f32.mrb[0].mxu0
      %v601 = vadd.f32 %v465, %v600
      %v602 = vpop.f32.mrb[0].mxu0
      %v603 = vpop.f32.mrb[0].mxu0
      %v604 = vpop.f32.mrb[0].mxu0
      %605 = vdwg.mxu0
      %v606 = vld [vmem:[%s212] sm:$0x1]
      %v608 = vlaneseq
      %v609 = vshrl.u32 %v608, 7
      %v610 = vsub.s32 0, %v609
      %v611 = vrot.slane %v606, %v610
      %v613 = vadd.f32 %v601, %v611
      %v614 = vpack.c.bf16 %v613, %v613
      %615 = vst [vmem:[%s219] sm:$0x7] %v614
      %p616 = scmp.lt.s32.totalorder %s18, 1
      %s617 = scalar_select %p616, %s18, 1
      %p618 = scmp.lt.s32.totalorder %s19, 0
      %s619 = scalar_select %p618, %s19, 0
      %s620 = sadd.s32 %s619, %s617
      %s621 = smul.addr %s620, 4
      %s622 = scalar_lea.vmem %s3, %s621
      // Predicated region
      $region33: #{_lambda_.11} parent=31 // pred_check
        %p623 = pneg %p124
      $region34: #{_lambda_.11} parent=31 // pred_check_branch
        %625 = sbr.rel (%p623) target = $region36
      $region35: #{_lambda_.11} parent=31 // pred_region
        _
      $region36: #{_lambda_.11} parent=31 // pred_fallthru
        _
    $region32: #{_lambda_.11} parent=5 // pred_fallthru
      _
    %p626 = scmp.le.s32.totalorder 2, %s9
    // Predicated region
    $region37: #{_lambda_.11} parent=5 // pred_check
      %p627 = pneg %p626
    $region38: #{_lambda_.11} parent=5 // pred_check_branch
      %629 = sbr.rel (%p627) target = $region40
    $region39: #{_lambda_.11} parent=5 // pred_region
      %s630 = ssub.s32 %s9, 2
      // Predicated region
      $region41: #{_lambda_.11} parent=39 // pred_check
        %p631 = pneg %p130
      $region42: #{_lambda_.11} parent=39 // pred_check_branch
        %633 = sbr.rel (%p631) target = $region44
      $region43: #{_lambda_.11} parent=39 // pred_region
        %p634 = scmp.lt.s32.totalorder %s20, 1
        %s635 = scalar_select %p634, %s20, 1
        %p636 = scmp.lt.s32.totalorder %s21, 0
        %s637 = scalar_select %p636, %s21, 0
        %s638 = sadd.s32 %s637, %s635
        %s639 = smul.addr %s638, 4
        %s640 = scalar_lea.vmem %s3, %s639
      $region44: #{_lambda_.11} parent=39 // pred_fallthru
        _
    $region40: #{_lambda_.11} parent=5 // pred_fallthru
      _
  $region6: #{_lambda_.11} parent=0 // loop_footer
    %s13 = sadd.s32 1, %s9
  $region7: #{_lambda_.11} parent=0 // loop_footer_branch
    %8 = sbr.rel target = $region3
  $region8: #{_lambda_.11} parent=0 // loop_exit
    _

// kernel: _lambda_.13
$region0: #{_lambda_.13}
  #allocation0 [shape = 'u32[]', space=smem, size = 0x4, offset = 0x4, fixed_abs, tag = 'smem constant byte address 0x4 - core index']
  #allocation1 [shape = 'u32[144,128]{1,0:T(1,128)}', space=vmem, size = 0x12000, scoped, tag = 'internal scratch']
  %s0 = inlined_call_operand.vmem [shape: bf16[2,256], index: 0, kind: input, shape index: {}]
  %s1 = inlined_call_operand.vmem [shape: bf16[256,128], index: 1, kind: input, shape index: {}]
  %s2 = inlined_call_operand.vmem [shape: f32[1,128], index: 2, kind: input, shape index: {}]
  %s3 = inlined_call_operand.vmem [shape: f32[2,128], index: 3, kind: output, shape index: {}]
  %s4 = sld [smem:[#allocation0]]
  $region22: #{_lambda_.13} parent=0
    _
  %s6 = ssub.s32 1, %s4
  %s7 = scalar_select 0, %s6, %s4
  // Predicated region
  $region2: #{_lambda_.13} parent=0 // pred_check
    _
  $region3: #{_lambda_.13} parent=0 // pred_check_branch
    %9 = sbr.rel (0) target = $region5
  $region4: #{_lambda_.13} parent=0 // pred_region
    _
  $region5: #{_lambda_.13} parent=0 // pred_fallthru
    _
  // Predicated region
  $region6: #{_lambda_.13} parent=0 // pred_check
    _
  $region7: #{_lambda_.13} parent=0 // pred_check_branch
    %11 = sbr.rel (0) target = $region9
  $region8: #{_lambda_.13} parent=0 // pred_region
    _
  $region9: #{_lambda_.13} parent=0 // pred_fallthru
    _
  // Predicated region
  $region10: #{_lambda_.13} parent=0 // pred_check
    _
  $region11: #{_lambda_.13} parent=0 // pred_check_branch
    %13 = sbr.rel (0) target = $region13
  $region12: #{_lambda_.13} parent=0 // pred_region
    _
  $region13: #{_lambda_.13} parent=0 // pred_fallthru
    _
  %v15 = vld [vmem:[%s0] sm:$0x3]
  %v16 = vld [vmem:[%s1] sm:$0xf]
  %v17 = vld [vmem:[%s1 + $0x4] sm:$0xf]
  %v18 = vld [vmem:[%s1 + $0x8] sm:$0xf]
  %v19 = vld [vmem:[%s1 + $0xc] sm:$0xf]
  %v20 = vld [vmem:[%s1 + $0x10] sm:$0xf]
  %v21 = vld [vmem:[%s1 + $0x14] sm:$0xf]
  %v22 = vld [vmem:[%s1 + $0x18] sm:$0xf]
  %v23 = vld [vmem:[%s1 + $0x1c] sm:$0xf]
  %v24 = vld [vmem:[%s1 + $0x20] sm:$0xf]
  %v25 = vld [vmem:[%s1 + $0x24] sm:$0xf]
  %v26 = vld [vmem:[%s1 + $0x28] sm:$0xf]
  %v27 = vld [vmem:[%s1 + $0x2c] sm:$0xf]
  %v28 = vld [vmem:[%s1 + $0x30] sm:$0xf]
  %v29 = vld [vmem:[%s1 + $0x34] sm:$0xf]
  %v30 = vld [vmem:[%s1 + $0x38] sm:$0xf]
  %v31 = vld [vmem:[%s1 + $0x3c] sm:$0xf]
  %v32 = vld [vmem:[%s1 + $0x40] sm:$0xf]
  %v33 = vld [vmem:[%s1 + $0x44] sm:$0xf]
  %v34 = vld [vmem:[%s1 + $0x48] sm:$0xf]
  %v35 = vld [vmem:[%s1 + $0x4c] sm:$0xf]
  %v36 = vld [vmem:[%s1 + $0x50] sm:$0xf]
  %v37 = vld [vmem:[%s1 + $0x54] sm:$0xf]
  %v38 = vld [vmem:[%s1 + $0x58] sm:$0xf]
  %v39 = vld [vmem:[%s1 + $0x5c] sm:$0xf]
  %v40 = vld [vmem:[%s1 + $0x60] sm:$0xf]
  %v41 = vld [vmem:[%s1 + $0x64] sm:$0xf]
  %v42 = vld [vmem:[%s1 + $0x68] sm:$0xf]
  %v43 = vld [vmem:[%s1 + $0x6c] sm:$0xf]
  %v44 = vld [vmem:[%s1 + $0x70] sm:$0xf]
  %v45 = vld [vmem:[%s1 + $0x74] sm:$0xf]
  %v46 = vld [vmem:[%s1 + $0x78] sm:$0xf]
  %v47 = vld [vmem:[%s1 + $0x7c] sm:$0xf]
  %v48 = vld [vmem:[%s2] sm:$0x1]
  %v50 = vlaneseq
  %v51 = vshrl.u32 %v50, 7
  %v52 = vsub.s32 0, %v51
  %v53 = vrot.slane %v48, %v52
  %v57 = vunpack.c.l.s4 1966171168
  %v58 = vunpack.c.0.s8 %v57
  %v59 = vlaneseq
  %v60 = vshrl.u32 %v59, 7
  %v61 = vsub.s32 %v58, %v60
  %v62 = vrot.slane %v15, %v61
  %v63 = vcombine.high %v62, %v62
  %v65 = vunpack.c.l.s4 1966171168
  %v66 = vunpack.c.0.s8 %v65
  %v67 = vlaneseq
  %v68 = vshrl.u32 %v67, 7
  %v69 = vsub.s32 %v66, %v68
  %v70 = vrot.slane %v62, %v69
  %v72 = vunpack.c.l.s4 1966171168
  %v73 = vunpack.c.0.s8 %v72
  %v74 = vlaneseq
  %v75 = vshrl.u32 %v74, 7
  %v76 = vsub.s32 %v73, %v75
  %v77 = vrot.slane %v63, %v76
  %v112 = vunpack.c.l.b16 %v16
  %v113 = vunpack.c.l.b16 %v17
  %v114 = vunpack.c.l.b16 %v18
  %v115 = vunpack.c.l.b16 %v19
  %v116 = vunpack.c.l.b16 %v20
  %v117 = vunpack.c.l.b16 %v21
  %v118 = vunpack.c.l.b16 %v22
  %v119 = vunpack.c.l.b16 %v23
  %v120 = vunpack.c.l.b16 %v24
  %v121 = vunpack.c.l.b16 %v25
  %v122 = vunpack.c.l.b16 %v26
  %v123 = vunpack.c.l.b16 %v27
  %v124 = vunpack.c.l.b16 %v28
  %v125 = vunpack.c.l.b16 %v29
  %v126 = vunpack.c.l.b16 %v30
  %v127 = vunpack.c.l.b16 %v31
  %v128 = vunpack.c.l.b16 %v32
  %v129 = vunpack.c.l.b16 %v33
  %v130 = vunpack.c.l.b16 %v34
  %v131 = vunpack.c.l.b16 %v35
  %v132 = vunpack.c.l.b16 %v36
  %v133 = vunpack.c.l.b16 %v37
  %v134 = vunpack.c.l.b16 %v38
  %v135 = vunpack.c.l.b16 %v39
  %v136 = vunpack.c.l.b16 %v40
  %v137 = vunpack.c.l.b16 %v41
  %v138 = vunpack.c.l.b16 %v42
  %v139 = vunpack.c.l.b16 %v43
  %v140 = vunpack.c.l.b16 %v44
  %v141 = vunpack.c.l.b16 %v45
  %v142 = vunpack.c.l.b16 %v46
  %v143 = vunpack.c.l.b16 %v47
  %v144 = vpack.c.b16 %v113, %v112
  %v145 = vpack.c.b16 %v115, %v114
  %v146 = vpack.c.b16 %v117, %v116
  %v147 = vpack.c.b16 %v119, %v118
  %v148 = vpack.c.b16 %v121, %v120
  %v149 = vpack.c.b16 %v123, %v122
  %v150 = vpack.c.b16 %v125, %v124
  %v151 = vpack.c.b16 %v127, %v126
  %v152 = vpack.c.b16 %v129, %v128
  %v153 = vpack.c.b16 %v131, %v130
  %v154 = vpack.c.b16 %v133, %v132
  %v155 = vpack.c.b16 %v135, %v134
  %v156 = vpack.c.b16 %v137, %v136
  %v157 = vpack.c.b16 %v139, %v138
  %v158 = vpack.c.b16 %v141, %v140
  %v159 = vpack.c.b16 %v143, %v142
  %176 = vmatprep.subr.bf16.mxu0 0
  %177 = vmatpush1.bf16.msra.mxu0 %v144
  %178 = vmatprep.subr.bf16.mxu0 0
  %179 = vmatpush1.bf16.msra.mxu0 %v145
  %180 = vmatprep.subr.bf16.mxu0 0
  %181 = vmatpush1.bf16.msra.mxu0 %v146
  %182 = vmatprep.subr.bf16.mxu0 0
  %183 = vmatpush1.bf16.msra.mxu0 %v147
  %184 = vmatprep.subr.bf16.mxu0 0
  %185 = vmatpush1.bf16.msra.mxu0 %v148
  %186 = vmatprep.subr.bf16.mxu0 0
  %187 = vmatpush1.bf16.msra.mxu0 %v149
  %188 = vmatprep.subr.bf16.mxu0 0
  %189 = vmatpush1.bf16.msra.mxu0 %v150
  %190 = vmatprep.subr.bf16.mxu0 0
  %191 = vmatpush1.bf16.msra.mxu0 %v151
  %192 = vmatprep.subr.bf16.mxu0 0
  %193 = vmatpush1.bf16.msra.mxu0 %v152
  %194 = vmatprep.subr.bf16.mxu0 0
  %195 = vmatpush1.bf16.msra.mxu0 %v153
  %196 = vmatprep.subr.bf16.mxu0 0
  %197 = vmatpush1.bf16.msra.mxu0 %v154
  %198 = vmatprep.subr.bf16.mxu0 0
  %199 = vmatpush1.bf16.msra.mxu0 %v155
  %200 = vmatprep.subr.bf16.mxu0 0
  %201 = vmatpush1.bf16.msra.mxu0 %v156
  %202 = vmatprep.subr.bf16.mxu0 0
  %203 = vmatpush1.bf16.msra.mxu0 %v157
  %204 = vmatprep.subr.bf16.mxu0 0
  %205 = vmatpush1.bf16.msra.mxu0 %v158
  %206 = vmatprep.subr.bf16.mxu0 0
  %207 = vmatpush1.bf16.msra.mxu0 %v159
  %208 = vmatprep.mubr.bf16.mxu0 %v77
  %209 = vmatmul.mubr.bf16.gmra.mrb[0].mxu0 %v70
  %v210 = vpop.f32.mrb[0].mxu0
  %v211 = vadd.f32 %v53, %v210
  %v212 = vpop.f32.mrb[0].mxu0
  %v213 = vpop.f32.mrb[0].mxu0
  %v214 = vpop.f32.mrb[0].mxu0
  %215 = vdwg.mxu0
  %216 = vst [vmem:[%s3] sm:$0x3] %v211
  // Predicated region
  $region14: #{_lambda_.13} parent=0 // pred_check
    _
  $region15: #{_lambda_.13} parent=0 // pred_check_branch
    %218 = sbr.rel (0) target = $region17
  $region16: #{_lambda_.13} parent=0 // pred_region
    _
  $region17: #{_lambda_.13} parent=0 // pred_fallthru
    _
  // Predicated region
  $region18: #{_lambda_.13} parent=0 // pred_check
    _
  $region19: #{_lambda_.13} parent=0 // pred_check_branch
    %220 = sbr.rel (0) target = $region21
  $region20: #{_lambda_.13} parent=0 // pred_region
    _
  $region21: #{_lambda_.13} parent=0 // pred_fallthru
    _

</llo_original>
